<compile_context>
chip_gen: v7x
topology: tpu7x:2x2x1
jax: 0.10.0
libtpu: 0.0.40
codegen_flags: <defaults>
</compile_context>

<pallas_src>
import functools

import jax
import jax.numpy as jnp
from jax import lax
from jax.experimental import pallas as pl
from jax.experimental.pallas import tpu as pltpu

GN_EPS = 1e-5


def _cgr_kernel(x_ref, w_ref, b_ref, g_ref, beta_ref, gavg_ref, o_ref, acc_ref,
                *, kh, kw, h, w, cout, rpc, eps):
    # x_ref    : (1, H+kh-1, W+kw-1, Cin)   bf16  (padded input, one sample)
    # w_ref    : (kh, kw, Cin, Cpad)        bf16  (Cout zero-padded to Cpad)
    # b_ref, g_ref, beta_ref : (1, Cpad)    f32
    # gavg_ref : (Cpad, Cpad)               f32   group-average matrix
    # o_ref    : (1, H*W, Cout)             f32   (un-padded channels)
    # acc_ref  : (H*W, Cpad)                f32 VMEM scratch (written once)
    cin = x_ref.shape[-1]
    cpad = acc_ref.shape[-1]
    hw = h * w
    chunk = rpc * w
    n_chunks = h // rpc

    csum = jnp.zeros((1, cpad), jnp.float32)
    csq = jnp.zeros((1, cpad), jnp.float32)

    # --- pass 1: conv taps summed in registers per row chunk -----------------
    # Single acc_ref write per chunk; stats accumulated while the chunk is hot.
    for ci in range(n_chunks):
        r0 = ci * rpc
        acc = None
        for ky in range(kh):
            for kx in range(kw):
                patch = x_ref[0, r0 + ky:r0 + ky + rpc, kx:kx + w, :].reshape(
                    chunk, cin)
                tap = lax.dot_general(
                    patch, w_ref[ky, kx],
                    dimension_numbers=(((1,), (0,)), ((), ())),
                    preferred_element_type=jnp.float32)
                acc = tap if acc is None else acc + tap
        acc_ref[ci * chunk:(ci + 1) * chunk, :] = acc
        csum = csum + jnp.sum(acc, axis=0, keepdims=True)
        csq = csq + jnp.sum(acc * acc, axis=0, keepdims=True)

    # --- GroupNorm stats (bias folded analytically) ---------------------------
    # z = acc + b  =>  sum z = csum + hw*b ;  sum z^2 = csq + 2*b*csum + hw*b^2
    b = b_ref[...]
    csum_b = csum + hw * b
    csq_b = csq + 2.0 * b * csum + hw * (b * b)
    # One (2, Cpad) x (Cpad, Cpad) matmul reduces within each group and
    # broadcasts the group statistic back to every channel of that group.
    stats = jnp.dot(jnp.concatenate([csum_b, csq_b], axis=0), gavg_ref[...],
                    preferred_element_type=jnp.float32)
    mean_c = stats[0:1, :]
    var_c = jnp.maximum(stats[1:2, :] - mean_c * mean_c, 0.0)   # clamp >= 0
    inv_c = lax.rsqrt(var_c + eps)
    scale_c = inv_c * g_ref[...]                                # (1, Cpad)
    shift_c = (b - mean_c) * scale_c + beta_ref[...]            # (1, Cpad)

    # --- pass 2: normalize + ReLU + narrow (un-padded channel) store ----------
    for ci in range(n_chunks):
        lo, hi = ci * chunk, (ci + 1) * chunk
        y = jnp.maximum(acc_ref[lo:hi, :] * scale_c + shift_c, 0.0)
        # TODO(synk): store bf16 here if the downstream consumer accepts it.
        o_ref[0, lo:hi, :] = y[:, :cout]


def conv_groupnorm_relu_2d(x_nchw, weight, bias, gamma, beta, *,
                           num_groups, kernel_size=3, eps=GN_EPS):
    """Forward pass of ConvGroupNormRelu2D.

    x_nchw : (N, Cin, H, W) float32
    weight : (Cout, Cin, K, K)  (PyTorch conv weight layout)
    bias, gamma, beta : (Cout,)
    returns (N, Cout, H, W) float32
    """
    # TODO(synk): the spec's GroupNorm2d default group count / eps are not
    # visible; they are exposed here as parameters (test uses num_groups=4).
    n, cin, h, w = x_nchw.shape
    cout = weight.shape[0]
    k = kernel_size
    p = k // 2  # 'SAME' padding, stride 1, dilation 1
    assert cout % num_groups == 0
    cg = cout // num_groups
    cpad = ((cout + 127) // 128) * 128        # lane-dense matmul/accumulator
    hp, wp = h + 2 * p, w + 2 * p
    hw = h * w

    # Row-chunk size: ~128 spatial positions per chunk (fits comfortably in
    # vregs for the register-resident tap accumulation), divisor of H.
    rpc = max(1, min(h, 128 // w)) if w <= 128 else 1
    while h % rpc:
        rpc -= 1

    # ---- layout glue (interface parity with the PyTorch module) -------------
    x_nhwc = jnp.transpose(x_nchw, (0, 2, 3, 1))
    x_pad = jnp.pad(x_nhwc, ((0, 0), (p, p), (p, p), (0, 0))).astype(jnp.bfloat16)

    w_hwio = jnp.transpose(weight, (2, 3, 1, 0))                 # (K,K,Cin,Cout)
    w_pad = jnp.pad(w_hwio, ((0, 0), (0, 0), (0, 0), (0, cpad - cout))
                    ).astype(jnp.bfloat16)

    def _padc(v):
        return jnp.pad(v, (0, cpad - cout)).reshape(1, cpad).astype(jnp.float32)

    b2, g2, be2 = _padc(bias), _padc(gamma), _padc(beta)

    # Constant group-average matrix: A[i, j] = 1/(H*W*Cg) if channels i and j
    # belong to the same (real) group, else 0.
    ch = jnp.arange(cpad)
    same_group = (ch[:, None] // cg) == (ch[None, :] // cg)
    valid = (ch[:, None] < cout) & (ch[None, :] < cout)
    gavg = jnp.where(same_group & valid, 1.0 / (h * w * cg), 0.0
                     ).astype(jnp.float32)

    kern = functools.partial(_cgr_kernel, kh=k, kw=k, h=h, w=w,
                             cout=cout, rpc=rpc, eps=eps)

    out = pl.pallas_call(
        kern,
        out_shape=jax.ShapeDtypeStruct((n, hw, cout), jnp.float32),
        grid_spec=pltpu.PrefetchScalarGridSpec(
            num_scalar_prefetch=0,
            grid=(n,),
            in_specs=[
                pl.BlockSpec((1, hp, wp, cin), lambda i: (i, 0, 0, 0)),
                pl.BlockSpec((k, k, cin, cpad), lambda i: (0, 0, 0, 0)),
                pl.BlockSpec((1, cpad), lambda i: (0, 0)),
                pl.BlockSpec((1, cpad), lambda i: (0, 0)),
                pl.BlockSpec((1, cpad), lambda i: (0, 0)),
                pl.BlockSpec((cpad, cpad), lambda i: (0, 0)),
            ],
            out_specs=pl.BlockSpec((1, hw, cout), lambda i: (i, 0, 0)),
            scratch_shapes=[pltpu.VMEM((hw, cpad), jnp.float32)],
        ),
        compiler_params=pltpu.CompilerParams(
            dimension_semantics=("parallel",),   # megacore sharding where avail
        ),
    )(x_pad, w_pad, b2, g2, be2, gavg)

    out = out.reshape(n, h, w, cout)             # free (row-major) reshape
    return jnp.transpose(out, (0, 3, 1, 2))      # back to NCHW


def _reference(x_nchw, weight, bias, gamma, beta, num_groups, kernel_size=3,
               eps=GN_EPS):
    """Pure-JAX reference: Conv2d + GroupNorm + ReLU (bf16 MXU inputs like the
    kernel, f32 accumulation)."""
    p = kernel_size // 2
    conv = lax.conv_general_dilated(
        x_nchw.astype(jnp.bfloat16), weight.astype(jnp.bfloat16),
        window_strides=(1, 1), padding=[(p, p), (p, p)],
        dimension_numbers=("NCHW", "OIHW", "NCHW"),
        preferred_element_type=jnp.float32)
    conv = conv + bias.reshape(1, -1, 1, 1)
    n, c, h, w = conv.shape
    g = num_groups
    xg = conv.reshape(n, g, c // g, h, w)
    mean = jnp.mean(xg, axis=(2, 3, 4), keepdims=True)
    var = jnp.mean((xg - mean) ** 2, axis=(2, 3, 4), keepdims=True)
    yg = (xg - mean) * lax.rsqrt(var + eps)
    y = yg.reshape(n, c, h, w) * gamma.reshape(1, -1, 1, 1) \
        + beta.reshape(1, -1, 1, 1)
    return jnp.maximum(y, 0.0)


if __name__ == "__main__":
    key = jax.random.PRNGKey(0)
    kx_, kw_, kb_, kg_, kbe_ = jax.random.split(key, 5)

    N, Cin, H, W = 2, 4, 16, 16
    Cout, K, G = 8, 3, 4

    x = jax.random.normal(kx_, (N, Cin, H, W), dtype=jnp.float32)
    weight = jax.random.normal(kw_, (Cout, Cin, K, K), dtype=jnp.float32) * 0.1
    bias = jax.random.normal(kb_, (Cout,), dtype=jnp.float32) * 0.1
    gamma = 1.0 + 0.1 * jax.random.normal(kg_, (Cout,), dtype=jnp.float32)
    beta = 0.1 * jax.random.normal(kbe_, (Cout,), dtype=jnp.float32)

    out = conv_groupnorm_relu_2d(x, weight, bias, gamma, beta,
                                 num_groups=G, kernel_size=K)
    out = jax.block_until_ready(out)

    ref = jax.block_until_ready(
        _reference(x, weight, bias, gamma, beta, G, K))

    assert out.shape == (N, Cout, H, W)
    max_err = jnp.max(jnp.abs(out - ref))
    assert jnp.allclose(out, ref, atol=2e-3, rtol=2e-3), \
        f"max abs err {max_err}"

    print("KERNEL_OK")
</pallas_src>

<mosaic_0001>
module attributes {stable_mosaic.version = 11 : i64} {
  func.func @_cgr_kernel(%arg0: i32, %arg1: memref<1x18x18x4xbf16, #tpu.memory_space<vmem>>, %arg2: memref<3x3x4x128xbf16, #tpu.memory_space<vmem>>, %arg3: memref<1x128xf32, #tpu.memory_space<vmem>>, %arg4: memref<1x128xf32, #tpu.memory_space<vmem>>, %arg5: memref<1x128xf32, #tpu.memory_space<vmem>>, %arg6: memref<128x128xf32, #tpu.memory_space<vmem>>, %arg7: memref<1x256x8xf32, #tpu.memory_space<vmem>>, %arg8: memref<256x128xf32, #tpu.memory_space<vmem>>) attributes {dimension_semantics = [#tpu.dimension_semantics<parallel>], iteration_bounds = array<i64: 2>, scalar_prefetch = 0 : i64, scratch_operands = 1 : i64, tpu.core_type = #tpu.core_type<tc>, window_params = [{transform_indices = @transform_0, window_bounds = array<i64: 1, 18, 18, 4>}, {pipeline_mode = #tpu.pipeline_mode<synchronous>, transform_indices = @transform_1, window_bounds = array<i64: 3, 3, 4, 128>}, {pipeline_mode = #tpu.pipeline_mode<synchronous>, transform_indices = @transform_2, window_bounds = array<i64: 1, 128>}, {pipeline_mode = #tpu.pipeline_mode<synchronous>, transform_indices = @transform_3, window_bounds = array<i64: 1, 128>}, {pipeline_mode = #tpu.pipeline_mode<synchronous>, transform_indices = @transform_4, window_bounds = array<i64: 1, 128>}, {pipeline_mode = #tpu.pipeline_mode<synchronous>, transform_indices = @transform_5, window_bounds = array<i64: 128, 128>}, {transform_indices = @transform_6, window_bounds = array<i64: 1, 256, 8>}]} {
    %cst = arith.constant 0.000000e+00 : f32
    %0 = vector.broadcast %cst : f32 to vector<1x128xf32>
    %cst_0 = arith.constant 0.000000e+00 : f32
    %1 = vector.broadcast %cst_0 : f32 to vector<1x128xf32>
    %c0 = arith.constant 0 : index
    %c0_1 = arith.constant 0 : index
    %c0_2 = arith.constant 0 : index
    %c0_3 = arith.constant 0 : index
    %2 = vector.load %arg1[%c0, %c0_1, %c0_2, %c0_3] : memref<1x18x18x4xbf16, #tpu.memory_space<vmem>>, vector<1x8x16x4xbf16>
    %3 = vector.shape_cast %2 : vector<1x8x16x4xbf16> to vector<8x16x4xbf16>
    %4 = vector.shape_cast %3 : vector<8x16x4xbf16> to vector<128x4xbf16>
    %c0_4 = arith.constant 0 : index
    %c0_5 = arith.constant 0 : index
    %c0_6 = arith.constant 0 : index
    %c0_7 = arith.constant 0 : index
    %5 = vector.load %arg2[%c0_4, %c0_5, %c0_6, %c0_7] : memref<3x3x4x128xbf16, #tpu.memory_space<vmem>>, vector<1x1x4x128xbf16>
    %6 = vector.shape_cast %5 : vector<1x1x4x128xbf16> to vector<4x128xbf16>
    %cst_8 = arith.constant dense<0.000000e+00> : vector<128x128xf32>
    %7 = tpu.matmul %4, %6, %cst_8 {dimension_numbers = #tpu.dot_dimension_numbers<[1], [0], [0], [1], [0, 0, 1, 1], [], []>} : vector<128x4xbf16>, vector<4x128xbf16>, vector<128x128xf32> -> vector<128x128xf32>
    %c0_9 = arith.constant 0 : index
    %c0_10 = arith.constant 0 : index
    %c1 = arith.constant 1 : index
    %c0_11 = arith.constant 0 : index
    %8 = vector.load %arg1[%c0_9, %c0_10, %c1, %c0_11] : memref<1x18x18x4xbf16, #tpu.memory_space<vmem>>, vector<1x8x16x4xbf16>
    %9 = vector.shape_cast %8 : vector<1x8x16x4xbf16> to vector<8x16x4xbf16>
    %10 = vector.shape_cast %9 : vector<8x16x4xbf16> to vector<128x4xbf16>
    %c0_12 = arith.constant 0 : index
    %c1_13 = arith.constant 1 : index
    %c0_14 = arith.constant 0 : index
    %c0_15 = arith.constant 0 : index
    %11 = vector.load %arg2[%c0_12, %c1_13, %c0_14, %c0_15] : memref<3x3x4x128xbf16, #tpu.memory_space<vmem>>, vector<1x1x4x128xbf16>
    %12 = vector.shape_cast %11 : vector<1x1x4x128xbf16> to vector<4x128xbf16>
    %cst_16 = arith.constant dense<0.000000e+00> : vector<128x128xf32>
    %13 = tpu.matmul %10, %12, %cst_16 {dimension_numbers = #tpu.dot_dimension_numbers<[1], [0], [0], [1], [0, 0, 1, 1], [], []>} : vector<128x4xbf16>, vector<4x128xbf16>, vector<128x128xf32> -> vector<128x128xf32>
    %14 = arith.addf %7, %13 : vector<128x128xf32>
    %c0_17 = arith.constant 0 : index
    %c0_18 = arith.constant 0 : index
    %c2 = arith.constant 2 : index
    %c0_19 = arith.constant 0 : index
    %15 = vector.load %arg1[%c0_17, %c0_18, %c2, %c0_19] : memref<1x18x18x4xbf16, #tpu.memory_space<vmem>>, vector<1x8x16x4xbf16>
    %16 = vector.shape_cast %15 : vector<1x8x16x4xbf16> to vector<8x16x4xbf16>
    %17 = vector.shape_cast %16 : vector<8x16x4xbf16> to vector<128x4xbf16>
    %c0_20 = arith.constant 0 : index
    %c2_21 = arith.constant 2 : index
    %c0_22 = arith.constant 0 : index
    %c0_23 = arith.constant 0 : index
    %18 = vector.load %arg2[%c0_20, %c2_21, %c0_22, %c0_23] : memref<3x3x4x128xbf16, #tpu.memory_space<vmem>>, vector<1x1x4x128xbf16>
    %19 = vector.shape_cast %18 : vector<1x1x4x128xbf16> to vector<4x128xbf16>
    %cst_24 = arith.constant dense<0.000000e+00> : vector<128x128xf32>
    %20 = tpu.matmul %17, %19, %cst_24 {dimension_numbers = #tpu.dot_dimension_numbers<[1], [0], [0], [1], [0, 0, 1, 1], [], []>} : vector<128x4xbf16>, vector<4x128xbf16>, vector<128x128xf32> -> vector<128x128xf32>
    %21 = arith.addf %14, %20 : vector<128x128xf32>
    %c0_25 = arith.constant 0 : index
    %c1_26 = arith.constant 1 : index
    %c0_27 = arith.constant 0 : index
    %c0_28 = arith.constant 0 : index
    %22 = vector.load %arg1[%c0_25, %c1_26, %c0_27, %c0_28] : memref<1x18x18x4xbf16, #tpu.memory_space<vmem>>, vector<1x8x16x4xbf16>
    %23 = vector.shape_cast %22 : vector<1x8x16x4xbf16> to vector<8x16x4xbf16>
    %24 = vector.shape_cast %23 : vector<8x16x4xbf16> to vector<128x4xbf16>
    %c1_29 = arith.constant 1 : index
    %c0_30 = arith.constant 0 : index
    %c0_31 = arith.constant 0 : index
    %c0_32 = arith.constant 0 : index
    %25 = vector.load %arg2[%c1_29, %c0_30, %c0_31, %c0_32] : memref<3x3x4x128xbf16, #tpu.memory_space<vmem>>, vector<1x1x4x128xbf16>
    %26 = vector.shape_cast %25 : vector<1x1x4x128xbf16> to vector<4x128xbf16>
    %cst_33 = arith.constant dense<0.000000e+00> : vector<128x128xf32>
    %27 = tpu.matmul %24, %26, %cst_33 {dimension_numbers = #tpu.dot_dimension_numbers<[1], [0], [0], [1], [0, 0, 1, 1], [], []>} : vector<128x4xbf16>, vector<4x128xbf16>, vector<128x128xf32> -> vector<128x128xf32>
    %28 = arith.addf %21, %27 : vector<128x128xf32>
    %c0_34 = arith.constant 0 : index
    %c1_35 = arith.constant 1 : index
    %c1_36 = arith.constant 1 : index
    %c0_37 = arith.constant 0 : index
    %29 = vector.load %arg1[%c0_34, %c1_35, %c1_36, %c0_37] : memref<1x18x18x4xbf16, #tpu.memory_space<vmem>>, vector<1x8x16x4xbf16>
    %30 = vector.shape_cast %29 : vector<1x8x16x4xbf16> to vector<8x16x4xbf16>
    %31 = vector.shape_cast %30 : vector<8x16x4xbf16> to vector<128x4xbf16>
    %c1_38 = arith.constant 1 : index
    %c1_39 = arith.constant 1 : index
    %c0_40 = arith.constant 0 : index
    %c0_41 = arith.constant 0 : index
    %32 = vector.load %arg2[%c1_38, %c1_39, %c0_40, %c0_41] : memref<3x3x4x128xbf16, #tpu.memory_space<vmem>>, vector<1x1x4x128xbf16>
    %33 = vector.shape_cast %32 : vector<1x1x4x128xbf16> to vector<4x128xbf16>
    %cst_42 = arith.constant dense<0.000000e+00> : vector<128x128xf32>
    %34 = tpu.matmul %31, %33, %cst_42 {dimension_numbers = #tpu.dot_dimension_numbers<[1], [0], [0], [1], [0, 0, 1, 1], [], []>} : vector<128x4xbf16>, vector<4x128xbf16>, vector<128x128xf32> -> vector<128x128xf32>
    %35 = arith.addf %28, %34 : vector<128x128xf32>
    %c0_43 = arith.constant 0 : index
    %c1_44 = arith.constant 1 : index
    %c2_45 = arith.constant 2 : index
    %c0_46 = arith.constant 0 : index
    %36 = vector.load %arg1[%c0_43, %c1_44, %c2_45, %c0_46] : memref<1x18x18x4xbf16, #tpu.memory_space<vmem>>, vector<1x8x16x4xbf16>
    %37 = vector.shape_cast %36 : vector<1x8x16x4xbf16> to vector<8x16x4xbf16>
    %38 = vector.shape_cast %37 : vector<8x16x4xbf16> to vector<128x4xbf16>
    %c1_47 = arith.constant 1 : index
    %c2_48 = arith.constant 2 : index
    %c0_49 = arith.constant 0 : index
    %c0_50 = arith.constant 0 : index
    %39 = vector.load %arg2[%c1_47, %c2_48, %c0_49, %c0_50] : memref<3x3x4x128xbf16, #tpu.memory_space<vmem>>, vector<1x1x4x128xbf16>
    %40 = vector.shape_cast %39 : vector<1x1x4x128xbf16> to vector<4x128xbf16>
    %cst_51 = arith.constant dense<0.000000e+00> : vector<128x128xf32>
    %41 = tpu.matmul %38, %40, %cst_51 {dimension_numbers = #tpu.dot_dimension_numbers<[1], [0], [0], [1], [0, 0, 1, 1], [], []>} : vector<128x4xbf16>, vector<4x128xbf16>, vector<128x128xf32> -> vector<128x128xf32>
    %42 = arith.addf %35, %41 : vector<128x128xf32>
    %c0_52 = arith.constant 0 : index
    %c2_53 = arith.constant 2 : index
    %c0_54 = arith.constant 0 : index
    %c0_55 = arith.constant 0 : index
    %43 = vector.load %arg1[%c0_52, %c2_53, %c0_54, %c0_55] : memref<1x18x18x4xbf16, #tpu.memory_space<vmem>>, vector<1x8x16x4xbf16>
    %44 = vector.shape_cast %43 : vector<1x8x16x4xbf16> to vector<8x16x4xbf16>
    %45 = vector.shape_cast %44 : vector<8x16x4xbf16> to vector<128x4xbf16>
    %c2_56 = arith.constant 2 : index
    %c0_57 = arith.constant 0 : index
    %c0_58 = arith.constant 0 : index
    %c0_59 = arith.constant 0 : index
    %46 = vector.load %arg2[%c2_56, %c0_57, %c0_58, %c0_59] : memref<3x3x4x128xbf16, #tpu.memory_space<vmem>>, vector<1x1x4x128xbf16>
    %47 = vector.shape_cast %46 : vector<1x1x4x128xbf16> to vector<4x128xbf16>
    %cst_60 = arith.constant dense<0.000000e+00> : vector<128x128xf32>
    %48 = tpu.matmul %45, %47, %cst_60 {dimension_numbers = #tpu.dot_dimension_numbers<[1], [0], [0], [1], [0, 0, 1, 1], [], []>} : vector<128x4xbf16>, vector<4x128xbf16>, vector<128x128xf32> -> vector<128x128xf32>
    %49 = arith.addf %42, %48 : vector<128x128xf32>
    %c0_61 = arith.constant 0 : index
    %c2_62 = arith.constant 2 : index
    %c1_63 = arith.constant 1 : index
    %c0_64 = arith.constant 0 : index
    %50 = vector.load %arg1[%c0_61, %c2_62, %c1_63, %c0_64] : memref<1x18x18x4xbf16, #tpu.memory_space<vmem>>, vector<1x8x16x4xbf16>
    %51 = vector.shape_cast %50 : vector<1x8x16x4xbf16> to vector<8x16x4xbf16>
    %52 = vector.shape_cast %51 : vector<8x16x4xbf16> to vector<128x4xbf16>
    %c2_65 = arith.constant 2 : index
    %c1_66 = arith.constant 1 : index
    %c0_67 = arith.constant 0 : index
    %c0_68 = arith.constant 0 : index
    %53 = vector.load %arg2[%c2_65, %c1_66, %c0_67, %c0_68] : memref<3x3x4x128xbf16, #tpu.memory_space<vmem>>, vector<1x1x4x128xbf16>
    %54 = vector.shape_cast %53 : vector<1x1x4x128xbf16> to vector<4x128xbf16>
    %cst_69 = arith.constant dense<0.000000e+00> : vector<128x128xf32>
    %55 = tpu.matmul %52, %54, %cst_69 {dimension_numbers = #tpu.dot_dimension_numbers<[1], [0], [0], [1], [0, 0, 1, 1], [], []>} : vector<128x4xbf16>, vector<4x128xbf16>, vector<128x128xf32> -> vector<128x128xf32>
    %56 = arith.addf %49, %55 : vector<128x128xf32>
    %c0_70 = arith.constant 0 : index
    %c2_71 = arith.constant 2 : index
    %c2_72 = arith.constant 2 : index
    %c0_73 = arith.constant 0 : index
    %57 = vector.load %arg1[%c0_70, %c2_71, %c2_72, %c0_73] : memref<1x18x18x4xbf16, #tpu.memory_space<vmem>>, vector<1x8x16x4xbf16>
    %58 = vector.shape_cast %57 : vector<1x8x16x4xbf16> to vector<8x16x4xbf16>
    %59 = vector.shape_cast %58 : vector<8x16x4xbf16> to vector<128x4xbf16>
    %c2_74 = arith.constant 2 : index
    %c2_75 = arith.constant 2 : index
    %c0_76 = arith.constant 0 : index
    %c0_77 = arith.constant 0 : index
    %60 = vector.load %arg2[%c2_74, %c2_75, %c0_76, %c0_77] : memref<3x3x4x128xbf16, #tpu.memory_space<vmem>>, vector<1x1x4x128xbf16>
    %61 = vector.shape_cast %60 : vector<1x1x4x128xbf16> to vector<4x128xbf16>
    %cst_78 = arith.constant dense<0.000000e+00> : vector<128x128xf32>
    %62 = tpu.matmul %59, %61, %cst_78 {dimension_numbers = #tpu.dot_dimension_numbers<[1], [0], [0], [1], [0, 0, 1, 1], [], []>} : vector<128x4xbf16>, vector<4x128xbf16>, vector<128x128xf32> -> vector<128x128xf32>
    %63 = arith.addf %56, %62 : vector<128x128xf32>
    %c0_79 = arith.constant 0 : index
    %c0_80 = arith.constant 0 : index
    %64 = vector.load %arg8[%c0_79, %c0_80] : memref<256x128xf32, #tpu.memory_space<vmem>>, vector<128x128xf32>
    tpu.vector_store %arg8[%c0_79, %c0_80], %63 {strides = array<i32>} : memref<256x128xf32, #tpu.memory_space<vmem>>, vector<128x128xf32>,
    %cst_81 = arith.constant dense<0.000000e+00> : vector<128xf32>
    %65 = vector.multi_reduction <add>, %63, %cst_81 [0] : vector<128x128xf32> to vector<128xf32>
    %66 = vector.shape_cast %65 : vector<128xf32> to vector<1x128xf32>
    %67 = arith.addf %0, %66 : vector<1x128xf32>
    %68 = arith.mulf %63, %63 : vector<128x128xf32>
    %cst_82 = arith.constant dense<0.000000e+00> : vector<128xf32>
    %69 = vector.multi_reduction <add>, %68, %cst_82 [0] : vector<128x128xf32> to vector<128xf32>
    %70 = vector.shape_cast %69 : vector<128xf32> to vector<1x128xf32>
    %71 = arith.addf %1, %70 : vector<1x128xf32>
    %c0_83 = arith.constant 0 : index
    %c8 = arith.constant 8 : index
    %c0_84 = arith.constant 0 : index
    %c0_85 = arith.constant 0 : index
    %72 = vector.load %arg1[%c0_83, %c8, %c0_84, %c0_85] : memref<1x18x18x4xbf16, #tpu.memory_space<vmem>>, vector<1x8x16x4xbf16>
    %73 = vector.shape_cast %72 : vector<1x8x16x4xbf16> to vector<8x16x4xbf16>
    %74 = vector.shape_cast %73 : vector<8x16x4xbf16> to vector<128x4xbf16>
    %c0_86 = arith.constant 0 : index
    %c0_87 = arith.constant 0 : index
    %c0_88 = arith.constant 0 : index
    %c0_89 = arith.constant 0 : index
    %75 = vector.load %arg2[%c0_86, %c0_87, %c0_88, %c0_89] : memref<3x3x4x128xbf16, #tpu.memory_space<vmem>>, vector<1x1x4x128xbf16>
    %76 = vector.shape_cast %75 : vector<1x1x4x128xbf16> to vector<4x128xbf16>
    %cst_90 = arith.constant dense<0.000000e+00> : vector<128x128xf32>
    %77 = tpu.matmul %74, %76, %cst_90 {dimension_numbers = #tpu.dot_dimension_numbers<[1], [0], [0], [1], [0, 0, 1, 1], [], []>} : vector<128x4xbf16>, vector<4x128xbf16>, vector<128x128xf32> -> vector<128x128xf32>
    %c0_91 = arith.constant 0 : index
    %c8_92 = arith.constant 8 : index
    %c1_93 = arith.constant 1 : index
    %c0_94 = arith.constant 0 : index
    %78 = vector.load %arg1[%c0_91, %c8_92, %c1_93, %c0_94] : memref<1x18x18x4xbf16, #tpu.memory_space<vmem>>, vector<1x8x16x4xbf16>
    %79 = vector.shape_cast %78 : vector<1x8x16x4xbf16> to vector<8x16x4xbf16>
    %80 = vector.shape_cast %79 : vector<8x16x4xbf16> to vector<128x4xbf16>
    %c0_95 = arith.constant 0 : index
    %c1_96 = arith.constant 1 : index
    %c0_97 = arith.constant 0 : index
    %c0_98 = arith.constant 0 : index
    %81 = vector.load %arg2[%c0_95, %c1_96, %c0_97, %c0_98] : memref<3x3x4x128xbf16, #tpu.memory_space<vmem>>, vector<1x1x4x128xbf16>
    %82 = vector.shape_cast %81 : vector<1x1x4x128xbf16> to vector<4x128xbf16>
    %cst_99 = arith.constant dense<0.000000e+00> : vector<128x128xf32>
    %83 = tpu.matmul %80, %82, %cst_99 {dimension_numbers = #tpu.dot_dimension_numbers<[1], [0], [0], [1], [0, 0, 1, 1], [], []>} : vector<128x4xbf16>, vector<4x128xbf16>, vector<128x128xf32> -> vector<128x128xf32>
    %84 = arith.addf %77, %83 : vector<128x128xf32>
    %c0_100 = arith.constant 0 : index
    %c8_101 = arith.constant 8 : index
    %c2_102 = arith.constant 2 : index
    %c0_103 = arith.constant 0 : index
    %85 = vector.load %arg1[%c0_100, %c8_101, %c2_102, %c0_103] : memref<1x18x18x4xbf16, #tpu.memory_space<vmem>>, vector<1x8x16x4xbf16>
    %86 = vector.shape_cast %85 : vector<1x8x16x4xbf16> to vector<8x16x4xbf16>
    %87 = vector.shape_cast %86 : vector<8x16x4xbf16> to vector<128x4xbf16>
    %c0_104 = arith.constant 0 : index
    %c2_105 = arith.constant 2 : index
    %c0_106 = arith.constant 0 : index
    %c0_107 = arith.constant 0 : index
    %88 = vector.load %arg2[%c0_104, %c2_105, %c0_106, %c0_107] : memref<3x3x4x128xbf16, #tpu.memory_space<vmem>>, vector<1x1x4x128xbf16>
    %89 = vector.shape_cast %88 : vector<1x1x4x128xbf16> to vector<4x128xbf16>
    %cst_108 = arith.constant dense<0.000000e+00> : vector<128x128xf32>
    %90 = tpu.matmul %87, %89, %cst_108 {dimension_numbers = #tpu.dot_dimension_numbers<[1], [0], [0], [1], [0, 0, 1, 1], [], []>} : vector<128x4xbf16>, vector<4x128xbf16>, vector<128x128xf32> -> vector<128x128xf32>
    %91 = arith.addf %84, %90 : vector<128x128xf32>
    %c0_109 = arith.constant 0 : index
    %c9 = arith.constant 9 : index
    %c0_110 = arith.constant 0 : index
    %c0_111 = arith.constant 0 : index
    %92 = vector.load %arg1[%c0_109, %c9, %c0_110, %c0_111] : memref<1x18x18x4xbf16, #tpu.memory_space<vmem>>, vector<1x8x16x4xbf16>
    %93 = vector.shape_cast %92 : vector<1x8x16x4xbf16> to vector<8x16x4xbf16>
    %94 = vector.shape_cast %93 : vector<8x16x4xbf16> to vector<128x4xbf16>
    %c1_112 = arith.constant 1 : index
    %c0_113 = arith.constant 0 : index
    %c0_114 = arith.constant 0 : index
    %c0_115 = arith.constant 0 : index
    %95 = vector.load %arg2[%c1_112, %c0_113, %c0_114, %c0_115] : memref<3x3x4x128xbf16, #tpu.memory_space<vmem>>, vector<1x1x4x128xbf16>
    %96 = vector.shape_cast %95 : vector<1x1x4x128xbf16> to vector<4x128xbf16>
    %cst_116 = arith.constant dense<0.000000e+00> : vector<128x128xf32>
    %97 = tpu.matmul %94, %96, %cst_116 {dimension_numbers = #tpu.dot_dimension_numbers<[1], [0], [0], [1], [0, 0, 1, 1], [], []>} : vector<128x4xbf16>, vector<4x128xbf16>, vector<128x128xf32> -> vector<128x128xf32>
    %98 = arith.addf %91, %97 : vector<128x128xf32>
    %c0_117 = arith.constant 0 : index
    %c9_118 = arith.constant 9 : index
    %c1_119 = arith.constant 1 : index
    %c0_120 = arith.constant 0 : index
    %99 = vector.load %arg1[%c0_117, %c9_118, %c1_119, %c0_120] : memref<1x18x18x4xbf16, #tpu.memory_space<vmem>>, vector<1x8x16x4xbf16>
    %100 = vector.shape_cast %99 : vector<1x8x16x4xbf16> to vector<8x16x4xbf16>
    %101 = vector.shape_cast %100 : vector<8x16x4xbf16> to vector<128x4xbf16>
    %c1_121 = arith.constant 1 : index
    %c1_122 = arith.constant 1 : index
    %c0_123 = arith.constant 0 : index
    %c0_124 = arith.constant 0 : index
    %102 = vector.load %arg2[%c1_121, %c1_122, %c0_123, %c0_124] : memref<3x3x4x128xbf16, #tpu.memory_space<vmem>>, vector<1x1x4x128xbf16>
    %103 = vector.shape_cast %102 : vector<1x1x4x128xbf16> to vector<4x128xbf16>
    %cst_125 = arith.constant dense<0.000000e+00> : vector<128x128xf32>
    %104 = tpu.matmul %101, %103, %cst_125 {dimension_numbers = #tpu.dot_dimension_numbers<[1], [0], [0], [1], [0, 0, 1, 1], [], []>} : vector<128x4xbf16>, vector<4x128xbf16>, vector<128x128xf32> -> vector<128x128xf32>
    %105 = arith.addf %98, %104 : vector<128x128xf32>
    %c0_126 = arith.constant 0 : index
    %c9_127 = arith.constant 9 : index
    %c2_128 = arith.constant 2 : index
    %c0_129 = arith.constant 0 : index
    %106 = vector.load %arg1[%c0_126, %c9_127, %c2_128, %c0_129] : memref<1x18x18x4xbf16, #tpu.memory_space<vmem>>, vector<1x8x16x4xbf16>
    %107 = vector.shape_cast %106 : vector<1x8x16x4xbf16> to vector<8x16x4xbf16>
    %108 = vector.shape_cast %107 : vector<8x16x4xbf16> to vector<128x4xbf16>
    %c1_130 = arith.constant 1 : index
    %c2_131 = arith.constant 2 : index
    %c0_132 = arith.constant 0 : index
    %c0_133 = arith.constant 0 : index
    %109 = vector.load %arg2[%c1_130, %c2_131, %c0_132, %c0_133] : memref<3x3x4x128xbf16, #tpu.memory_space<vmem>>, vector<1x1x4x128xbf16>
    %110 = vector.shape_cast %109 : vector<1x1x4x128xbf16> to vector<4x128xbf16>
    %cst_134 = arith.constant dense<0.000000e+00> : vector<128x128xf32>
    %111 = tpu.matmul %108, %110, %cst_134 {dimension_numbers = #tpu.dot_dimension_numbers<[1], [0], [0], [1], [0, 0, 1, 1], [], []>} : vector<128x4xbf16>, vector<4x128xbf16>, vector<128x128xf32> -> vector<128x128xf32>
    %112 = arith.addf %105, %111 : vector<128x128xf32>
    %c0_135 = arith.constant 0 : index
    %c10 = arith.constant 10 : index
    %c0_136 = arith.constant 0 : index
    %c0_137 = arith.constant 0 : index
    %113 = vector.load %arg1[%c0_135, %c10, %c0_136, %c0_137] : memref<1x18x18x4xbf16, #tpu.memory_space<vmem>>, vector<1x8x16x4xbf16>
    %114 = vector.shape_cast %113 : vector<1x8x16x4xbf16> to vector<8x16x4xbf16>
    %115 = vector.shape_cast %114 : vector<8x16x4xbf16> to vector<128x4xbf16>
    %c2_138 = arith.constant 2 : index
    %c0_139 = arith.constant 0 : index
    %c0_140 = arith.constant 0 : index
    %c0_141 = arith.constant 0 : index
    %116 = vector.load %arg2[%c2_138, %c0_139, %c0_140, %c0_141] : memref<3x3x4x128xbf16, #tpu.memory_space<vmem>>, vector<1x1x4x128xbf16>
    %117 = vector.shape_cast %116 : vector<1x1x4x128xbf16> to vector<4x128xbf16>
    %cst_142 = arith.constant dense<0.000000e+00> : vector<128x128xf32>
    %118 = tpu.matmul %115, %117, %cst_142 {dimension_numbers = #tpu.dot_dimension_numbers<[1], [0], [0], [1], [0, 0, 1, 1], [], []>} : vector<128x4xbf16>, vector<4x128xbf16>, vector<128x128xf32> -> vector<128x128xf32>
    %119 = arith.addf %112, %118 : vector<128x128xf32>
    %c0_143 = arith.constant 0 : index
    %c10_144 = arith.constant 10 : index
    %c1_145 = arith.constant 1 : index
    %c0_146 = arith.constant 0 : index
    %120 = vector.load %arg1[%c0_143, %c10_144, %c1_145, %c0_146] : memref<1x18x18x4xbf16, #tpu.memory_space<vmem>>, vector<1x8x16x4xbf16>
    %121 = vector.shape_cast %120 : vector<1x8x16x4xbf16> to vector<8x16x4xbf16>
    %122 = vector.shape_cast %121 : vector<8x16x4xbf16> to vector<128x4xbf16>
    %c2_147 = arith.constant 2 : index
    %c1_148 = arith.constant 1 : index
    %c0_149 = arith.constant 0 : index
    %c0_150 = arith.constant 0 : index
    %123 = vector.load %arg2[%c2_147, %c1_148, %c0_149, %c0_150] : memref<3x3x4x128xbf16, #tpu.memory_space<vmem>>, vector<1x1x4x128xbf16>
    %124 = vector.shape_cast %123 : vector<1x1x4x128xbf16> to vector<4x128xbf16>
    %cst_151 = arith.constant dense<0.000000e+00> : vector<128x128xf32>
    %125 = tpu.matmul %122, %124, %cst_151 {dimension_numbers = #tpu.dot_dimension_numbers<[1], [0], [0], [1], [0, 0, 1, 1], [], []>} : vector<128x4xbf16>, vector<4x128xbf16>, vector<128x128xf32> -> vector<128x128xf32>
    %126 = arith.addf %119, %125 : vector<128x128xf32>
    %c0_152 = arith.constant 0 : index
    %c10_153 = arith.constant 10 : index
    %c2_154 = arith.constant 2 : index
    %c0_155 = arith.constant 0 : index
    %127 = vector.load %arg1[%c0_152, %c10_153, %c2_154, %c0_155] : memref<1x18x18x4xbf16, #tpu.memory_space<vmem>>, vector<1x8x16x4xbf16>
    %128 = vector.shape_cast %127 : vector<1x8x16x4xbf16> to vector<8x16x4xbf16>
    %129 = vector.shape_cast %128 : vector<8x16x4xbf16> to vector<128x4xbf16>
    %c2_156 = arith.constant 2 : index
    %c2_157 = arith.constant 2 : index
    %c0_158 = arith.constant 0 : index
    %c0_159 = arith.constant 0 : index
    %130 = vector.load %arg2[%c2_156, %c2_157, %c0_158, %c0_159] : memref<3x3x4x128xbf16, #tpu.memory_space<vmem>>, vector<1x1x4x128xbf16>
    %131 = vector.shape_cast %130 : vector<1x1x4x128xbf16> to vector<4x128xbf16>
    %cst_160 = arith.constant dense<0.000000e+00> : vector<128x128xf32>
    %132 = tpu.matmul %129, %131, %cst_160 {dimension_numbers = #tpu.dot_dimension_numbers<[1], [0], [0], [1], [0, 0, 1, 1], [], []>} : vector<128x4xbf16>, vector<4x128xbf16>, vector<128x128xf32> -> vector<128x128xf32>
    %133 = arith.addf %126, %132 : vector<128x128xf32>
    %c128 = arith.constant 128 : index
    %c0_161 = arith.constant 0 : index
    %134 = vector.load %arg8[%c128, %c0_161] : memref<256x128xf32, #tpu.memory_space<vmem>>, vector<128x128xf32>
    tpu.vector_store %arg8[%c128, %c0_161], %133 {strides = array<i32>} : memref<256x128xf32, #tpu.memory_space<vmem>>, vector<128x128xf32>,
    %cst_162 = arith.constant dense<0.000000e+00> : vector<128xf32>
    %135 = vector.multi_reduction <add>, %133, %cst_162 [0] : vector<128x128xf32> to vector<128xf32>
    %136 = vector.shape_cast %135 : vector<128xf32> to vector<1x128xf32>
    %137 = arith.addf %67, %136 : vector<1x128xf32>
    %138 = arith.mulf %133, %133 : vector<128x128xf32>
    %cst_163 = arith.constant dense<0.000000e+00> : vector<128xf32>
    %139 = vector.multi_reduction <add>, %138, %cst_163 [0] : vector<128x128xf32> to vector<128xf32>
    %140 = vector.shape_cast %139 : vector<128xf32> to vector<1x128xf32>
    %141 = arith.addf %71, %140 : vector<1x128xf32>
    %c0_164 = arith.constant 0 : index
    %c0_165 = arith.constant 0 : index
    %142 = vector.load %arg3[%c0_164, %c0_165] : memref<1x128xf32, #tpu.memory_space<vmem>>, vector<1x128xf32>
    %cst_166 = arith.constant 2.560000e+02 : f32
    %143 = vector.broadcast %cst_166 : f32 to vector<1x128xf32>
    %144 = arith.mulf %143, %142 : vector<1x128xf32>
    %145 = arith.addf %137, %144 : vector<1x128xf32>
    %cst_167 = arith.constant 2.000000e+00 : f32
    %146 = vector.broadcast %cst_167 : f32 to vector<1x128xf32>
    %147 = arith.mulf %146, %142 : vector<1x128xf32>
    %148 = arith.mulf %147, %137 : vector<1x128xf32>
    %149 = arith.addf %141, %148 : vector<1x128xf32>
    %150 = arith.mulf %142, %142 : vector<1x128xf32>
    %cst_168 = arith.constant 2.560000e+02 : f32
    %151 = vector.broadcast %cst_168 : f32 to vector<1x128xf32>
    %152 = arith.mulf %151, %150 : vector<1x128xf32>
    %153 = arith.addf %149, %152 : vector<1x128xf32>
    %154 = tpu.concatenate %145, %153 in 0 : vector<1x128xf32>, vector<1x128xf32> -> vector<2x128xf32>
    %c0_169 = arith.constant 0 : index
    %c0_170 = arith.constant 0 : index
    %155 = vector.load %arg6[%c0_169, %c0_170] : memref<128x128xf32, #tpu.memory_space<vmem>>, vector<128x128xf32>
    %cst_171 = arith.constant dense<0.000000e+00> : vector<2x128xf32>
    %156 = tpu.matmul %154, %155, %cst_171 {dimension_numbers = #tpu.dot_dimension_numbers<[1], [0], [0], [1], [0, 0, 1, 1], [], []>} : vector<2x128xf32>, vector<128x128xf32>, vector<2x128xf32> -> vector<2x128xf32>
    %157 = vector.extract_strided_slice %156 {offsets = [0, 0], sizes = [1, 128], strides = [1, 1]} : vector<2x128xf32> to vector<1x128xf32>
    %158 = vector.extract_strided_slice %156 {offsets = [1, 0], sizes = [1, 128], strides = [1, 1]} : vector<2x128xf32> to vector<1x128xf32>
    %159 = arith.mulf %157, %157 : vector<1x128xf32>
    %160 = arith.subf %158, %159 : vector<1x128xf32>
    %cst_172 = arith.constant 0.000000e+00 : f32
    %161 = vector.broadcast %cst_172 : f32 to vector<1x128xf32>
    %162 = arith.maximumf %160, %161 : vector<1x128xf32>
    %cst_173 = arith.constant 9.99999974E-6 : f32
    %163 = vector.broadcast %cst_173 : f32 to vector<1x128xf32>
    %164 = arith.addf %162, %163 : vector<1x128xf32>
    %165 = math.rsqrt %164 : vector<1x128xf32>
    %c0_174 = arith.constant 0 : index
    %c0_175 = arith.constant 0 : index
    %166 = vector.load %arg4[%c0_174, %c0_175] : memref<1x128xf32, #tpu.memory_space<vmem>>, vector<1x128xf32>
    %167 = arith.mulf %165, %166 : vector<1x128xf32>
    %168 = arith.subf %142, %157 : vector<1x128xf32>
    %169 = arith.mulf %168, %167 : vector<1x128xf32>
    %c0_176 = arith.constant 0 : index
    %c0_177 = arith.constant 0 : index
    %170 = vector.load %arg5[%c0_176, %c0_177] : memref<1x128xf32, #tpu.memory_space<vmem>>, vector<1x128xf32>
    %171 = arith.addf %169, %170 : vector<1x128xf32>
    %c0_178 = arith.constant 0 : index
    %c0_179 = arith.constant 0 : index
    %172 = vector.load %arg8[%c0_178, %c0_179] : memref<256x128xf32, #tpu.memory_space<vmem>>, vector<128x128xf32>
    %173 = vector.broadcast %167 : vector<1x128xf32> to vector<128x128xf32>
    %174 = arith.mulf %172, %173 : vector<128x128xf32>
    %175 = vector.broadcast %171 : vector<1x128xf32> to vector<128x128xf32>
    %176 = arith.addf %174, %175 : vector<128x128xf32>
    %cst_180 = arith.constant 0.000000e+00 : f32
    %177 = vector.broadcast %cst_180 : f32 to vector<128x128xf32>
    %178 = arith.maximumf %176, %177 : vector<128x128xf32>
    %179 = vector.extract_strided_slice %178 {offsets = [0, 0], sizes = [128, 8], strides = [1, 1]} : vector<128x128xf32> to vector<128x8xf32>
    %c0_181 = arith.constant 0 : index
    %c0_182 = arith.constant 0 : index
    %c0_183 = arith.constant 0 : index
    %180 = vector.load %arg7[%c0_181, %c0_182, %c0_183] : memref<1x256x8xf32, #tpu.memory_space<vmem>>, vector<1x128x8xf32>
    %181 = vector.shape_cast %180 : vector<1x128x8xf32> to vector<128x8xf32>
    %182 = vector.shape_cast %179 : vector<128x8xf32> to vector<1x128x8xf32>
    tpu.vector_store %arg7[%c0_181, %c0_182, %c0_183], %182 {strides = array<i32>} : memref<1x256x8xf32, #tpu.memory_space<vmem>>, vector<1x128x8xf32>,
    %c128_184 = arith.constant 128 : index
    %c0_185 = arith.constant 0 : index
    %183 = vector.load %arg8[%c128_184, %c0_185] : memref<256x128xf32, #tpu.memory_space<vmem>>, vector<128x128xf32>
    %184 = vector.broadcast %167 : vector<1x128xf32> to vector<128x128xf32>
    %185 = arith.mulf %183, %184 : vector<128x128xf32>
    %186 = vector.broadcast %171 : vector<1x128xf32> to vector<128x128xf32>
    %187 = arith.addf %185, %186 : vector<128x128xf32>
    %cst_186 = arith.constant 0.000000e+00 : f32
    %188 = vector.broadcast %cst_186 : f32 to vector<128x128xf32>
    %189 = arith.maximumf %187, %188 : vector<128x128xf32>
    %190 = vector.extract_strided_slice %189 {offsets = [0, 0], sizes = [128, 8], strides = [1, 1]} : vector<128x128xf32> to vector<128x8xf32>
    %c0_187 = arith.constant 0 : index
    %c128_188 = arith.constant 128 : index
    %c0_189 = arith.constant 0 : index
    %191 = vector.load %arg7[%c0_187, %c128_188, %c0_189] : memref<1x256x8xf32, #tpu.memory_space<vmem>>, vector<1x128x8xf32>
    %192 = vector.shape_cast %191 : vector<1x128x8xf32> to vector<128x8xf32>
    %193 = vector.shape_cast %190 : vector<128x8xf32> to vector<1x128x8xf32>
    tpu.vector_store %arg7[%c0_187, %c128_188, %c0_189], %193 {strides = array<i32>} : memref<1x256x8xf32, #tpu.memory_space<vmem>>, vector<1x128x8xf32>,
    return
  }
  func.func @transform_0(%arg0: i32) -> (i32, i32, i32, i32) {
    %c0_i32 = arith.constant 0 : i32
    %c0_i32_0 = arith.constant 0 : i32
    %c0_i32_1 = arith.constant 0 : i32
    %c0_i32_2 = arith.constant 0 : i32
    return %arg0, %c0_i32, %c0_i32_0, %c0_i32_1 : i32, i32, i32, i32
  }
  func.func @transform_1(%arg0: i32) -> (i32, i32, i32, i32) {
    %c0_i32 = arith.constant 0 : i32
    %c0_i32_0 = arith.constant 0 : i32
    %c0_i32_1 = arith.constant 0 : i32
    %c0_i32_2 = arith.constant 0 : i32
    %c0_i32_3 = arith.constant 0 : i32
    return %c0_i32, %c0_i32_0, %c0_i32_1, %c0_i32_2 : i32, i32, i32, i32
  }
  func.func @transform_2(%arg0: i32) -> (i32, i32) {
    %c0_i32 = arith.constant 0 : i32
    %c0_i32_0 = arith.constant 0 : i32
    %c0_i32_1 = arith.constant 0 : i32
    return %c0_i32, %c0_i32_0 : i32, i32
  }
  func.func @transform_3(%arg0: i32) -> (i32, i32) {
    %c0_i32 = arith.constant 0 : i32
    %c0_i32_0 = arith.constant 0 : i32
    %c0_i32_1 = arith.constant 0 : i32
    return %c0_i32, %c0_i32_0 : i32, i32
  }
  func.func @transform_4(%arg0: i32) -> (i32, i32) {
    %c0_i32 = arith.constant 0 : i32
    %c0_i32_0 = arith.constant 0 : i32
    %c0_i32_1 = arith.constant 0 : i32
    return %c0_i32, %c0_i32_0 : i32, i32
  }
  func.func @transform_5(%arg0: i32) -> (i32, i32) {
    %c0_i32 = arith.constant 0 : i32
    %c0_i32_0 = arith.constant 0 : i32
    %c0_i32_1 = arith.constant 0 : i32
    return %c0_i32, %c0_i32_0 : i32, i32
  }
  func.func @transform_6(%arg0: i32) -> (i32, i32, i32) {
    %c0_i32 = arith.constant 0 : i32
    %c0_i32_0 = arith.constant 0 : i32
    %c0_i32_1 = arith.constant 0 : i32
    return %arg0, %c0_i32, %c0_i32_0 : i32, i32, i32
  }
}

</mosaic_0001>

<llo_original>
// kernel: tpu_custom_call.1
$region0: #{tpu_custom_call.1}
  #allocation0 [shape = 'u32[]', space=smem, size = 0x4, offset = 0x4, fixed_abs, tag = 'smem constant byte address 0x4 - core index']
  #allocation1 [shape = 'u32[144,128]{1,0:T(1,128)}', space=vmem, size = 0x12000, scoped, tag = 'internal scratch']
  #allocation2 [shape = 'f32[256,128]{1,0:T(8,128)}', space=vmem, size = 0x20000, scoped, tag = 'scratch operand']
  %s0 = inlined_call_operand.vmem [shape: bf16[2,18,18,4], index: 0, kind: input, shape index: {}]
  %s1 = inlined_call_operand.vmem [shape: bf16[3,3,4,128], index: 1, kind: input, shape index: {}]
  %s2 = inlined_call_operand.vmem [shape: f32[1,128], index: 2, kind: input, shape index: {}]
  %s3 = inlined_call_operand.vmem [shape: f32[1,128], index: 3, kind: input, shape index: {}]
  %s4 = inlined_call_operand.vmem [shape: f32[1,128], index: 4, kind: input, shape index: {}]
  %s5 = inlined_call_operand.vmem [shape: f32[128,128], index: 5, kind: input, shape index: {}]
  %s6 = inlined_call_operand.vmem [shape: f32[2,256,8], index: 6, kind: output, shape index: {}]
  %s7 = sld [smem:[#allocation0]]
  $region57: #{tpu_custom_call.1} parent=0
    _
  %s9 = ssub.s32 1, %s7
  %s10 = scalar_select 0, %s9, %s7
  loop: start=0, step=1, limit=4
  $region2: #{tpu_custom_call.1} parent=0 // loop_pre_header
    _
  $region3: #{tpu_custom_call.1} parent=0 // loop_header
    %s12 = sphi 0, %s16
    %p13 = scmp.ge.s32.totalorder %s12, 4
    %s22 = sphi 0, %s24
    %s25 = sphi 0, %s22
    %s26 = sphi 0, %s25
    %s42 = sphi 0, %s26
    %s46 = sphi 0, %s46
    %s48 = sphi 0, %s46
    %s49 = sphi 0, %s48
    %s63 = sphi 0, %s49
    %s67 = sphi 0, %s67
    %s69 = sphi 0, %s67
    %s70 = sphi 0, %s69
    %s84 = sphi 0, %s70
    %s88 = sphi 0, %s88
    %s90 = sphi 0, %s88
    %s91 = sphi 0, %s90
    %s105 = sphi 0, %s91
    %s109 = sphi 0, %s109
    %s111 = sphi 0, %s109
    %s112 = sphi 0, %s111
    %s126 = sphi 0, %s112
    %s130 = sphi 0, %s130
    %s132 = sphi 0, %s130
    %s133 = sphi 0, %s132
    %s147 = sphi 0, %s133
    %s153 = sphi 0, %s155
    %s156 = sphi 0, %s153
    %s157 = sphi 0, %s156
    %s173 = sphi 0, %s157
  $region4: #{tpu_custom_call.1} parent=0 // loop_header_branch
    %15 = sbr.rel (%p13) target = $region8
  $region5: #{tpu_custom_call.1} parent=0 // loop_body
    %s17 = ssub.s32 %s12, 1
    %s18 = ssub.s32 %s12, 2
    %s19 = sadd.s32 %s12, 1
    %s20 = ssub.s32 %s12, %s19
    %p21 = scmp.eq.s32.totalorder %s20, 0
    %s23 = sadd.s32 %s22, 1
    %s24 = scalar_select %p21, %s22, %s23
    %p27 = pneg %p21
    %p28 = scmp.eq.s32.totalorder %s12, 1
    %p29 = por %p27, %p28
    %p30 = scmp.ne.s32.totalorder %s22, %s25
    %p31 = scmp.eq.s32.totalorder %s12, 0
    %p32 = por %p30, %p31
    %p33 = scmp.ne.s32.totalorder %s22, %s25
    %p34 = scmp.eq.s32.totalorder %s17, 1
    %p35 = por %p33, %p34
    %p36 = scmp.ne.s32.totalorder %s25, %s26
    %p37 = scmp.eq.s32.totalorder %s17, 0
    %p38 = por %p36, %p37
    %p39 = scmp.ne.s32.totalorder %s25, %s26
    %p40 = scmp.eq.s32.totalorder %s18, 1
    %p41 = por %p39, %p40
    %p43 = scmp.ne.s32.totalorder %s26, %s42
    %p44 = scmp.eq.s32.totalorder %s18, 0
    %p45 = por %p43, %p44
    %s47 = sadd.s32 %s46, 1
    %p50 = scmp.eq.s32.totalorder %s12, 1
    %p51 = scmp.ne.s32.totalorder %s46, %s48
    %p52 = scmp.eq.s32.totalorder %s12, 0
    %p53 = por %p51, %p52
    %p54 = scmp.ne.s32.totalorder %s46, %s48
    %p55 = scmp.eq.s32.totalorder %s17, 1
    %p56 = por %p54, %p55
    %p57 = scmp.ne.s32.totalorder %s48, %s49
    %p58 = scmp.eq.s32.totalorder %s17, 0
    %p59 = por %p57, %p58
    %p60 = scmp.ne.s32.totalorder %s48, %s49
    %p61 = scmp.eq.s32.totalorder %s18, 1
    %p62 = por %p60, %p61
    %p64 = scmp.ne.s32.totalorder %s49, %s63
    %p65 = scmp.eq.s32.totalorder %s18, 0
    %p66 = por %p64, %p65
    %s68 = sadd.s32 %s67, 1
    %p71 = scmp.eq.s32.totalorder %s12, 1
    %p72 = scmp.ne.s32.totalorder %s67, %s69
    %p73 = scmp.eq.s32.totalorder %s12, 0
    %p74 = por %p72, %p73
    %p75 = scmp.ne.s32.totalorder %s67, %s69
    %p76 = scmp.eq.s32.totalorder %s17, 1
    %p77 = por %p75, %p76
    %p78 = scmp.ne.s32.totalorder %s69, %s70
    %p79 = scmp.eq.s32.totalorder %s17, 0
    %p80 = por %p78, %p79
    %p81 = scmp.ne.s32.totalorder %s69, %s70
    %p82 = scmp.eq.s32.totalorder %s18, 1
    %p83 = por %p81, %p82
    %p85 = scmp.ne.s32.totalorder %s70, %s84
    %p86 = scmp.eq.s32.totalorder %s18, 0
    %p87 = por %p85, %p86
    %s89 = sadd.s32 %s88, 1
    %p92 = scmp.eq.s32.totalorder %s12, 1
    %p93 = scmp.ne.s32.totalorder %s88, %s90
    %p94 = scmp.eq.s32.totalorder %s12, 0
    %p95 = por %p93, %p94
    %p96 = scmp.ne.s32.totalorder %s88, %s90
    %p97 = scmp.eq.s32.totalorder %s17, 1
    %p98 = por %p96, %p97
    %p99 = scmp.ne.s32.totalorder %s90, %s91
    %p100 = scmp.eq.s32.totalorder %s17, 0
    %p101 = por %p99, %p100
    %p102 = scmp.ne.s32.totalorder %s90, %s91
    %p103 = scmp.eq.s32.totalorder %s18, 1
    %p104 = por %p102, %p103
    %p106 = scmp.ne.s32.totalorder %s91, %s105
    %p107 = scmp.eq.s32.totalorder %s18, 0
    %p108 = por %p106, %p107
    %s110 = sadd.s32 %s109, 1
    %p113 = scmp.eq.s32.totalorder %s12, 1
    %p114 = scmp.ne.s32.totalorder %s109, %s111
    %p115 = scmp.eq.s32.totalorder %s12, 0
    %p116 = por %p114, %p115
    %p117 = scmp.ne.s32.totalorder %s109, %s111
    %p118 = scmp.eq.s32.totalorder %s17, 1
    %p119 = por %p117, %p118
    %p120 = scmp.ne.s32.totalorder %s111, %s112
    %p121 = scmp.eq.s32.totalorder %s17, 0
    %p122 = por %p120, %p121
    %p123 = scmp.ne.s32.totalorder %s111, %s112
    %p124 = scmp.eq.s32.totalorder %s18, 1
    %p125 = por %p123, %p124
    %p127 = scmp.ne.s32.totalorder %s112, %s126
    %p128 = scmp.eq.s32.totalorder %s18, 0
    %p129 = por %p127, %p128
    %s131 = sadd.s32 %s130, 1
    %p134 = scmp.eq.s32.totalorder %s12, 1
    %p135 = scmp.ne.s32.totalorder %s130, %s132
    %p136 = scmp.eq.s32.totalorder %s12, 0
    %p137 = por %p135, %p136
    %p138 = scmp.ne.s32.totalorder %s130, %s132
    %p139 = scmp.eq.s32.totalorder %s17, 1
    %p140 = por %p138, %p139
    %p141 = scmp.ne.s32.totalorder %s132, %s133
    %p142 = scmp.eq.s32.totalorder %s17, 0
    %p143 = por %p141, %p142
    %p144 = scmp.ne.s32.totalorder %s132, %s133
    %p145 = scmp.eq.s32.totalorder %s18, 1
    %p146 = por %p144, %p145
    %p148 = scmp.ne.s32.totalorder %s133, %s147
    %p149 = scmp.eq.s32.totalorder %s18, 0
    %p150 = por %p148, %p149
    %s151 = ssub.s32 %s12, %s19
    %p152 = scmp.eq.s32.totalorder %s151, 0
    %s154 = sadd.s32 %s153, 1
    %s155 = scalar_select %p152, %s153, %s154
    %p158 = pneg %p152
    %p159 = scmp.eq.s32.totalorder %s12, 1
    %p160 = por %p158, %p159
    %p161 = scmp.ne.s32.totalorder %s153, %s156
    %p162 = scmp.eq.s32.totalorder %s12, 0
    %p163 = por %p161, %p162
    %p164 = scmp.ne.s32.totalorder %s153, %s156
    %p165 = scmp.eq.s32.totalorder %s17, 1
    %p166 = por %p164, %p165
    %p167 = scmp.ne.s32.totalorder %s156, %s157
    %p168 = scmp.eq.s32.totalorder %s17, 0
    %p169 = por %p167, %p168
    %p170 = scmp.ne.s32.totalorder %s156, %s157
    %p171 = scmp.eq.s32.totalorder %s18, 1
    %p172 = por %p170, %p171
    %p174 = scmp.ne.s32.totalorder %s157, %s173
    %p175 = scmp.eq.s32.totalorder %s18, 0
    %p176 = por %p174, %p175
    %p177 = scmp.le.s32.totalorder 1, %s12
    %p178 = scmp.lt.s32.totalorder %s12, 3
    %p179 = pnand %p177, %p178
    %p180 = pneg %p179
    // Predicated region
    $region9: #{tpu_custom_call.1} parent=5 // pred_check
      _
    $region10: #{tpu_custom_call.1} parent=5 // pred_check_branch
      %182 = sbr.rel (%p179) target = $region12
    $region11: #{tpu_custom_call.1} parent=5 // pred_region
      %s183 = ssub.s32 %s12, 1
      // Predicated region
      $region13: #{tpu_custom_call.1} parent=11 // pred_check
        %p184 = pneg %p59
      $region14: #{tpu_custom_call.1} parent=11 // pred_check_branch
        %186 = sbr.rel (%p184) target = $region16
      $region15: #{tpu_custom_call.1} parent=11 // pred_region
        _
      $region16: #{tpu_custom_call.1} parent=11 // pred_fallthru
        _
      // Predicated region
      $region17: #{tpu_custom_call.1} parent=11 // pred_check
        %p187 = pneg %p80
      $region18: #{tpu_custom_call.1} parent=11 // pred_check_branch
        %189 = sbr.rel (%p187) target = $region20
      $region19: #{tpu_custom_call.1} parent=11 // pred_region
        _
      $region20: #{tpu_custom_call.1} parent=11 // pred_fallthru
        _
      // Predicated region
      $region21: #{tpu_custom_call.1} parent=11 // pred_check
        %p190 = pneg %p101
      $region22: #{tpu_custom_call.1} parent=11 // pred_check_branch
        %192 = sbr.rel (%p190) target = $region24
      $region23: #{tpu_custom_call.1} parent=11 // pred_region
        _
      $region24: #{tpu_custom_call.1} parent=11 // pred_fallthru
        _
      // Predicated region
      $region25: #{tpu_custom_call.1} parent=11 // pred_check
        %p193 = pneg %p122
      $region26: #{tpu_custom_call.1} parent=11 // pred_check_branch
        %195 = sbr.rel (%p193) target = $region28
      $region27: #{tpu_custom_call.1} parent=11 // pred_region
        _
      $region28: #{tpu_custom_call.1} parent=11 // pred_fallthru
        _
      // Predicated region
      $region29: #{tpu_custom_call.1} parent=11 // pred_check
        %p196 = pneg %p143
      $region30: #{tpu_custom_call.1} parent=11 // pred_check_branch
        %198 = sbr.rel (%p196) target = $region32
      $region31: #{tpu_custom_call.1} parent=11 // pred_region
        _
      $region32: #{tpu_custom_call.1} parent=11 // pred_fallthru
        _
    $region12: #{tpu_custom_call.1} parent=5 // pred_fallthru
      _
    %p199 = scmp.lt.s32.totalorder %s12, 2
    // Predicated region
    $region33: #{tpu_custom_call.1} parent=5 // pred_check
      %p200 = pneg %p199
    $region34: #{tpu_custom_call.1} parent=5 // pred_check_branch
      %202 = sbr.rel (%p200) target = $region36
    $region35: #{tpu_custom_call.1} parent=5 // pred_region
      // Predicated region
      $region37: #{tpu_custom_call.1} parent=35 // pred_check
        %p203 = pneg %p32
      $region38: #{tpu_custom_call.1} parent=35 // pred_check_branch
        %205 = sbr.rel (%p203) target = $region40
      $region39: #{tpu_custom_call.1} parent=35 // pred_region
        %p206 = scmp.lt.s32.totalorder %s12, 1
        %s207 = scalar_select %p206, %s12, 1
        %s208 = smul.addr %s207, 54
        %s209 = smul.addr %s208, 4
        %s210 = scalar_lea.vmem %s0, %s209
      $region40: #{tpu_custom_call.1} parent=35 // pred_fallthru
        _
    $region36: #{tpu_custom_call.1} parent=5 // pred_fallthru
      _
    %p211 = scmp.le.s32.totalorder 1, %s12
    %p212 = scmp.lt.s32.totalorder %s12, 3
    %p213 = pnand %p211, %p212
    %p214 = pneg %p213
    // Predicated region
    $region41: #{tpu_custom_call.1} parent=5 // pred_check
      _
    $region42: #{tpu_custom_call.1} parent=5 // pred_check_branch
      %216 = sbr.rel (%p213) target = $region44
    $region43: #{tpu_custom_call.1} parent=5 // pred_region
      %s217 = ssub.s32 %s12, 1
      %p218 = scmp.lt.s32.totalorder %s17, 1
      %s219 = scalar_select %p218, %s17, 1
      %s220 = smul.addr %s219, 54
      %s221 = smul.addr %s220, 4
      %s222 = scalar_lea.vmem %s0, %s221
      %p223 = pneg %p38
      %p224 = pneg %p35
      %p225 = pneg %p59
      %p226 = pneg %p56
      %p227 = pneg %p80
      %p228 = pneg %p77
      %p229 = pneg %p101
      %p230 = pneg %p98
      %p231 = pneg %p122
      %p232 = pneg %p119
      %p233 = pneg %p143
      %p234 = pneg %p140
      %p235 = pneg %p169
      %p236 = pneg %p166
      %p237 = scmp.lt.s32.totalorder %s17, 1
      %s238 = scalar_select %p237, %s17, 1
      %s239 = smul.addr %s238, 32
      %s240 = smul.addr %s239, 8
      %s241 = scalar_lea.vmem %s6, %s240
      %p242 = scmp.lt.s32.totalorder %s17, 1
      %s243 = scalar_select %p242, %s17, 1
      %s244 = smul.addr %s243, 54
      %s245 = smul.addr %s244, 4
      %s246 = scalar_lea.vmem %s0, %s245
      %p247 = scmp.lt.s32.totalorder %s17, 1
      %s248 = scalar_select %p247, %s17, 1
      %s249 = smul.addr %s248, 32
      %s250 = smul.addr %s249, 8
      %s251 = scalar_lea.vmem %s6, %s250
      %v253 = vld [vmem:[%s246] sm:$0xf]
      %v254 = vld [vmem:[%s246 + $0x4] sm:$0xf]
      %v255 = vld [vmem:[%s246 + $0xc] sm:$0xf]
      %v256 = vld [vmem:[%s246 + $0x10] sm:$0xf]
      %v257 = vld [vmem:[%s246 + $0x18] sm:$0xf]
      %v258 = vld [vmem:[%s246 + $0x1c] sm:$0xf]
      %v259 = vld [vmem:[%s246 + $0x24] sm:$0xf]
      %v260 = vld [vmem:[%s246 + $0x28] sm:$0xf]
      %v261 = vld [vmem:[%s246 + $0x30] sm:$0xf]
      %v262 = vld [vmem:[%s246 + $0x34] sm:$0xf]
      %v263 = vld [vmem:[%s246 + $0x3c] sm:$0xf]
      %v264 = vld [vmem:[%s246 + $0x40] sm:$0xf]
      %v265 = vld [vmem:[%s246 + $0x48] sm:$0xf]
      %v266 = vld [vmem:[%s246 + $0x4c] sm:$0xf]
      %v267 = vld [vmem:[%s246 + $0x54] sm:$0xf]
      %v268 = vld [vmem:[%s246 + $0x58] sm:$0xf]
      %v269 = vld [vmem:[%s1] sm:$0x3]
      %v270 = vld [vmem:[%s246 + $0x8] sm:$0x1]
      %v271 = vld [vmem:[%s246 + $0x14] sm:$0x1]
      %v272 = vld [vmem:[%s246 + $0x20] sm:$0x1]
      %v273 = vld [vmem:[%s246 + $0x2c] sm:$0x1]
      %v274 = vld [vmem:[%s246 + $0x38] sm:$0x1]
      %v275 = vld [vmem:[%s246 + $0x44] sm:$0x1]
      %v276 = vld [vmem:[%s246 + $0x50] sm:$0x1]
      %v277 = vld [vmem:[%s246 + $0x5c] sm:$0x1]
      %vm278 = vsmask.f32 3328
      %vm279 = vsmask.f32 7440
      %vm280 = vmor %vm278, %vm279
      %v282 = vshrl.u32 %v253, 16
      %v284 = vrot.slane %v282, 4
      %v285 = vshll.u32 %v253, 16
      %v287 = vrot.slane %v285, 5
      %v288 = vor.u32 %v284, %v287
      %v289 = vrot.slane %v288, 4
      %v291 = vshll.u32 %v254, 16
      %v293 = vrot.slane %v291, 5
      %v294 = vsel %vm280, %v289, %v293
      %v295 = vshrl.u32 %v254, 16
      %v297 = vrot.slane %v295, 4
      %v298 = vor.u32 %v297, %v293
      %v299 = vrot.slane %v298, 4
      %v301 = vshll.u32 %v270, 16
      %v303 = vrot.slane %v301, 5
      %v304 = vsel %vm280, %v299, %v303
      %v306 = vshrl.u32 %v255, 16
      %v308 = vrot.slane %v306, 4
      %v309 = vshll.u32 %v255, 16
      %v311 = vrot.slane %v309, 5
      %v312 = vor.u32 %v308, %v311
      %v313 = vrot.slane %v312, 4
      %v315 = vshll.u32 %v256, 16
      %v317 = vrot.slane %v315, 5
      %v318 = vsel %vm280, %v313, %v317
      %v319 = vshrl.u32 %v256, 16
      %v321 = vrot.slane %v319, 4
      %v322 = vor.u32 %v321, %v317
      %v323 = vrot.slane %v322, 4
      %v325 = vshll.u32 %v271, 16
      %v327 = vrot.slane %v325, 5
      %v328 = vsel %vm280, %v323, %v327
      %v330 = vshrl.u32 %v257, 16
      %v332 = vrot.slane %v330, 4
      %v333 = vshll.u32 %v257, 16
      %v335 = vrot.slane %v333, 5
      %v336 = vor.u32 %v332, %v335
      %v337 = vrot.slane %v336, 4
      %v339 = vshll.u32 %v258, 16
      %v341 = vrot.slane %v339, 5
      %v342 = vsel %vm280, %v337, %v341
      %v343 = vshrl.u32 %v258, 16
      %v345 = vrot.slane %v343, 4
      %v346 = vor.u32 %v345, %v341
      %v347 = vrot.slane %v346, 4
      %v349 = vshll.u32 %v272, 16
      %v351 = vrot.slane %v349, 5
      %v352 = vsel %vm280, %v347, %v351
      %v354 = vshrl.u32 %v259, 16
      %v356 = vrot.slane %v354, 4
      %v357 = vshll.u32 %v259, 16
      %v359 = vrot.slane %v357, 5
      %v360 = vor.u32 %v356, %v359
      %v361 = vrot.slane %v360, 4
      %v363 = vshll.u32 %v260, 16
      %v365 = vrot.slane %v363, 5
      %v366 = vsel %vm280, %v361, %v365
      %v367 = vshrl.u32 %v260, 16
      %v369 = vrot.slane %v367, 4
      %v370 = vor.u32 %v369, %v365
      %v371 = vrot.slane %v370, 4
      %v373 = vshll.u32 %v273, 16
      %v375 = vrot.slane %v373, 5
      %v376 = vsel %vm280, %v371, %v375
      %v378 = vshrl.u32 %v261, 16
      %v380 = vrot.slane %v378, 4
      %v381 = vshll.u32 %v261, 16
      %v383 = vrot.slane %v381, 5
      %v384 = vor.u32 %v380, %v383
      %v385 = vrot.slane %v384, 4
      %v387 = vshll.u32 %v262, 16
      %v389 = vrot.slane %v387, 5
      %v390 = vsel %vm280, %v385, %v389
      %v391 = vshrl.u32 %v262, 16
      %v393 = vrot.slane %v391, 4
      %v394 = vor.u32 %v393, %v389
      %v395 = vrot.slane %v394, 4
      %v397 = vshll.u32 %v274, 16
      %v399 = vrot.slane %v397, 5
      %v400 = vsel %vm280, %v395, %v399
      %v402 = vshrl.u32 %v263, 16
      %v404 = vrot.slane %v402, 4
      %v405 = vshll.u32 %v263, 16
      %v407 = vrot.slane %v405, 5
      %v408 = vor.u32 %v404, %v407
      %v409 = vrot.slane %v408, 4
      %v411 = vshll.u32 %v264, 16
      %v413 = vrot.slane %v411, 5
      %v414 = vsel %vm280, %v409, %v413
      %v415 = vshrl.u32 %v264, 16
      %v417 = vrot.slane %v415, 4
      %v418 = vor.u32 %v417, %v413
      %v419 = vrot.slane %v418, 4
      %v421 = vshll.u32 %v275, 16
      %v423 = vrot.slane %v421, 5
      %v424 = vsel %vm280, %v419, %v423
      %v426 = vshrl.u32 %v265, 16
      %v428 = vrot.slane %v426, 4
      %v429 = vshll.u32 %v265, 16
      %v431 = vrot.slane %v429, 5
      %v432 = vor.u32 %v428, %v431
      %v433 = vrot.slane %v432, 4
      %v435 = vshll.u32 %v266, 16
      %v437 = vrot.slane %v435, 5
      %v438 = vsel %vm280, %v433, %v437
      %v439 = vshrl.u32 %v266, 16
      %v441 = vrot.slane %v439, 4
      %v442 = vor.u32 %v441, %v437
      %v443 = vrot.slane %v442, 4
      %v445 = vshll.u32 %v276, 16
      %v447 = vrot.slane %v445, 5
      %v448 = vsel %vm280, %v443, %v447
      %v450 = vshrl.u32 %v267, 16
      %v452 = vrot.slane %v450, 4
      %v453 = vshll.u32 %v267, 16
      %v455 = vrot.slane %v453, 5
      %v456 = vor.u32 %v452, %v455
      %v457 = vrot.slane %v456, 4
      %v459 = vshll.u32 %v268, 16
      %v461 = vrot.slane %v459, 5
      %v462 = vsel %vm280, %v457, %v461
      %v463 = vshrl.u32 %v268, 16
      %v465 = vrot.slane %v463, 4
      %v466 = vor.u32 %v465, %v461
      %v467 = vrot.slane %v466, 4
      %v469 = vshll.u32 %v277, 16
      %v471 = vrot.slane %v469, 5
      %v472 = vsel %vm280, %v467, %v471
      %s473 = scalar_lea.vmem %s1, 2
      %v474 = vld [vmem:[%s473] sm:$0x3]
      %v475 = vunpack.c.l.b16 %v294
      %v476 = vunpack.c.l.b16 %v304
      %v477 = vunpack.c.l.b16 %v318
      %v478 = vunpack.c.l.b16 %v328
      %v479 = vunpack.c.l.b16 %v342
      %v480 = vunpack.c.l.b16 %v352
      %v481 = vunpack.c.l.b16 %v366
      %v482 = vunpack.c.l.b16 %v376
      %v483 = vunpack.c.l.b16 %v390
      %v484 = vunpack.c.l.b16 %v400
      %v485 = vunpack.c.l.b16 %v414
      %v486 = vunpack.c.l.b16 %v424
      %v487 = vunpack.c.l.b16 %v438
      %v488 = vunpack.c.l.b16 %v448
      %v489 = vunpack.c.l.b16 %v462
      %v490 = vunpack.c.l.b16 %v472
      %v491 = vpack.c.b16 %v476, %v475
      %v492 = vpack.c.b16 %v478, %v477
      %v493 = vpack.c.b16 %v480, %v479
      %v494 = vpack.c.b16 %v482, %v481
      %v495 = vpack.c.b16 %v484, %v483
      %v496 = vpack.c.b16 %v486, %v485
      %v497 = vpack.c.b16 %v488, %v487
      %v498 = vpack.c.b16 %v490, %v489
      %vm499 = vcmask 31744
      %v501 = vsel %vm499, %v491, 0
      %v504 = vsel %vm499, %v492, 0
      %v507 = vsel %vm499, %v493, 0
      %v510 = vsel %vm499, %v494, 0
      %v513 = vsel %vm499, %v495, 0
      %v516 = vsel %vm499, %v496, 0
      %v519 = vsel %vm499, %v497, 0
      %v522 = vsel %vm499, %v498, 0
      %vm524 = vcmask 1041408
      %v526 = vsel %vm524, %v474, 0
      %528 = vmatprep.subr.bf16.mxu0 0
      %529 = vmatpush1.bf16.msra.mxu0 %v526
      %530 = vmatprep.subr.bf16.mxu0 0
      %531 = vmatpush1.bf16.msra.mxu0 0
      %532 = vmatprep.subr.bf16.mxu0 0
      %533 = vmatpush1.bf16.msra.mxu0 0
      %534 = vmatprep.subr.bf16.mxu0 0
      %535 = vmatpush1.bf16.msra.mxu0 0
      %536 = vmatprep.subr.bf16.mxu0 0
      %537 = vmatpush1.bf16.msra.mxu0 0
      %538 = vmatprep.subr.bf16.mxu0 0
      %539 = vmatpush1.bf16.msra.mxu0 0
      %540 = vmatprep.subr.bf16.mxu0 0
      %541 = vmatpush1.bf16.msra.mxu0 0
      %542 = vmatprep.subr.bf16.mxu0 0
      %543 = vmatpush1.bf16.msra.mxu0 0
      %544 = vmatprep.subr.bf16.mxu0 0
      %545 = vmatpush1.bf16.msra.mxu0 0
      %546 = vmatprep.subr.bf16.mxu0 0
      %547 = vmatpush1.bf16.msra.mxu0 0
      %548 = vmatprep.subr.bf16.mxu0 0
      %549 = vmatpush1.bf16.msra.mxu0 0
      %550 = vmatprep.subr.bf16.mxu0 0
      %551 = vmatpush1.bf16.msra.mxu0 0
      %552 = vmatprep.subr.bf16.mxu0 0
      %553 = vmatpush1.bf16.msra.mxu0 0
      %554 = vmatprep.subr.bf16.mxu0 0
      %555 = vmatpush1.bf16.msra.mxu0 0
      %556 = vmatprep.subr.bf16.mxu0 0
      %557 = vmatpush1.bf16.msra.mxu0 0
      %558 = vmatprep.subr.bf16.mxu0 0
      %559 = vmatpush1.bf16.msra.mxu0 0
      %560 = vmatprep.mubr.bf16.mxu0 0
      %561 = vmatmul.mubr.bf16.gmra.mrb[0].mxu0 %v501
      %v562 = vpop.f32.mrb[0].mxu0
      %v563 = vadd.f32 0.0, %v562
      %v564 = vpop.f32.mrb[0].mxu0
      %v565 = vpop.f32.mrb[0].mxu0
      %v566 = vadd.f32 0.0, %v565
      %v567 = vpop.f32.mrb[0].mxu0
      %568 = vmatprep.mubr.bf16.mxu0 0
      %569 = vmatmul.mubr.bf16.gmra.mrb[0].mxu0 %v504
      %v570 = vpop.f32.mrb[0].mxu0
      %v571 = vadd.f32 0.0, %v570
      %v572 = vpop.f32.mrb[0].mxu0
      %v573 = vpop.f32.mrb[0].mxu0
      %v574 = vadd.f32 0.0, %v573
      %v575 = vpop.f32.mrb[0].mxu0
      %576 = vmatprep.mubr.bf16.mxu0 0
      %577 = vmatmul.mubr.bf16.gmra.mrb[0].mxu0 %v507
      %v578 = vpop.f32.mrb[0].mxu0
      %v579 = vadd.f32 0.0, %v578
      %v580 = vpop.f32.mrb[0].mxu0
      %v581 = vpop.f32.mrb[0].mxu0
      %v582 = vadd.f32 0.0, %v581
      %v583 = vpop.f32.mrb[0].mxu0
      %584 = vmatprep.mubr.bf16.mxu0 0
      %585 = vmatmul.mubr.bf16.gmra.mrb[0].mxu0 %v510
      %v586 = vpop.f32.mrb[0].mxu0
      %v587 = vadd.f32 0.0, %v586
      %v588 = vpop.f32.mrb[0].mxu0
      %v589 = vpop.f32.mrb[0].mxu0
      %v590 = vadd.f32 0.0, %v589
      %v591 = vpop.f32.mrb[0].mxu0
      %592 = vmatprep.mubr.bf16.mxu0 0
      %593 = vmatmul.mubr.bf16.gmra.mrb[0].mxu0 %v513
      %v594 = vpop.f32.mrb[0].mxu0
      %v595 = vadd.f32 0.0, %v594
      %v596 = vpop.f32.mrb[0].mxu0
      %v597 = vpop.f32.mrb[0].mxu0
      %v598 = vadd.f32 0.0, %v597
      %v599 = vpop.f32.mrb[0].mxu0
      %600 = vmatprep.mubr.bf16.mxu0 0
      %601 = vmatmul.mubr.bf16.gmra.mrb[0].mxu0 %v516
      %v602 = vpop.f32.mrb[0].mxu0
      %v603 = vadd.f32 0.0, %v602
      %v604 = vpop.f32.mrb[0].mxu0
      %v605 = vpop.f32.mrb[0].mxu0
      %v606 = vadd.f32 0.0, %v605
      %v607 = vpop.f32.mrb[0].mxu0
      %608 = vmatprep.mubr.bf16.mxu0 0
      %609 = vmatmul.mubr.bf16.gmra.mrb[0].mxu0 %v519
      %v610 = vpop.f32.mrb[0].mxu0
      %v611 = vadd.f32 0.0, %v610
      %v612 = vpop.f32.mrb[0].mxu0
      %v613 = vpop.f32.mrb[0].mxu0
      %v614 = vadd.f32 0.0, %v613
      %v615 = vpop.f32.mrb[0].mxu0
      %616 = vmatprep.mubr.bf16.mxu0 0
      %617 = vmatmul.mubr.bf16.gmra.mrb[0].mxu0 %v522
      %v618 = vpop.f32.mrb[0].mxu0
      %v619 = vadd.f32 0.0, %v618
      %v620 = vpop.f32.mrb[0].mxu0
      %v621 = vpop.f32.mrb[0].mxu0
      %v622 = vadd.f32 0.0, %v621
      %v623 = vpop.f32.mrb[0].mxu0
      %624 = vdwg.mxu0
      %v641 = vunpack.c.l.b16 %v253
      %v642 = vunpack.c.l.b16 %v254
      %v643 = vunpack.c.l.b16 %v255
      %v644 = vunpack.c.l.b16 %v256
      %v645 = vunpack.c.l.b16 %v257
      %v646 = vunpack.c.l.b16 %v258
      %v647 = vunpack.c.l.b16 %v259
      %v648 = vunpack.c.l.b16 %v260
      %v649 = vunpack.c.l.b16 %v261
      %v650 = vunpack.c.l.b16 %v262
      %v651 = vunpack.c.l.b16 %v263
      %v652 = vunpack.c.l.b16 %v264
      %v653 = vunpack.c.l.b16 %v265
      %v654 = vunpack.c.l.b16 %v266
      %v655 = vunpack.c.l.b16 %v267
      %v656 = vunpack.c.l.b16 %v268
      %v657 = vpack.c.b16 %v642, %v641
      %v658 = vpack.c.b16 %v644, %v643
      %v659 = vpack.c.b16 %v646, %v645
      %v660 = vpack.c.b16 %v648, %v647
      %v661 = vpack.c.b16 %v650, %v649
      %v662 = vpack.c.b16 %v652, %v651
      %v663 = vpack.c.b16 %v654, %v653
      %v664 = vpack.c.b16 %v656, %v655
      %v666 = vsel %vm499, %v657, 0
      %v669 = vsel %vm499, %v658, 0
      %v672 = vsel %vm499, %v659, 0
      %v675 = vsel %vm499, %v660, 0
      %v678 = vsel %vm499, %v661, 0
      %v681 = vsel %vm499, %v662, 0
      %v684 = vsel %vm499, %v663, 0
      %v687 = vsel %vm499, %v664, 0
      %v690 = vsel %vm524, %v269, 0
      %692 = vmatprep.subr.bf16.mxu0 0
      %693 = vmatpush1.bf16.msra.mxu0 %v690
      %694 = vmatprep.subr.bf16.mxu0 0
      %695 = vmatpush1.bf16.msra.mxu0 0
      %696 = vmatprep.subr.bf16.mxu0 0
      %697 = vmatpush1.bf16.msra.mxu0 0
      %698 = vmatprep.subr.bf16.mxu0 0
      %699 = vmatpush1.bf16.msra.mxu0 0
      %700 = vmatprep.subr.bf16.mxu0 0
      %701 = vmatpush1.bf16.msra.mxu0 0
      %702 = vmatprep.subr.bf16.mxu0 0
      %703 = vmatpush1.bf16.msra.mxu0 0
      %704 = vmatprep.subr.bf16.mxu0 0
      %705 = vmatpush1.bf16.msra.mxu0 0
      %706 = vmatprep.subr.bf16.mxu0 0
      %707 = vmatpush1.bf16.msra.mxu0 0
      %708 = vmatprep.subr.bf16.mxu0 0
      %709 = vmatpush1.bf16.msra.mxu0 0
      %710 = vmatprep.subr.bf16.mxu0 0
      %711 = vmatpush1.bf16.msra.mxu0 0
      %712 = vmatprep.subr.bf16.mxu0 0
      %713 = vmatpush1.bf16.msra.mxu0 0
      %714 = vmatprep.subr.bf16.mxu0 0
      %715 = vmatpush1.bf16.msra.mxu0 0
      %716 = vmatprep.subr.bf16.mxu0 0
      %717 = vmatpush1.bf16.msra.mxu0 0
      %718 = vmatprep.subr.bf16.mxu0 0
      %719 = vmatpush1.bf16.msra.mxu0 0
      %720 = vmatprep.subr.bf16.mxu0 0
      %721 = vmatpush1.bf16.msra.mxu0 0
      %722 = vmatprep.subr.bf16.mxu0 0
      %723 = vmatpush1.bf16.msra.mxu0 0
      %724 = vmatprep.mubr.bf16.mxu0 0
      %725 = vmatmul.mubr.bf16.gmra.mrb[0].mxu0 %v666
      %v726 = vpop.f32.mrb[0].mxu0
      %v727 = vadd.f32 %v563, %v726
      %v728 = vpop.f32.mrb[0].mxu0
      %v729 = vpop.f32.mrb[0].mxu0
      %v730 = vadd.f32 %v566, %v729
      %v731 = vpop.f32.mrb[0].mxu0
      %732 = vmatprep.mubr.bf16.mxu0 0
      %733 = vmatmul.mubr.bf16.gmra.mrb[0].mxu0 %v669
      %v734 = vpop.f32.mrb[0].mxu0
      %v735 = vadd.f32 %v571, %v734
      %v736 = vpop.f32.mrb[0].mxu0
      %v737 = vpop.f32.mrb[0].mxu0
      %v738 = vadd.f32 %v574, %v737
      %v739 = vpop.f32.mrb[0].mxu0
      %740 = vmatprep.mubr.bf16.mxu0 0
      %741 = vmatmul.mubr.bf16.gmra.mrb[0].mxu0 %v672
      %v742 = vpop.f32.mrb[0].mxu0
      %v743 = vadd.f32 %v579, %v742
      %v744 = vpop.f32.mrb[0].mxu0
      %v745 = vpop.f32.mrb[0].mxu0
      %v746 = vadd.f32 %v582, %v745
      %v747 = vpop.f32.mrb[0].mxu0
      %748 = vmatprep.mubr.bf16.mxu0 0
      %749 = vmatmul.mubr.bf16.gmra.mrb[0].mxu0 %v675
      %v750 = vpop.f32.mrb[0].mxu0
      %v751 = vadd.f32 %v587, %v750
      %v752 = vpop.f32.mrb[0].mxu0
      %v753 = vpop.f32.mrb[0].mxu0
      %v754 = vadd.f32 %v590, %v753
      %v755 = vpop.f32.mrb[0].mxu0
      %756 = vmatprep.mubr.bf16.mxu0 0
      %757 = vmatmul.mubr.bf16.gmra.mrb[0].mxu0 %v678
      %v758 = vpop.f32.mrb[0].mxu0
      %v759 = vadd.f32 %v595, %v758
      %v760 = vpop.f32.mrb[0].mxu0
      %v761 = vpop.f32.mrb[0].mxu0
      %v762 = vadd.f32 %v598, %v761
      %v763 = vpop.f32.mrb[0].mxu0
      %764 = vmatprep.mubr.bf16.mxu0 0
      %765 = vmatmul.mubr.bf16.gmra.mrb[0].mxu0 %v681
      %v766 = vpop.f32.mrb[0].mxu0
      %v767 = vadd.f32 %v603, %v766
      %v768 = vpop.f32.mrb[0].mxu0
      %v769 = vpop.f32.mrb[0].mxu0
      %v770 = vadd.f32 %v606, %v769
      %v771 = vpop.f32.mrb[0].mxu0
      %772 = vmatprep.mubr.bf16.mxu0 0
      %773 = vmatmul.mubr.bf16.gmra.mrb[0].mxu0 %v684
      %v774 = vpop.f32.mrb[0].mxu0
      %v775 = vadd.f32 %v611, %v774
      %v776 = vpop.f32.mrb[0].mxu0
      %v777 = vpop.f32.mrb[0].mxu0
      %v778 = vadd.f32 %v614, %v777
      %v779 = vpop.f32.mrb[0].mxu0
      %780 = vmatprep.mubr.bf16.mxu0 0
      %781 = vmatmul.mubr.bf16.gmra.mrb[0].mxu0 %v687
      %v782 = vpop.f32.mrb[0].mxu0
      %v783 = vadd.f32 %v619, %v782
      %v784 = vpop.f32.mrb[0].mxu0
      %v785 = vpop.f32.mrb[0].mxu0
      %v786 = vadd.f32 %v622, %v785
      %v787 = vpop.f32.mrb[0].mxu0
      %788 = vdwg.mxu0
      %v789 = vld [vmem:[%s246] sm:$0xe]
      %v790 = vld [vmem:[%s246 + $0xc] sm:$0xe]
      %v791 = vld [vmem:[%s246 + $0x18] sm:$0xe]
      %v792 = vld [vmem:[%s246 + $0x24] sm:$0xe]
      %v793 = vld [vmem:[%s246 + $0x30] sm:$0xe]
      %v794 = vld [vmem:[%s246 + $0x3c] sm:$0xe]
      %v795 = vld [vmem:[%s246 + $0x48] sm:$0xe]
      %v796 = vld [vmem:[%s246 + $0x54] sm:$0xe]
      %vm813 = vcmask 1042432
      %vm814 = vcmask 1046532
      %vm815 = vmor %vm813, %vm814
      %v816 = vrot.slane %v789, 5
      %v817 = vrot.slane %v816, 4
      %v818 = vrot.slane %v254, 5
      %v819 = vsel %vm815, %v817, %v818
      %v820 = vrot.slane %v818, 4
      %v821 = vrot.slane %v270, 5
      %v822 = vsel %vm815, %v820, %v821
      %v823 = vrot.slane %v790, 5
      %v824 = vrot.slane %v823, 4
      %v825 = vrot.slane %v256, 5
      %v826 = vsel %vm815, %v824, %v825
      %v827 = vrot.slane %v825, 4
      %v828 = vrot.slane %v271, 5
      %v829 = vsel %vm815, %v827, %v828
      %v830 = vrot.slane %v791, 5
      %v831 = vrot.slane %v830, 4
      %v832 = vrot.slane %v258, 5
      %v833 = vsel %vm815, %v831, %v832
      %v834 = vrot.slane %v832, 4
      %v835 = vrot.slane %v272, 5
      %v836 = vsel %vm815, %v834, %v835
      %v837 = vrot.slane %v792, 5
      %v838 = vrot.slane %v837, 4
      %v839 = vrot.slane %v260, 5
      %v840 = vsel %vm815, %v838, %v839
      %v841 = vrot.slane %v839, 4
      %v842 = vrot.slane %v273, 5
      %v843 = vsel %vm815, %v841, %v842
      %v844 = vrot.slane %v793, 5
      %v845 = vrot.slane %v844, 4
      %v846 = vrot.slane %v262, 5
      %v847 = vsel %vm815, %v845, %v846
      %v848 = vrot.slane %v846, 4
      %v849 = vrot.slane %v274, 5
      %v850 = vsel %vm815, %v848, %v849
      %v851 = vrot.slane %v794, 5
      %v852 = vrot.slane %v851, 4
      %v853 = vrot.slane %v264, 5
      %v854 = vsel %vm815, %v852, %v853
      %v855 = vrot.slane %v853, 4
      %v856 = vrot.slane %v275, 5
      %v857 = vsel %vm815, %v855, %v856
      %v858 = vrot.slane %v795, 5
      %v859 = vrot.slane %v858, 4
      %v860 = vrot.slane %v266, 5
      %v861 = vsel %vm815, %v859, %v860
      %v862 = vrot.slane %v860, 4
      %v863 = vrot.slane %v276, 5
      %v864 = vsel %vm815, %v862, %v863
      %v865 = vrot.slane %v796, 5
      %v866 = vrot.slane %v865, 4
      %v867 = vrot.slane %v268, 5
      %v868 = vsel %vm815, %v866, %v867
      %v869 = vrot.slane %v867, 4
      %v870 = vrot.slane %v277, 5
      %v871 = vsel %vm815, %v869, %v870
      %s872 = scalar_lea.vmem %s1, 4
      %v873 = vld [vmem:[%s872] sm:$0x3]
      %v874 = vunpack.c.l.b16 %v819
      %v875 = vunpack.c.l.b16 %v822
      %v876 = vunpack.c.l.b16 %v826
      %v877 = vunpack.c.l.b16 %v829
      %v878 = vunpack.c.l.b16 %v833
      %v879 = vunpack.c.l.b16 %v836
      %v880 = vunpack.c.l.b16 %v840
      %v881 = vunpack.c.l.b16 %v843
      %v882 = vunpack.c.l.b16 %v847
      %v883 = vunpack.c.l.b16 %v850
      %v884 = vunpack.c.l.b16 %v854
      %v885 = vunpack.c.l.b16 %v857
      %v886 = vunpack.c.l.b16 %v861
      %v887 = vunpack.c.l.b16 %v864
      %v888 = vunpack.c.l.b16 %v868
      %v889 = vunpack.c.l.b16 %v871
      %v890 = vpack.c.b16 %v875, %v874
      %v891 = vpack.c.b16 %v877, %v876
      %v892 = vpack.c.b16 %v879, %v878
      %v893 = vpack.c.b16 %v881, %v880
      %v894 = vpack.c.b16 %v883, %v882
      %v895 = vpack.c.b16 %v885, %v884
      %v896 = vpack.c.b16 %v887, %v886
      %v897 = vpack.c.b16 %v889, %v888
      %v899 = vsel %vm499, %v890, 0
      %v902 = vsel %vm499, %v891, 0
      %v905 = vsel %vm499, %v892, 0
      %v908 = vsel %vm499, %v893, 0
      %v911 = vsel %vm499, %v894, 0
      %v914 = vsel %vm499, %v895, 0
      %v917 = vsel %vm499, %v896, 0
      %v920 = vsel %vm499, %v897, 0
      %v923 = vsel %vm524, %v873, 0
      %925 = vmatprep.subr.bf16.mxu0 0
      %926 = vmatpush1.bf16.msra.mxu0 %v923
      %927 = vmatprep.subr.bf16.mxu0 0
      %928 = vmatpush1.bf16.msra.mxu0 0
      %929 = vmatprep.subr.bf16.mxu0 0
      %930 = vmatpush1.bf16.msra.mxu0 0
      %931 = vmatprep.subr.bf16.mxu0 0
      %932 = vmatpush1.bf16.msra.mxu0 0
      %933 = vmatprep.subr.bf16.mxu0 0
      %934 = vmatpush1.bf16.msra.mxu0 0
      %935 = vmatprep.subr.bf16.mxu0 0
      %936 = vmatpush1.bf16.msra.mxu0 0
      %937 = vmatprep.subr.bf16.mxu0 0
      %938 = vmatpush1.bf16.msra.mxu0 0
      %939 = vmatprep.subr.bf16.mxu0 0
      %940 = vmatpush1.bf16.msra.mxu0 0
      %941 = vmatprep.subr.bf16.mxu0 0
      %942 = vmatpush1.bf16.msra.mxu0 0
      %943 = vmatprep.subr.bf16.mxu0 0
      %944 = vmatpush1.bf16.msra.mxu0 0
      %945 = vmatprep.subr.bf16.mxu0 0
      %946 = vmatpush1.bf16.msra.mxu0 0
      %947 = vmatprep.subr.bf16.mxu0 0
      %948 = vmatpush1.bf16.msra.mxu0 0
      %949 = vmatprep.subr.bf16.mxu0 0
      %950 = vmatpush1.bf16.msra.mxu0 0
      %951 = vmatprep.subr.bf16.mxu0 0
      %952 = vmatpush1.bf16.msra.mxu0 0
      %953 = vmatprep.subr.bf16.mxu0 0
      %954 = vmatpush1.bf16.msra.mxu0 0
      %955 = vmatprep.subr.bf16.mxu0 0
      %956 = vmatpush1.bf16.msra.mxu0 0
      %957 = vmatprep.mubr.bf16.mxu0 0
      %958 = vmatmul.mubr.bf16.gmra.mrb[0].mxu0 %v899
      %v959 = vpop.f32.mrb[0].mxu0
      %v960 = vadd.f32 0.0, %v959
      %v961 = vpop.f32.mrb[0].mxu0
      %v962 = vpop.f32.mrb[0].mxu0
      %v963 = vadd.f32 0.0, %v962
      %v964 = vpop.f32.mrb[0].mxu0
      %965 = vmatprep.mubr.bf16.mxu0 0
      %966 = vmatmul.mubr.bf16.gmra.mrb[0].mxu0 %v902
      %v967 = vpop.f32.mrb[0].mxu0
      %v968 = vadd.f32 0.0, %v967
      %v969 = vpop.f32.mrb[0].mxu0
      %v970 = vpop.f32.mrb[0].mxu0
      %v971 = vadd.f32 0.0, %v970
      %v972 = vpop.f32.mrb[0].mxu0
      %973 = vmatprep.mubr.bf16.mxu0 0
      %974 = vmatmul.mubr.bf16.gmra.mrb[0].mxu0 %v905
      %v975 = vpop.f32.mrb[0].mxu0
      %v976 = vadd.f32 0.0, %v975
      %v977 = vpop.f32.mrb[0].mxu0
      %v978 = vpop.f32.mrb[0].mxu0
      %v979 = vadd.f32 0.0, %v978
      %v980 = vpop.f32.mrb[0].mxu0
      %981 = vmatprep.mubr.bf16.mxu0 0
      %982 = vmatmul.mubr.bf16.gmra.mrb[0].mxu0 %v908
      %v983 = vpop.f32.mrb[0].mxu0
      %v984 = vadd.f32 0.0, %v983
      %v985 = vpop.f32.mrb[0].mxu0
      %v986 = vpop.f32.mrb[0].mxu0
      %v987 = vadd.f32 0.0, %v986
      %v988 = vpop.f32.mrb[0].mxu0
      %989 = vmatprep.mubr.bf16.mxu0 0
      %990 = vmatmul.mubr.bf16.gmra.mrb[0].mxu0 %v911
      %v991 = vpop.f32.mrb[0].mxu0
      %v992 = vadd.f32 0.0, %v991
      %v993 = vpop.f32.mrb[0].mxu0
      %v994 = vpop.f32.mrb[0].mxu0
      %v995 = vadd.f32 0.0, %v994
      %v996 = vpop.f32.mrb[0].mxu0
      %997 = vmatprep.mubr.bf16.mxu0 0
      %998 = vmatmul.mubr.bf16.gmra.mrb[0].mxu0 %v914
      %v999 = vpop.f32.mrb[0].mxu0
      %v1000 = vadd.f32 0.0, %v999
      %v1001 = vpop.f32.mrb[0].mxu0
      %v1002 = vpop.f32.mrb[0].mxu0
      %v1003 = vadd.f32 0.0, %v1002
      %v1004 = vpop.f32.mrb[0].mxu0
      %1005 = vmatprep.mubr.bf16.mxu0 0
      %1006 = vmatmul.mubr.bf16.gmra.mrb[0].mxu0 %v917
      %v1007 = vpop.f32.mrb[0].mxu0
      %v1008 = vadd.f32 0.0, %v1007
      %v1009 = vpop.f32.mrb[0].mxu0
      %v1010 = vpop.f32.mrb[0].mxu0
      %v1011 = vadd.f32 0.0, %v1010
      %v1012 = vpop.f32.mrb[0].mxu0
      %1013 = vmatprep.mubr.bf16.mxu0 0
      %1014 = vmatmul.mubr.bf16.gmra.mrb[0].mxu0 %v920
      %v1015 = vpop.f32.mrb[0].mxu0
      %v1016 = vadd.f32 0.0, %v1015
      %v1017 = vpop.f32.mrb[0].mxu0
      %v1018 = vpop.f32.mrb[0].mxu0
      %v1019 = vadd.f32 0.0, %v1018
      %v1020 = vpop.f32.mrb[0].mxu0
      %1021 = vdwg.mxu0
      %v1022 = vadd.f32 %v727, %v960
      %v1023 = vadd.f32 %v730, %v963
      %v1024 = vadd.f32 %v735, %v968
      %v1025 = vadd.f32 %v738, %v971
      %v1026 = vadd.f32 %v743, %v976
      %v1027 = vadd.f32 %v746, %v979
      %v1028 = vadd.f32 %v751, %v984
      %v1029 = vadd.f32 %v754, %v987
      %v1030 = vadd.f32 %v759, %v992
      %v1031 = vadd.f32 %v762, %v995
      %v1032 = vadd.f32 %v767, %v1000
      %v1033 = vadd.f32 %v770, %v1003
      %v1034 = vadd.f32 %v775, %v1008
      %v1035 = vadd.f32 %v778, %v1011
      %v1036 = vadd.f32 %v783, %v1016
      %v1037 = vadd.f32 %v786, %v1019
      %s1038 = scalar_lea.vmem %s246, 12
      %v1039 = vld [vmem:[%s1038] sm:$0xf]
      %v1040 = vld [vmem:[%s1038 + $0x4] sm:$0xf]
      %v1041 = vld [vmem:[%s1038 + $0xc] sm:$0xf]
      %v1042 = vld [vmem:[%s1038 + $0x10] sm:$0xf]
      %v1043 = vld [vmem:[%s1038 + $0x18] sm:$0xf]
      %v1044 = vld [vmem:[%s1038 + $0x1c] sm:$0xf]
      %v1045 = vld [vmem:[%s1038 + $0x24] sm:$0xf]
      %v1046 = vld [vmem:[%s1038 + $0x28] sm:$0xf]
      %v1047 = vld [vmem:[%s1038 + $0x30] sm:$0xf]
      %v1048 = vld [vmem:[%s1038 + $0x34] sm:$0xf]
      %v1049 = vld [vmem:[%s1038 + $0x3c] sm:$0xf]
      %v1050 = vld [vmem:[%s1038 + $0x40] sm:$0xf]
      %v1051 = vld [vmem:[%s1038 + $0x48] sm:$0xf]
      %v1052 = vld [vmem:[%s1038 + $0x4c] sm:$0xf]
      %v1053 = vld [vmem:[%s1038 + $0x54] sm:$0xf]
      %v1054 = vld [vmem:[%s1038 + $0x58] sm:$0xf]
      %s1055 = scalar_lea.vmem %s1, 6
      %v1056 = vld [vmem:[%s1055] sm:$0x3]
      %v1073 = vunpack.c.l.b16 %v1039
      %v1074 = vunpack.c.l.b16 %v1040
      %v1075 = vunpack.c.l.b16 %v1041
      %v1076 = vunpack.c.l.b16 %v1042
      %v1077 = vunpack.c.l.b16 %v1043
      %v1078 = vunpack.c.l.b16 %v1044
      %v1079 = vunpack.c.l.b16 %v1045
      %v1080 = vunpack.c.l.b16 %v1046
      %v1081 = vunpack.c.l.b16 %v1047
      %v1082 = vunpack.c.l.b16 %v1048
      %v1083 = vunpack.c.l.b16 %v1049
      %v1084 = vunpack.c.l.b16 %v1050
      %v1085 = vunpack.c.l.b16 %v1051
      %v1086 = vunpack.c.l.b16 %v1052
      %v1087 = vunpack.c.l.b16 %v1053
      %v1088 = vunpack.c.l.b16 %v1054
      %v1089 = vpack.c.b16 %v1074, %v1073
      %v1090 = vpack.c.b16 %v1076, %v1075
      %v1091 = vpack.c.b16 %v1078, %v1077
      %v1092 = vpack.c.b16 %v1080, %v1079
      %v1093 = vpack.c.b16 %v1082, %v1081
      %v1094 = vpack.c.b16 %v1084, %v1083
      %v1095 = vpack.c.b16 %v1086, %v1085
      %v1096 = vpack.c.b16 %v1088, %v1087
      %v1098 = vsel %vm499, %v1089, 0
      %v1101 = vsel %vm499, %v1090, 0
      %v1104 = vsel %vm499, %v1091, 0
      %v1107 = vsel %vm499, %v1092, 0
      %v1110 = vsel %vm499, %v1093, 0
      %v1113 = vsel %vm499, %v1094, 0
      %v1116 = vsel %vm499, %v1095, 0
      %v1119 = vsel %vm499, %v1096, 0
      %v1122 = vsel %vm524, %v1056, 0
      %1124 = vmatprep.subr.bf16.mxu0 0
      %1125 = vmatpush1.bf16.msra.mxu0 %v1122
      %1126 = vmatprep.subr.bf16.mxu0 0
      %1127 = vmatpush1.bf16.msra.mxu0 0
      %1128 = vmatprep.subr.bf16.mxu0 0
      %1129 = vmatpush1.bf16.msra.mxu0 0
      %1130 = vmatprep.subr.bf16.mxu0 0
      %1131 = vmatpush1.bf16.msra.mxu0 0
      %1132 = vmatprep.subr.bf16.mxu0 0
      %1133 = vmatpush1.bf16.msra.mxu0 0
      %1134 = vmatprep.subr.bf16.mxu0 0
      %1135 = vmatpush1.bf16.msra.mxu0 0
      %1136 = vmatprep.subr.bf16.mxu0 0
      %1137 = vmatpush1.bf16.msra.mxu0 0
      %1138 = vmatprep.subr.bf16.mxu0 0
      %1139 = vmatpush1.bf16.msra.mxu0 0
      %1140 = vmatprep.subr.bf16.mxu0 0
      %1141 = vmatpush1.bf16.msra.mxu0 0
      %1142 = vmatprep.subr.bf16.mxu0 0
      %1143 = vmatpush1.bf16.msra.mxu0 0
      %1144 = vmatprep.subr.bf16.mxu0 0
      %1145 = vmatpush1.bf16.msra.mxu0 0
      %1146 = vmatprep.subr.bf16.mxu0 0
      %1147 = vmatpush1.bf16.msra.mxu0 0
      %1148 = vmatprep.subr.bf16.mxu0 0
      %1149 = vmatpush1.bf16.msra.mxu0 0
      %1150 = vmatprep.subr.bf16.mxu0 0
      %1151 = vmatpush1.bf16.msra.mxu0 0
      %1152 = vmatprep.subr.bf16.mxu0 0
      %1153 = vmatpush1.bf16.msra.mxu0 0
      %1154 = vmatprep.subr.bf16.mxu0 0
      %1155 = vmatpush1.bf16.msra.mxu0 0
      %1156 = vmatprep.mubr.bf16.mxu0 0
      %1157 = vmatmul.mubr.bf16.gmra.mrb[0].mxu0 %v1098
      %v1158 = vpop.f32.mrb[0].mxu0
      %v1159 = vadd.f32 0.0, %v1158
      %v1160 = vpop.f32.mrb[0].mxu0
      %v1161 = vpop.f32.mrb[0].mxu0
      %v1162 = vadd.f32 0.0, %v1161
      %v1163 = vpop.f32.mrb[0].mxu0
      %1164 = vmatprep.mubr.bf16.mxu0 0
      %1165 = vmatmul.mubr.bf16.gmra.mrb[0].mxu0 %v1101
      %v1166 = vpop.f32.mrb[0].mxu0
      %v1167 = vadd.f32 0.0, %v1166
      %v1168 = vpop.f32.mrb[0].mxu0
      %v1169 = vpop.f32.mrb[0].mxu0
      %v1170 = vadd.f32 0.0, %v1169
      %v1171 = vpop.f32.mrb[0].mxu0
      %1172 = vmatprep.mubr.bf16.mxu0 0
      %1173 = vmatmul.mubr.bf16.gmra.mrb[0].mxu0 %v1104
      %v1174 = vpop.f32.mrb[0].mxu0
      %v1175 = vadd.f32 0.0, %v1174
      %v1176 = vpop.f32.mrb[0].mxu0
      %v1177 = vpop.f32.mrb[0].mxu0
      %v1178 = vadd.f32 0.0, %v1177
      %v1179 = vpop.f32.mrb[0].mxu0
      %1180 = vmatprep.mubr.bf16.mxu0 0
      %1181 = vmatmul.mubr.bf16.gmra.mrb[0].mxu0 %v1107
      %v1182 = vpop.f32.mrb[0].mxu0
      %v1183 = vadd.f32 0.0, %v1182
      %v1184 = vpop.f32.mrb[0].mxu0
      %v1185 = vpop.f32.mrb[0].mxu0
      %v1186 = vadd.f32 0.0, %v1185
      %v1187 = vpop.f32.mrb[0].mxu0
      %1188 = vmatprep.mubr.bf16.mxu0 0
      %1189 = vmatmul.mubr.bf16.gmra.mrb[0].mxu0 %v1110
      %v1190 = vpop.f32.mrb[0].mxu0
      %v1191 = vadd.f32 0.0, %v1190
      %v1192 = vpop.f32.mrb[0].mxu0
      %v1193 = vpop.f32.mrb[0].mxu0
      %v1194 = vadd.f32 0.0, %v1193
      %v1195 = vpop.f32.mrb[0].mxu0
      %1196 = vmatprep.mubr.bf16.mxu0 0
      %1197 = vmatmul.mubr.bf16.gmra.mrb[0].mxu0 %v1113
      %v1198 = vpop.f32.mrb[0].mxu0
      %v1199 = vadd.f32 0.0, %v1198
      %v1200 = vpop.f32.mrb[0].mxu0
      %v1201 = vpop.f32.mrb[0].mxu0
      %v1202 = vadd.f32 0.0, %v1201
      %v1203 = vpop.f32.mrb[0].mxu0
      %1204 = vmatprep.mubr.bf16.mxu0 0
      %1205 = vmatmul.mubr.bf16.gmra.mrb[0].mxu0 %v1116
      %v1206 = vpop.f32.mrb[0].mxu0
      %v1207 = vadd.f32 0.0, %v1206
      %v1208 = vpop.f32.mrb[0].mxu0
      %v1209 = vpop.f32.mrb[0].mxu0
      %v1210 = vadd.f32 0.0, %v1209
      %v1211 = vpop.f32.mrb[0].mxu0
      %1212 = vmatprep.mubr.bf16.mxu0 0
      %1213 = vmatmul.mubr.bf16.gmra.mrb[0].mxu0 %v1119
      %v1214 = vpop.f32.mrb[0].mxu0
      %v1215 = vadd.f32 0.0, %v1214
      %v1216 = vpop.f32.mrb[0].mxu0
      %v1217 = vpop.f32.mrb[0].mxu0
      %v1218 = vadd.f32 0.0, %v1217
      %v1219 = vpop.f32.mrb[0].mxu0
      %1220 = vdwg.mxu0
      %v1221 = vadd.f32 %v1022, %v1159
      %v1222 = vadd.f32 %v1023, %v1162
      %v1223 = vadd.f32 %v1024, %v1167
      %v1224 = vadd.f32 %v1025, %v1170
      %v1225 = vadd.f32 %v1026, %v1175
      %v1226 = vadd.f32 %v1027, %v1178
      %v1227 = vadd.f32 %v1028, %v1183
      %v1228 = vadd.f32 %v1029, %v1186
      %v1229 = vadd.f32 %v1030, %v1191
      %v1230 = vadd.f32 %v1031, %v1194
      %v1231 = vadd.f32 %v1032, %v1199
      %v1232 = vadd.f32 %v1033, %v1202
      %v1233 = vadd.f32 %v1034, %v1207
      %v1234 = vadd.f32 %v1035, %v1210
      %v1235 = vadd.f32 %v1036, %v1215
      %v1236 = vadd.f32 %v1037, %v1218
      %v1237 = vld [vmem:[%s1038] sm:$0xf]
      %v1238 = vld [vmem:[%s1038 + $0x4] sm:$0xf]
      %v1239 = vld [vmem:[%s1038 + $0x8] sm:$0x1]
      %v1240 = vld [vmem:[%s1038 + $0xc] sm:$0xf]
      %v1241 = vld [vmem:[%s1038 + $0x10] sm:$0xf]
      %v1242 = vld [vmem:[%s1038 + $0x14] sm:$0x1]
      %v1243 = vld [vmem:[%s1038 + $0x18] sm:$0xf]
      %v1244 = vld [vmem:[%s1038 + $0x1c] sm:$0xf]
      %v1245 = vld [vmem:[%s1038 + $0x20] sm:$0x1]
      %v1246 = vld [vmem:[%s1038 + $0x24] sm:$0xf]
      %v1247 = vld [vmem:[%s1038 + $0x28] sm:$0xf]
      %v1248 = vld [vmem:[%s1038 + $0x2c] sm:$0x1]
      %v1249 = vld [vmem:[%s1038 + $0x30] sm:$0xf]
      %v1250 = vld [vmem:[%s1038 + $0x34] sm:$0xf]
      %v1251 = vld [vmem:[%s1038 + $0x38] sm:$0x1]
      %v1252 = vld [vmem:[%s1038 + $0x3c] sm:$0xf]
      %v1253 = vld [vmem:[%s1038 + $0x40] sm:$0xf]
      %v1254 = vld [vmem:[%s1038 + $0x44] sm:$0x1]
      %v1255 = vld [vmem:[%s1038 + $0x48] sm:$0xf]
      %v1256 = vld [vmem:[%s1038 + $0x4c] sm:$0xf]
      %v1257 = vld [vmem:[%s1038 + $0x50] sm:$0x1]
      %v1258 = vld [vmem:[%s1038 + $0x54] sm:$0xf]
      %v1259 = vld [vmem:[%s1038 + $0x58] sm:$0xf]
      %v1260 = vld [vmem:[%s1038 + $0x5c] sm:$0x1]
      %v1262 = vshrl.u32 %v1237, 16
      %v1264 = vrot.slane %v1262, 4
      %v1265 = vshll.u32 %v1237, 16
      %v1267 = vrot.slane %v1265, 5
      %v1268 = vor.u32 %v1264, %v1267
      %v1269 = vrot.slane %v1268, 4
      %v1271 = vshll.u32 %v1238, 16
      %v1273 = vrot.slane %v1271, 5
      %v1274 = vsel %vm280, %v1269, %v1273
      %v1275 = vshrl.u32 %v1238, 16
      %v1277 = vrot.slane %v1275, 4
      %v1278 = vor.u32 %v1277, %v1273
      %v1279 = vrot.slane %v1278, 4
      %v1281 = vshll.u32 %v1239, 16
      %v1283 = vrot.slane %v1281, 5
      %v1284 = vsel %vm280, %v1279, %v1283
      %v1286 = vshrl.u32 %v1240, 16
      %v1288 = vrot.slane %v1286, 4
      %v1289 = vshll.u32 %v1240, 16
      %v1291 = vrot.slane %v1289, 5
      %v1292 = vor.u32 %v1288, %v1291
      %v1293 = vrot.slane %v1292, 4
      %v1295 = vshll.u32 %v1241, 16
      %v1297 = vrot.slane %v1295, 5
      %v1298 = vsel %vm280, %v1293, %v1297
      %v1299 = vshrl.u32 %v1241, 16
      %v1301 = vrot.slane %v1299, 4
      %v1302 = vor.u32 %v1301, %v1297
      %v1303 = vrot.slane %v1302, 4
      %v1305 = vshll.u32 %v1242, 16
      %v1307 = vrot.slane %v1305, 5
      %v1308 = vsel %vm280, %v1303, %v1307
      %v1310 = vshrl.u32 %v1243, 16
      %v1312 = vrot.slane %v1310, 4
      %v1313 = vshll.u32 %v1243, 16
      %v1315 = vrot.slane %v1313, 5
      %v1316 = vor.u32 %v1312, %v1315
      %v1317 = vrot.slane %v1316, 4
      %v1319 = vshll.u32 %v1244, 16
      %v1321 = vrot.slane %v1319, 5
      %v1322 = vsel %vm280, %v1317, %v1321
      %v1323 = vshrl.u32 %v1244, 16
      %v1325 = vrot.slane %v1323, 4
      %v1326 = vor.u32 %v1325, %v1321
      %v1327 = vrot.slane %v1326, 4
      %v1329 = vshll.u32 %v1245, 16
      %v1331 = vrot.slane %v1329, 5
      %v1332 = vsel %vm280, %v1327, %v1331
      %v1334 = vshrl.u32 %v1246, 16
      %v1336 = vrot.slane %v1334, 4
      %v1337 = vshll.u32 %v1246, 16
      %v1339 = vrot.slane %v1337, 5
      %v1340 = vor.u32 %v1336, %v1339
      %v1341 = vrot.slane %v1340, 4
      %v1343 = vshll.u32 %v1247, 16
      %v1345 = vrot.slane %v1343, 5
      %v1346 = vsel %vm280, %v1341, %v1345
      %v1347 = vshrl.u32 %v1247, 16
      %v1349 = vrot.slane %v1347, 4
      %v1350 = vor.u32 %v1349, %v1345
      %v1351 = vrot.slane %v1350, 4
      %v1353 = vshll.u32 %v1248, 16
      %v1355 = vrot.slane %v1353, 5
      %v1356 = vsel %vm280, %v1351, %v1355
      %v1358 = vshrl.u32 %v1249, 16
      %v1360 = vrot.slane %v1358, 4
      %v1361 = vshll.u32 %v1249, 16
      %v1363 = vrot.slane %v1361, 5
      %v1364 = vor.u32 %v1360, %v1363
      %v1365 = vrot.slane %v1364, 4
      %v1367 = vshll.u32 %v1250, 16
      %v1369 = vrot.slane %v1367, 5
      %v1370 = vsel %vm280, %v1365, %v1369
      %v1371 = vshrl.u32 %v1250, 16
      %v1373 = vrot.slane %v1371, 4
      %v1374 = vor.u32 %v1373, %v1369
      %v1375 = vrot.slane %v1374, 4
      %v1377 = vshll.u32 %v1251, 16
      %v1379 = vrot.slane %v1377, 5
      %v1380 = vsel %vm280, %v1375, %v1379
      %v1382 = vshrl.u32 %v1252, 16
      %v1384 = vrot.slane %v1382, 4
      %v1385 = vshll.u32 %v1252, 16
      %v1387 = vrot.slane %v1385, 5
      %v1388 = vor.u32 %v1384, %v1387
      %v1389 = vrot.slane %v1388, 4
      %v1391 = vshll.u32 %v1253, 16
      %v1393 = vrot.slane %v1391, 5
      %v1394 = vsel %vm280, %v1389, %v1393
      %v1395 = vshrl.u32 %v1253, 16
      %v1397 = vrot.slane %v1395, 4
      %v1398 = vor.u32 %v1397, %v1393
      %v1399 = vrot.slane %v1398, 4
      %v1401 = vshll.u32 %v1254, 16
      %v1403 = vrot.slane %v1401, 5
      %v1404 = vsel %vm280, %v1399, %v1403
      %v1406 = vshrl.u32 %v1255, 16
      %v1408 = vrot.slane %v1406, 4
      %v1409 = vshll.u32 %v1255, 16
      %v1411 = vrot.slane %v1409, 5
      %v1412 = vor.u32 %v1408, %v1411
      %v1413 = vrot.slane %v1412, 4
      %v1415 = vshll.u32 %v1256, 16
      %v1417 = vrot.slane %v1415, 5
      %v1418 = vsel %vm280, %v1413, %v1417
      %v1419 = vshrl.u32 %v1256, 16
      %v1421 = vrot.slane %v1419, 4
      %v1422 = vor.u32 %v1421, %v1417
      %v1423 = vrot.slane %v1422, 4
      %v1425 = vshll.u32 %v1257, 16
      %v1427 = vrot.slane %v1425, 5
      %v1428 = vsel %vm280, %v1423, %v1427
      %v1430 = vshrl.u32 %v1258, 16
      %v1432 = vrot.slane %v1430, 4
      %v1433 = vshll.u32 %v1258, 16
      %v1435 = vrot.slane %v1433, 5
      %v1436 = vor.u32 %v1432, %v1435
      %v1437 = vrot.slane %v1436, 4
      %v1439 = vshll.u32 %v1259, 16
      %v1441 = vrot.slane %v1439, 5
      %v1442 = vsel %vm280, %v1437, %v1441
      %v1443 = vshrl.u32 %v1259, 16
      %v1445 = vrot.slane %v1443, 4
      %v1446 = vor.u32 %v1445, %v1441
      %v1447 = vrot.slane %v1446, 4
      %v1449 = vshll.u32 %v1260, 16
      %v1451 = vrot.slane %v1449, 5
      %v1452 = vsel %vm280, %v1447, %v1451
      %s1453 = scalar_lea.vmem %s1, 8
      %v1454 = vld [vmem:[%s1453] sm:$0x3]
      %v1455 = vunpack.c.l.b16 %v1274
      %v1456 = vunpack.c.l.b16 %v1284
      %v1457 = vunpack.c.l.b16 %v1298
      %v1458 = vunpack.c.l.b16 %v1308
      %v1459 = vunpack.c.l.b16 %v1322
      %v1460 = vunpack.c.l.b16 %v1332
      %v1461 = vunpack.c.l.b16 %v1346
      %v1462 = vunpack.c.l.b16 %v1356
      %v1463 = vunpack.c.l.b16 %v1370
      %v1464 = vunpack.c.l.b16 %v1380
      %v1465 = vunpack.c.l.b16 %v1394
      %v1466 = vunpack.c.l.b16 %v1404
      %v1467 = vunpack.c.l.b16 %v1418
      %v1468 = vunpack.c.l.b16 %v1428
      %v1469 = vunpack.c.l.b16 %v1442
      %v1470 = vunpack.c.l.b16 %v1452
      %v1471 = vpack.c.b16 %v1456, %v1455
      %v1472 = vpack.c.b16 %v1458, %v1457
      %v1473 = vpack.c.b16 %v1460, %v1459
      %v1474 = vpack.c.b16 %v1462, %v1461
      %v1475 = vpack.c.b16 %v1464, %v1463
      %v1476 = vpack.c.b16 %v1466, %v1465
      %v1477 = vpack.c.b16 %v1468, %v1467
      %v1478 = vpack.c.b16 %v1470, %v1469
      %v1480 = vsel %vm499, %v1471, 0
      %v1483 = vsel %vm499, %v1472, 0
      %v1486 = vsel %vm499, %v1473, 0
      %v1489 = vsel %vm499, %v1474, 0
      %v1492 = vsel %vm499, %v1475, 0
      %v1495 = vsel %vm499, %v1476, 0
      %v1498 = vsel %vm499, %v1477, 0
      %v1501 = vsel %vm499, %v1478, 0
      %v1504 = vsel %vm524, %v1454, 0
      %1506 = vmatprep.subr.bf16.mxu0 0
      %1507 = vmatpush1.bf16.msra.mxu0 %v1504
      %1508 = vmatprep.subr.bf16.mxu0 0
      %1509 = vmatpush1.bf16.msra.mxu0 0
      %1510 = vmatprep.subr.bf16.mxu0 0
      %1511 = vmatpush1.bf16.msra.mxu0 0
      %1512 = vmatprep.subr.bf16.mxu0 0
      %1513 = vmatpush1.bf16.msra.mxu0 0
      %1514 = vmatprep.subr.bf16.mxu0 0
      %1515 = vmatpush1.bf16.msra.mxu0 0
      %1516 = vmatprep.subr.bf16.mxu0 0
      %1517 = vmatpush1.bf16.msra.mxu0 0
      %1518 = vmatprep.subr.bf16.mxu0 0
      %1519 = vmatpush1.bf16.msra.mxu0 0
      %1520 = vmatprep.subr.bf16.mxu0 0
      %1521 = vmatpush1.bf16.msra.mxu0 0
      %1522 = vmatprep.subr.bf16.mxu0 0
      %1523 = vmatpush1.bf16.msra.mxu0 0
      %1524 = vmatprep.subr.bf16.mxu0 0
      %1525 = vmatpush1.bf16.msra.mxu0 0
      %1526 = vmatprep.subr.bf16.mxu0 0
      %1527 = vmatpush1.bf16.msra.mxu0 0
      %1528 = vmatprep.subr.bf16.mxu0 0
      %1529 = vmatpush1.bf16.msra.mxu0 0
      %1530 = vmatprep.subr.bf16.mxu0 0
      %1531 = vmatpush1.bf16.msra.mxu0 0
      %1532 = vmatprep.subr.bf16.mxu0 0
      %1533 = vmatpush1.bf16.msra.mxu0 0
      %1534 = vmatprep.subr.bf16.mxu0 0
      %1535 = vmatpush1.bf16.msra.mxu0 0
      %1536 = vmatprep.subr.bf16.mxu0 0
      %1537 = vmatpush1.bf16.msra.mxu0 0
      %1538 = vmatprep.mubr.bf16.mxu0 0
      %1539 = vmatmul.mubr.bf16.gmra.mrb[0].mxu0 %v1480
      %v1540 = vpop.f32.mrb[0].mxu0
      %v1541 = vadd.f32 0.0, %v1540
      %v1542 = vpop.f32.mrb[0].mxu0
      %v1543 = vpop.f32.mrb[0].mxu0
      %v1544 = vadd.f32 0.0, %v1543
      %v1545 = vpop.f32.mrb[0].mxu0
      %1546 = vmatprep.mubr.bf16.mxu0 0
      %1547 = vmatmul.mubr.bf16.gmra.mrb[0].mxu0 %v1483
      %v1548 = vpop.f32.mrb[0].mxu0
      %v1549 = vadd.f32 0.0, %v1548
      %v1550 = vpop.f32.mrb[0].mxu0
      %v1551 = vpop.f32.mrb[0].mxu0
      %v1552 = vadd.f32 0.0, %v1551
      %v1553 = vpop.f32.mrb[0].mxu0
      %1554 = vmatprep.mubr.bf16.mxu0 0
      %1555 = vmatmul.mubr.bf16.gmra.mrb[0].mxu0 %v1486
      %v1556 = vpop.f32.mrb[0].mxu0
      %v1557 = vadd.f32 0.0, %v1556
      %v1558 = vpop.f32.mrb[0].mxu0
      %v1559 = vpop.f32.mrb[0].mxu0
      %v1560 = vadd.f32 0.0, %v1559
      %v1561 = vpop.f32.mrb[0].mxu0
      %1562 = vmatprep.mubr.bf16.mxu0 0
      %1563 = vmatmul.mubr.bf16.gmra.mrb[0].mxu0 %v1489
      %v1564 = vpop.f32.mrb[0].mxu0
      %v1565 = vadd.f32 0.0, %v1564
      %v1566 = vpop.f32.mrb[0].mxu0
      %v1567 = vpop.f32.mrb[0].mxu0
      %v1568 = vadd.f32 0.0, %v1567
      %v1569 = vpop.f32.mrb[0].mxu0
      %1570 = vmatprep.mubr.bf16.mxu0 0
      %1571 = vmatmul.mubr.bf16.gmra.mrb[0].mxu0 %v1492
      %v1572 = vpop.f32.mrb[0].mxu0
      %v1573 = vadd.f32 0.0, %v1572
      %v1574 = vpop.f32.mrb[0].mxu0
      %v1575 = vpop.f32.mrb[0].mxu0
      %v1576 = vadd.f32 0.0, %v1575
      %v1577 = vpop.f32.mrb[0].mxu0
      %1578 = vmatprep.mubr.bf16.mxu0 0
      %1579 = vmatmul.mubr.bf16.gmra.mrb[0].mxu0 %v1495
      %v1580 = vpop.f32.mrb[0].mxu0
      %v1581 = vadd.f32 0.0, %v1580
      %v1582 = vpop.f32.mrb[0].mxu0
      %v1583 = vpop.f32.mrb[0].mxu0
      %v1584 = vadd.f32 0.0, %v1583
      %v1585 = vpop.f32.mrb[0].mxu0
      %1586 = vmatprep.mubr.bf16.mxu0 0
      %1587 = vmatmul.mubr.bf16.gmra.mrb[0].mxu0 %v1498
      %v1588 = vpop.f32.mrb[0].mxu0
      %v1589 = vadd.f32 0.0, %v1588
      %v1590 = vpop.f32.mrb[0].mxu0
      %v1591 = vpop.f32.mrb[0].mxu0
      %v1592 = vadd.f32 0.0, %v1591
      %v1593 = vpop.f32.mrb[0].mxu0
      %1594 = vmatprep.mubr.bf16.mxu0 0
      %1595 = vmatmul.mubr.bf16.gmra.mrb[0].mxu0 %v1501
      %v1596 = vpop.f32.mrb[0].mxu0
      %v1597 = vadd.f32 0.0, %v1596
      %v1598 = vpop.f32.mrb[0].mxu0
      %v1599 = vpop.f32.mrb[0].mxu0
      %v1600 = vadd.f32 0.0, %v1599
      %v1601 = vpop.f32.mrb[0].mxu0
      %1602 = vdwg.mxu0
      %v1603 = vadd.f32 %v1221, %v1541
      %v1604 = vadd.f32 %v1222, %v1544
      %v1605 = vadd.f32 %v1223, %v1549
      %v1606 = vadd.f32 %v1224, %v1552
      %v1607 = vadd.f32 %v1225, %v1557
      %v1608 = vadd.f32 %v1226, %v1560
      %v1609 = vadd.f32 %v1227, %v1565
      %v1610 = vadd.f32 %v1228, %v1568
      %v1611 = vadd.f32 %v1229, %v1573
      %v1612 = vadd.f32 %v1230, %v1576
      %v1613 = vadd.f32 %v1231, %v1581
      %v1614 = vadd.f32 %v1232, %v1584
      %v1615 = vadd.f32 %v1233, %v1589
      %v1616 = vadd.f32 %v1234, %v1592
      %v1617 = vadd.f32 %v1235, %v1597
      %v1618 = vadd.f32 %v1236, %v1600
      %v1619 = vld [vmem:[%s1038] sm:$0xe]
      %v1620 = vld [vmem:[%s1038 + $0xc] sm:$0xe]
      %v1621 = vld [vmem:[%s1038 + $0x18] sm:$0xe]
      %v1622 = vld [vmem:[%s1038 + $0x24] sm:$0xe]
      %v1623 = vld [vmem:[%s1038 + $0x30] sm:$0xe]
      %v1624 = vld [vmem:[%s1038 + $0x3c] sm:$0xe]
      %v1625 = vld [vmem:[%s1038 + $0x48] sm:$0xe]
      %v1626 = vld [vmem:[%s1038 + $0x54] sm:$0xe]
      %v1651 = vrot.slane %v1619, 5
      %v1652 = vrot.slane %v1651, 4
      %v1653 = vrot.slane %v1238, 5
      %v1654 = vsel %vm815, %v1652, %v1653
      %v1655 = vrot.slane %v1653, 4
      %v1656 = vrot.slane %v1239, 5
      %v1657 = vsel %vm815, %v1655, %v1656
      %v1658 = vrot.slane %v1620, 5
      %v1659 = vrot.slane %v1658, 4
      %v1660 = vrot.slane %v1241, 5
      %v1661 = vsel %vm815, %v1659, %v1660
      %v1662 = vrot.slane %v1660, 4
      %v1663 = vrot.slane %v1242, 5
      %v1664 = vsel %vm815, %v1662, %v1663
      %v1665 = vrot.slane %v1621, 5
      %v1666 = vrot.slane %v1665, 4
      %v1667 = vrot.slane %v1244, 5
      %v1668 = vsel %vm815, %v1666, %v1667
      %v1669 = vrot.slane %v1667, 4
      %v1670 = vrot.slane %v1245, 5
      %v1671 = vsel %vm815, %v1669, %v1670
      %v1672 = vrot.slane %v1622, 5
      %v1673 = vrot.slane %v1672, 4
      %v1674 = vrot.slane %v1247, 5
      %v1675 = vsel %vm815, %v1673, %v1674
      %v1676 = vrot.slane %v1674, 4
      %v1677 = vrot.slane %v1248, 5
      %v1678 = vsel %vm815, %v1676, %v1677
      %v1679 = vrot.slane %v1623, 5
      %v1680 = vrot.slane %v1679, 4
      %v1681 = vrot.slane %v1250, 5
      %v1682 = vsel %vm815, %v1680, %v1681
      %v1683 = vrot.slane %v1681, 4
      %v1684 = vrot.slane %v1251, 5
      %v1685 = vsel %vm815, %v1683, %v1684
      %v1686 = vrot.slane %v1624, 5
      %v1687 = vrot.slane %v1686, 4
      %v1688 = vrot.slane %v1253, 5
      %v1689 = vsel %vm815, %v1687, %v1688
      %v1690 = vrot.slane %v1688, 4
      %v1691 = vrot.slane %v1254, 5
      %v1692 = vsel %vm815, %v1690, %v1691
      %v1693 = vrot.slane %v1625, 5
      %v1694 = vrot.slane %v1693, 4
      %v1695 = vrot.slane %v1256, 5
      %v1696 = vsel %vm815, %v1694, %v1695
      %v1697 = vrot.slane %v1695, 4
      %v1698 = vrot.slane %v1257, 5
      %v1699 = vsel %vm815, %v1697, %v1698
      %v1700 = vrot.slane %v1626, 5
      %v1701 = vrot.slane %v1700, 4
      %v1702 = vrot.slane %v1259, 5
      %v1703 = vsel %vm815, %v1701, %v1702
      %v1704 = vrot.slane %v1702, 4
      %v1705 = vrot.slane %v1260, 5
      %v1706 = vsel %vm815, %v1704, %v1705
      %s1707 = scalar_lea.vmem %s1, 10
      %v1708 = vld [vmem:[%s1707] sm:$0x3]
      %v1709 = vunpack.c.l.b16 %v1654
      %v1710 = vunpack.c.l.b16 %v1657
      %v1711 = vunpack.c.l.b16 %v1661
      %v1712 = vunpack.c.l.b16 %v1664
      %v1713 = vunpack.c.l.b16 %v1668
      %v1714 = vunpack.c.l.b16 %v1671
      %v1715 = vunpack.c.l.b16 %v1675
      %v1716 = vunpack.c.l.b16 %v1678
      %v1717 = vunpack.c.l.b16 %v1682
      %v1718 = vunpack.c.l.b16 %v1685
      %v1719 = vunpack.c.l.b16 %v1689
      %v1720 = vunpack.c.l.b16 %v1692
      %v1721 = vunpack.c.l.b16 %v1696
      %v1722 = vunpack.c.l.b16 %v1699
      %v1723 = vunpack.c.l.b16 %v1703
      %v1724 = vunpack.c.l.b16 %v1706
      %v1725 = vpack.c.b16 %v1710, %v1709
      %v1726 = vpack.c.b16 %v1712, %v1711
      %v1727 = vpack.c.b16 %v1714, %v1713
      %v1728 = vpack.c.b16 %v1716, %v1715
      %v1729 = vpack.c.b16 %v1718, %v1717
      %v1730 = vpack.c.b16 %v1720, %v1719
      %v1731 = vpack.c.b16 %v1722, %v1721
      %v1732 = vpack.c.b16 %v1724, %v1723
      %v1734 = vsel %vm499, %v1725, 0
      %v1737 = vsel %vm499, %v1726, 0
      %v1740 = vsel %vm499, %v1727, 0
      %v1743 = vsel %vm499, %v1728, 0
      %v1746 = vsel %vm499, %v1729, 0
      %v1749 = vsel %vm499, %v1730, 0
      %v1752 = vsel %vm499, %v1731, 0
      %v1755 = vsel %vm499, %v1732, 0
      %v1758 = vsel %vm524, %v1708, 0
      %1760 = vmatprep.subr.bf16.mxu0 0
      %1761 = vmatpush1.bf16.msra.mxu0 %v1758
      %1762 = vmatprep.subr.bf16.mxu0 0
      %1763 = vmatpush1.bf16.msra.mxu0 0
      %1764 = vmatprep.subr.bf16.mxu0 0
      %1765 = vmatpush1.bf16.msra.mxu0 0
      %1766 = vmatprep.subr.bf16.mxu0 0
      %1767 = vmatpush1.bf16.msra.mxu0 0
      %1768 = vmatprep.subr.bf16.mxu0 0
      %1769 = vmatpush1.bf16.msra.mxu0 0
      %1770 = vmatprep.subr.bf16.mxu0 0
      %1771 = vmatpush1.bf16.msra.mxu0 0
      %1772 = vmatprep.subr.bf16.mxu0 0
      %1773 = vmatpush1.bf16.msra.mxu0 0
      %1774 = vmatprep.subr.bf16.mxu0 0
      %1775 = vmatpush1.bf16.msra.mxu0 0
      %1776 = vmatprep.subr.bf16.mxu0 0
      %1777 = vmatpush1.bf16.msra.mxu0 0
      %1778 = vmatprep.subr.bf16.mxu0 0
      %1779 = vmatpush1.bf16.msra.mxu0 0
      %1780 = vmatprep.subr.bf16.mxu0 0
      %1781 = vmatpush1.bf16.msra.mxu0 0
      %1782 = vmatprep.subr.bf16.mxu0 0
      %1783 = vmatpush1.bf16.msra.mxu0 0
      %1784 = vmatprep.subr.bf16.mxu0 0
      %1785 = vmatpush1.bf16.msra.mxu0 0
      %1786 = vmatprep.subr.bf16.mxu0 0
      %1787 = vmatpush1.bf16.msra.mxu0 0
      %1788 = vmatprep.subr.bf16.mxu0 0
      %1789 = vmatpush1.bf16.msra.mxu0 0
      %1790 = vmatprep.subr.bf16.mxu0 0
      %1791 = vmatpush1.bf16.msra.mxu0 0
      %1792 = vmatprep.mubr.bf16.mxu0 0
      %1793 = vmatmul.mubr.bf16.gmra.mrb[0].mxu0 %v1734
      %v1794 = vpop.f32.mrb[0].mxu0
      %v1795 = vadd.f32 0.0, %v1794
      %v1796 = vpop.f32.mrb[0].mxu0
      %v1797 = vpop.f32.mrb[0].mxu0
      %v1798 = vadd.f32 0.0, %v1797
      %v1799 = vpop.f32.mrb[0].mxu0
      %1800 = vmatprep.mubr.bf16.mxu0 0
      %1801 = vmatmul.mubr.bf16.gmra.mrb[0].mxu0 %v1737
      %v1802 = vpop.f32.mrb[0].mxu0
      %v1803 = vadd.f32 0.0, %v1802
      %v1804 = vpop.f32.mrb[0].mxu0
      %v1805 = vpop.f32.mrb[0].mxu0
      %v1806 = vadd.f32 0.0, %v1805
      %v1807 = vpop.f32.mrb[0].mxu0
      %1808 = vmatprep.mubr.bf16.mxu0 0
      %1809 = vmatmul.mubr.bf16.gmra.mrb[0].mxu0 %v1740
      %v1810 = vpop.f32.mrb[0].mxu0
      %v1811 = vadd.f32 0.0, %v1810
      %v1812 = vpop.f32.mrb[0].mxu0
      %v1813 = vpop.f32.mrb[0].mxu0
      %v1814 = vadd.f32 0.0, %v1813
      %v1815 = vpop.f32.mrb[0].mxu0
      %1816 = vmatprep.mubr.bf16.mxu0 0
      %1817 = vmatmul.mubr.bf16.gmra.mrb[0].mxu0 %v1743
      %v1818 = vpop.f32.mrb[0].mxu0
      %v1819 = vadd.f32 0.0, %v1818
      %v1820 = vpop.f32.mrb[0].mxu0
      %v1821 = vpop.f32.mrb[0].mxu0
      %v1822 = vadd.f32 0.0, %v1821
      %v1823 = vpop.f32.mrb[0].mxu0
      %1824 = vmatprep.mubr.bf16.mxu0 0
      %1825 = vmatmul.mubr.bf16.gmra.mrb[0].mxu0 %v1746
      %v1826 = vpop.f32.mrb[0].mxu0
      %v1827 = vadd.f32 0.0, %v1826
      %v1828 = vpop.f32.mrb[0].mxu0
      %v1829 = vpop.f32.mrb[0].mxu0
      %v1830 = vadd.f32 0.0, %v1829
      %v1831 = vpop.f32.mrb[0].mxu0
      %1832 = vmatprep.mubr.bf16.mxu0 0
      %1833 = vmatmul.mubr.bf16.gmra.mrb[0].mxu0 %v1749
      %v1834 = vpop.f32.mrb[0].mxu0
      %v1835 = vadd.f32 0.0, %v1834
      %v1836 = vpop.f32.mrb[0].mxu0
      %v1837 = vpop.f32.mrb[0].mxu0
      %v1838 = vadd.f32 0.0, %v1837
      %v1839 = vpop.f32.mrb[0].mxu0
      %1840 = vmatprep.mubr.bf16.mxu0 0
      %1841 = vmatmul.mubr.bf16.gmra.mrb[0].mxu0 %v1752
      %v1842 = vpop.f32.mrb[0].mxu0
      %v1843 = vadd.f32 0.0, %v1842
      %v1844 = vpop.f32.mrb[0].mxu0
      %v1845 = vpop.f32.mrb[0].mxu0
      %v1846 = vadd.f32 0.0, %v1845
      %v1847 = vpop.f32.mrb[0].mxu0
      %1848 = vmatprep.mubr.bf16.mxu0 0
      %1849 = vmatmul.mubr.bf16.gmra.mrb[0].mxu0 %v1755
      %v1850 = vpop.f32.mrb[0].mxu0
      %v1851 = vadd.f32 0.0, %v1850
      %v1852 = vpop.f32.mrb[0].mxu0
      %v1853 = vpop.f32.mrb[0].mxu0
      %v1854 = vadd.f32 0.0, %v1853
      %v1855 = vpop.f32.mrb[0].mxu0
      %1856 = vdwg.mxu0
      %v1857 = vadd.f32 %v1603, %v1795
      %v1858 = vadd.f32 %v1604, %v1798
      %v1859 = vadd.f32 %v1605, %v1803
      %v1860 = vadd.f32 %v1606, %v1806
      %v1861 = vadd.f32 %v1607, %v1811
      %v1862 = vadd.f32 %v1608, %v1814
      %v1863 = vadd.f32 %v1609, %v1819
      %v1864 = vadd.f32 %v1610, %v1822
      %v1865 = vadd.f32 %v1611, %v1827
      %v1866 = vadd.f32 %v1612, %v1830
      %v1867 = vadd.f32 %v1613, %v1835
      %v1868 = vadd.f32 %v1614, %v1838
      %v1869 = vadd.f32 %v1615, %v1843
      %v1870 = vadd.f32 %v1616, %v1846
      %v1871 = vadd.f32 %v1617, %v1851
      %v1872 = vadd.f32 %v1618, %v1854
      %s1873 = scalar_lea.vmem %s246, 24
      %v1874 = vld [vmem:[%s1873] sm:$0xf]
      %v1875 = vld [vmem:[%s1873 + $0x4] sm:$0xf]
      %v1876 = vld [vmem:[%s1873 + $0xc] sm:$0xf]
      %v1877 = vld [vmem:[%s1873 + $0x10] sm:$0xf]
      %v1878 = vld [vmem:[%s1873 + $0x18] sm:$0xf]
      %v1879 = vld [vmem:[%s1873 + $0x1c] sm:$0xf]
      %v1880 = vld [vmem:[%s1873 + $0x24] sm:$0xf]
      %v1881 = vld [vmem:[%s1873 + $0x28] sm:$0xf]
      %v1882 = vld [vmem:[%s1873 + $0x30] sm:$0xf]
      %v1883 = vld [vmem:[%s1873 + $0x34] sm:$0xf]
      %v1884 = vld [vmem:[%s1873 + $0x3c] sm:$0xf]
      %v1885 = vld [vmem:[%s1873 + $0x40] sm:$0xf]
      %v1886 = vld [vmem:[%s1873 + $0x48] sm:$0xf]
      %v1887 = vld [vmem:[%s1873 + $0x4c] sm:$0xf]
      %v1888 = vld [vmem:[%s1873 + $0x54] sm:$0xf]
      %v1889 = vld [vmem:[%s1873 + $0x58] sm:$0xf]
      %s1890 = scalar_lea.vmem %s1, 12
      %v1891 = vld [vmem:[%s1890] sm:$0x3]
      %v1908 = vunpack.c.l.b16 %v1874
      %v1909 = vunpack.c.l.b16 %v1875
      %v1910 = vunpack.c.l.b16 %v1876
      %v1911 = vunpack.c.l.b16 %v1877
      %v1912 = vunpack.c.l.b16 %v1878
      %v1913 = vunpack.c.l.b16 %v1879
      %v1914 = vunpack.c.l.b16 %v1880
      %v1915 = vunpack.c.l.b16 %v1881
      %v1916 = vunpack.c.l.b16 %v1882
      %v1917 = vunpack.c.l.b16 %v1883
      %v1918 = vunpack.c.l.b16 %v1884
      %v1919 = vunpack.c.l.b16 %v1885
      %v1920 = vunpack.c.l.b16 %v1886
      %v1921 = vunpack.c.l.b16 %v1887
      %v1922 = vunpack.c.l.b16 %v1888
      %v1923 = vunpack.c.l.b16 %v1889
      %v1924 = vpack.c.b16 %v1909, %v1908
      %v1925 = vpack.c.b16 %v1911, %v1910
      %v1926 = vpack.c.b16 %v1913, %v1912
      %v1927 = vpack.c.b16 %v1915, %v1914
      %v1928 = vpack.c.b16 %v1917, %v1916
      %v1929 = vpack.c.b16 %v1919, %v1918
      %v1930 = vpack.c.b16 %v1921, %v1920
      %v1931 = vpack.c.b16 %v1923, %v1922
      %v1933 = vsel %vm499, %v1924, 0
      %v1936 = vsel %vm499, %v1925, 0
      %v1939 = vsel %vm499, %v1926, 0
      %v1942 = vsel %vm499, %v1927, 0
      %v1945 = vsel %vm499, %v1928, 0
      %v1948 = vsel %vm499, %v1929, 0
      %v1951 = vsel %vm499, %v1930, 0
      %v1954 = vsel %vm499, %v1931, 0
      %v1957 = vsel %vm524, %v1891, 0
      %1959 = vmatprep.subr.bf16.mxu0 0
      %1960 = vmatpush1.bf16.msra.mxu0 %v1957
      %1961 = vmatprep.subr.bf16.mxu0 0
      %1962 = vmatpush1.bf16.msra.mxu0 0
      %1963 = vmatprep.subr.bf16.mxu0 0
      %1964 = vmatpush1.bf16.msra.mxu0 0
      %1965 = vmatprep.subr.bf16.mxu0 0
      %1966 = vmatpush1.bf16.msra.mxu0 0
      %1967 = vmatprep.subr.bf16.mxu0 0
      %1968 = vmatpush1.bf16.msra.mxu0 0
      %1969 = vmatprep.subr.bf16.mxu0 0
      %1970 = vmatpush1.bf16.msra.mxu0 0
      %1971 = vmatprep.subr.bf16.mxu0 0
      %1972 = vmatpush1.bf16.msra.mxu0 0
      %1973 = vmatprep.subr.bf16.mxu0 0
      %1974 = vmatpush1.bf16.msra.mxu0 0
      %1975 = vmatprep.subr.bf16.mxu0 0
      %1976 = vmatpush1.bf16.msra.mxu0 0
      %1977 = vmatprep.subr.bf16.mxu0 0
      %1978 = vmatpush1.bf16.msra.mxu0 0
      %1979 = vmatprep.subr.bf16.mxu0 0
      %1980 = vmatpush1.bf16.msra.mxu0 0
      %1981 = vmatprep.subr.bf16.mxu0 0
      %1982 = vmatpush1.bf16.msra.mxu0 0
      %1983 = vmatprep.subr.bf16.mxu0 0
      %1984 = vmatpush1.bf16.msra.mxu0 0
      %1985 = vmatprep.subr.bf16.mxu0 0
      %1986 = vmatpush1.bf16.msra.mxu0 0
      %1987 = vmatprep.subr.bf16.mxu0 0
      %1988 = vmatpush1.bf16.msra.mxu0 0
      %1989 = vmatprep.subr.bf16.mxu0 0
      %1990 = vmatpush1.bf16.msra.mxu0 0
      %1991 = vmatprep.mubr.bf16.mxu0 0
      %1992 = vmatmul.mubr.bf16.gmra.mrb[0].mxu0 %v1933
      %v1993 = vpop.f32.mrb[0].mxu0
      %v1994 = vadd.f32 0.0, %v1993
      %v1995 = vpop.f32.mrb[0].mxu0
      %v1996 = vpop.f32.mrb[0].mxu0
      %v1997 = vadd.f32 0.0, %v1996
      %v1998 = vpop.f32.mrb[0].mxu0
      %1999 = vmatprep.mubr.bf16.mxu0 0
      %2000 = vmatmul.mubr.bf16.gmra.mrb[0].mxu0 %v1936
      %v2001 = vpop.f32.mrb[0].mxu0
      %v2002 = vadd.f32 0.0, %v2001
      %v2003 = vpop.f32.mrb[0].mxu0
      %v2004 = vpop.f32.mrb[0].mxu0
      %v2005 = vadd.f32 0.0, %v2004
      %v2006 = vpop.f32.mrb[0].mxu0
      %2007 = vmatprep.mubr.bf16.mxu0 0
      %2008 = vmatmul.mubr.bf16.gmra.mrb[0].mxu0 %v1939
      %v2009 = vpop.f32.mrb[0].mxu0
      %v2010 = vadd.f32 0.0, %v2009
      %v2011 = vpop.f32.mrb[0].mxu0
      %v2012 = vpop.f32.mrb[0].mxu0
      %v2013 = vadd.f32 0.0, %v2012
      %v2014 = vpop.f32.mrb[0].mxu0
      %2015 = vmatprep.mubr.bf16.mxu0 0
      %2016 = vmatmul.mubr.bf16.gmra.mrb[0].mxu0 %v1942
      %v2017 = vpop.f32.mrb[0].mxu0
      %v2018 = vadd.f32 0.0, %v2017
      %v2019 = vpop.f32.mrb[0].mxu0
      %v2020 = vpop.f32.mrb[0].mxu0
      %v2021 = vadd.f32 0.0, %v2020
      %v2022 = vpop.f32.mrb[0].mxu0
      %2023 = vmatprep.mubr.bf16.mxu0 0
      %2024 = vmatmul.mubr.bf16.gmra.mrb[0].mxu0 %v1945
      %v2025 = vpop.f32.mrb[0].mxu0
      %v2026 = vadd.f32 0.0, %v2025
      %v2027 = vpop.f32.mrb[0].mxu0
      %v2028 = vpop.f32.mrb[0].mxu0
      %v2029 = vadd.f32 0.0, %v2028
      %v2030 = vpop.f32.mrb[0].mxu0
      %2031 = vmatprep.mubr.bf16.mxu0 0
      %2032 = vmatmul.mubr.bf16.gmra.mrb[0].mxu0 %v1948
      %v2033 = vpop.f32.mrb[0].mxu0
      %v2034 = vadd.f32 0.0, %v2033
      %v2035 = vpop.f32.mrb[0].mxu0
      %v2036 = vpop.f32.mrb[0].mxu0
      %v2037 = vadd.f32 0.0, %v2036
      %v2038 = vpop.f32.mrb[0].mxu0
      %2039 = vmatprep.mubr.bf16.mxu0 0
      %2040 = vmatmul.mubr.bf16.gmra.mrb[0].mxu0 %v1951
      %v2041 = vpop.f32.mrb[0].mxu0
      %v2042 = vadd.f32 0.0, %v2041
      %v2043 = vpop.f32.mrb[0].mxu0
      %v2044 = vpop.f32.mrb[0].mxu0
      %v2045 = vadd.f32 0.0, %v2044
      %v2046 = vpop.f32.mrb[0].mxu0
      %2047 = vmatprep.mubr.bf16.mxu0 0
      %2048 = vmatmul.mubr.bf16.gmra.mrb[0].mxu0 %v1954
      %v2049 = vpop.f32.mrb[0].mxu0
      %v2050 = vadd.f32 0.0, %v2049
      %v2051 = vpop.f32.mrb[0].mxu0
      %v2052 = vpop.f32.mrb[0].mxu0
      %v2053 = vadd.f32 0.0, %v2052
      %v2054 = vpop.f32.mrb[0].mxu0
      %2055 = vdwg.mxu0
      %v2056 = vadd.f32 %v1857, %v1994
      %v2057 = vadd.f32 %v1858, %v1997
      %v2058 = vadd.f32 %v1859, %v2002
      %v2059 = vadd.f32 %v1860, %v2005
      %v2060 = vadd.f32 %v1861, %v2010
      %v2061 = vadd.f32 %v1862, %v2013
      %v2062 = vadd.f32 %v1863, %v2018
      %v2063 = vadd.f32 %v1864, %v2021
      %v2064 = vadd.f32 %v1865, %v2026
      %v2065 = vadd.f32 %v1866, %v2029
      %v2066 = vadd.f32 %v1867, %v2034
      %v2067 = vadd.f32 %v1868, %v2037
      %v2068 = vadd.f32 %v1869, %v2042
      %v2069 = vadd.f32 %v1870, %v2045
      %v2070 = vadd.f32 %v1871, %v2050
      %v2071 = vadd.f32 %v1872, %v2053
      %v2072 = vld [vmem:[%s1873] sm:$0xf]
      %v2073 = vld [vmem:[%s1873 + $0x4] sm:$0xf]
      %v2074 = vld [vmem:[%s1873 + $0x8] sm:$0x1]
      %v2075 = vld [vmem:[%s1873 + $0xc] sm:$0xf]
      %v2076 = vld [vmem:[%s1873 + $0x10] sm:$0xf]
      %v2077 = vld [vmem:[%s1873 + $0x14] sm:$0x1]
      %v2078 = vld [vmem:[%s1873 + $0x18] sm:$0xf]
      %v2079 = vld [vmem:[%s1873 + $0x1c] sm:$0xf]
      %v2080 = vld [vmem:[%s1873 + $0x20] sm:$0x1]
      %v2081 = vld [vmem:[%s1873 + $0x24] sm:$0xf]
      %v2082 = vld [vmem:[%s1873 + $0x28] sm:$0xf]
      %v2083 = vld [vmem:[%s1873 + $0x2c] sm:$0x1]
      %v2084 = vld [vmem:[%s1873 + $0x30] sm:$0xf]
      %v2085 = vld [vmem:[%s1873 + $0x34] sm:$0xf]
      %v2086 = vld [vmem:[%s1873 + $0x38] sm:$0x1]
      %v2087 = vld [vmem:[%s1873 + $0x3c] sm:$0xf]
      %v2088 = vld [vmem:[%s1873 + $0x40] sm:$0xf]
      %v2089 = vld [vmem:[%s1873 + $0x44] sm:$0x1]
      %v2090 = vld [vmem:[%s1873 + $0x48] sm:$0xf]
      %v2091 = vld [vmem:[%s1873 + $0x4c] sm:$0xf]
      %v2092 = vld [vmem:[%s1873 + $0x50] sm:$0x1]
      %v2093 = vld [vmem:[%s1873 + $0x54] sm:$0xf]
      %v2094 = vld [vmem:[%s1873 + $0x58] sm:$0xf]
      %v2095 = vld [vmem:[%s1873 + $0x5c] sm:$0x1]
      %v2097 = vshrl.u32 %v2072, 16
      %v2099 = vrot.slane %v2097, 4
      %v2100 = vshll.u32 %v2072, 16
      %v2102 = vrot.slane %v2100, 5
      %v2103 = vor.u32 %v2099, %v2102
      %v2104 = vrot.slane %v2103, 4
      %v2106 = vshll.u32 %v2073, 16
      %v2108 = vrot.slane %v2106, 5
      %v2109 = vsel %vm280, %v2104, %v2108
      %v2110 = vshrl.u32 %v2073, 16
      %v2112 = vrot.slane %v2110, 4
      %v2113 = vor.u32 %v2112, %v2108
      %v2114 = vrot.slane %v2113, 4
      %v2116 = vshll.u32 %v2074, 16
      %v2118 = vrot.slane %v2116, 5
      %v2119 = vsel %vm280, %v2114, %v2118
      %v2121 = vshrl.u32 %v2075, 16
      %v2123 = vrot.slane %v2121, 4
      %v2124 = vshll.u32 %v2075, 16
      %v2126 = vrot.slane %v2124, 5
      %v2127 = vor.u32 %v2123, %v2126
      %v2128 = vrot.slane %v2127, 4
      %v2130 = vshll.u32 %v2076, 16
      %v2132 = vrot.slane %v2130, 5
      %v2133 = vsel %vm280, %v2128, %v2132
      %v2134 = vshrl.u32 %v2076, 16
      %v2136 = vrot.slane %v2134, 4
      %v2137 = vor.u32 %v2136, %v2132
      %v2138 = vrot.slane %v2137, 4
      %v2140 = vshll.u32 %v2077, 16
      %v2142 = vrot.slane %v2140, 5
      %v2143 = vsel %vm280, %v2138, %v2142
      %v2145 = vshrl.u32 %v2078, 16
      %v2147 = vrot.slane %v2145, 4
      %v2148 = vshll.u32 %v2078, 16
      %v2150 = vrot.slane %v2148, 5
      %v2151 = vor.u32 %v2147, %v2150
      %v2152 = vrot.slane %v2151, 4
      %v2154 = vshll.u32 %v2079, 16
      %v2156 = vrot.slane %v2154, 5
      %v2157 = vsel %vm280, %v2152, %v2156
      %v2158 = vshrl.u32 %v2079, 16
      %v2160 = vrot.slane %v2158, 4
      %v2161 = vor.u32 %v2160, %v2156
      %v2162 = vrot.slane %v2161, 4
      %v2164 = vshll.u32 %v2080, 16
      %v2166 = vrot.slane %v2164, 5
      %v2167 = vsel %vm280, %v2162, %v2166
      %v2169 = vshrl.u32 %v2081, 16
      %v2171 = vrot.slane %v2169, 4
      %v2172 = vshll.u32 %v2081, 16
      %v2174 = vrot.slane %v2172, 5
      %v2175 = vor.u32 %v2171, %v2174
      %v2176 = vrot.slane %v2175, 4
      %v2178 = vshll.u32 %v2082, 16
      %v2180 = vrot.slane %v2178, 5
      %v2181 = vsel %vm280, %v2176, %v2180
      %v2182 = vshrl.u32 %v2082, 16
      %v2184 = vrot.slane %v2182, 4
      %v2185 = vor.u32 %v2184, %v2180
      %v2186 = vrot.slane %v2185, 4
      %v2188 = vshll.u32 %v2083, 16
      %v2190 = vrot.slane %v2188, 5
      %v2191 = vsel %vm280, %v2186, %v2190
      %v2193 = vshrl.u32 %v2084, 16
      %v2195 = vrot.slane %v2193, 4
      %v2196 = vshll.u32 %v2084, 16
      %v2198 = vrot.slane %v2196, 5
      %v2199 = vor.u32 %v2195, %v2198
      %v2200 = vrot.slane %v2199, 4
      %v2202 = vshll.u32 %v2085, 16
      %v2204 = vrot.slane %v2202, 5
      %v2205 = vsel %vm280, %v2200, %v2204
      %v2206 = vshrl.u32 %v2085, 16
      %v2208 = vrot.slane %v2206, 4
      %v2209 = vor.u32 %v2208, %v2204
      %v2210 = vrot.slane %v2209, 4
      %v2212 = vshll.u32 %v2086, 16
      %v2214 = vrot.slane %v2212, 5
      %v2215 = vsel %vm280, %v2210, %v2214
      %v2217 = vshrl.u32 %v2087, 16
      %v2219 = vrot.slane %v2217, 4
      %v2220 = vshll.u32 %v2087, 16
      %v2222 = vrot.slane %v2220, 5
      %v2223 = vor.u32 %v2219, %v2222
      %v2224 = vrot.slane %v2223, 4
      %v2226 = vshll.u32 %v2088, 16
      %v2228 = vrot.slane %v2226, 5
      %v2229 = vsel %vm280, %v2224, %v2228
      %v2230 = vshrl.u32 %v2088, 16
      %v2232 = vrot.slane %v2230, 4
      %v2233 = vor.u32 %v2232, %v2228
      %v2234 = vrot.slane %v2233, 4
      %v2236 = vshll.u32 %v2089, 16
      %v2238 = vrot.slane %v2236, 5
      %v2239 = vsel %vm280, %v2234, %v2238
      %v2241 = vshrl.u32 %v2090, 16
      %v2243 = vrot.slane %v2241, 4
      %v2244 = vshll.u32 %v2090, 16
      %v2246 = vrot.slane %v2244, 5
      %v2247 = vor.u32 %v2243, %v2246
      %v2248 = vrot.slane %v2247, 4
      %v2250 = vshll.u32 %v2091, 16
      %v2252 = vrot.slane %v2250, 5
      %v2253 = vsel %vm280, %v2248, %v2252
      %v2254 = vshrl.u32 %v2091, 16
      %v2256 = vrot.slane %v2254, 4
      %v2257 = vor.u32 %v2256, %v2252
      %v2258 = vrot.slane %v2257, 4
      %v2260 = vshll.u32 %v2092, 16
      %v2262 = vrot.slane %v2260, 5
      %v2263 = vsel %vm280, %v2258, %v2262
      %v2265 = vshrl.u32 %v2093, 16
      %v2267 = vrot.slane %v2265, 4
      %v2268 = vshll.u32 %v2093, 16
      %v2270 = vrot.slane %v2268, 5
      %v2271 = vor.u32 %v2267, %v2270
      %v2272 = vrot.slane %v2271, 4
      %v2274 = vshll.u32 %v2094, 16
      %v2276 = vrot.slane %v2274, 5
      %v2277 = vsel %vm280, %v2272, %v2276
      %v2278 = vshrl.u32 %v2094, 16
      %v2280 = vrot.slane %v2278, 4
      %v2281 = vor.u32 %v2280, %v2276
      %v2282 = vrot.slane %v2281, 4
      %v2284 = vshll.u32 %v2095, 16
      %v2286 = vrot.slane %v2284, 5
      %v2287 = vsel %vm280, %v2282, %v2286
      %s2288 = scalar_lea.vmem %s1, 14
      %v2289 = vld [vmem:[%s2288] sm:$0x3]
      %v2290 = vunpack.c.l.b16 %v2109
      %v2291 = vunpack.c.l.b16 %v2119
      %v2292 = vunpack.c.l.b16 %v2133
      %v2293 = vunpack.c.l.b16 %v2143
      %v2294 = vunpack.c.l.b16 %v2157
      %v2295 = vunpack.c.l.b16 %v2167
      %v2296 = vunpack.c.l.b16 %v2181
      %v2297 = vunpack.c.l.b16 %v2191
      %v2298 = vunpack.c.l.b16 %v2205
      %v2299 = vunpack.c.l.b16 %v2215
      %v2300 = vunpack.c.l.b16 %v2229
      %v2301 = vunpack.c.l.b16 %v2239
      %v2302 = vunpack.c.l.b16 %v2253
      %v2303 = vunpack.c.l.b16 %v2263
      %v2304 = vunpack.c.l.b16 %v2277
      %v2305 = vunpack.c.l.b16 %v2287
      %v2306 = vpack.c.b16 %v2291, %v2290
      %v2307 = vpack.c.b16 %v2293, %v2292
      %v2308 = vpack.c.b16 %v2295, %v2294
      %v2309 = vpack.c.b16 %v2297, %v2296
      %v2310 = vpack.c.b16 %v2299, %v2298
      %v2311 = vpack.c.b16 %v2301, %v2300
      %v2312 = vpack.c.b16 %v2303, %v2302
      %v2313 = vpack.c.b16 %v2305, %v2304
      %v2315 = vsel %vm499, %v2306, 0
      %v2318 = vsel %vm499, %v2307, 0
      %v2321 = vsel %vm499, %v2308, 0
      %v2324 = vsel %vm499, %v2309, 0
      %v2327 = vsel %vm499, %v2310, 0
      %v2330 = vsel %vm499, %v2311, 0
      %v2333 = vsel %vm499, %v2312, 0
      %v2336 = vsel %vm499, %v2313, 0
      %v2339 = vsel %vm524, %v2289, 0
      %2341 = vmatprep.subr.bf16.mxu0 0
      %2342 = vmatpush1.bf16.msra.mxu0 %v2339
      %2343 = vmatprep.subr.bf16.mxu0 0
      %2344 = vmatpush1.bf16.msra.mxu0 0
      %2345 = vmatprep.subr.bf16.mxu0 0
      %2346 = vmatpush1.bf16.msra.mxu0 0
      %2347 = vmatprep.subr.bf16.mxu0 0
      %2348 = vmatpush1.bf16.msra.mxu0 0
      %2349 = vmatprep.subr.bf16.mxu0 0
      %2350 = vmatpush1.bf16.msra.mxu0 0
      %2351 = vmatprep.subr.bf16.mxu0 0
      %2352 = vmatpush1.bf16.msra.mxu0 0
      %2353 = vmatprep.subr.bf16.mxu0 0
      %2354 = vmatpush1.bf16.msra.mxu0 0
      %2355 = vmatprep.subr.bf16.mxu0 0
      %2356 = vmatpush1.bf16.msra.mxu0 0
      %2357 = vmatprep.subr.bf16.mxu0 0
      %2358 = vmatpush1.bf16.msra.mxu0 0
      %2359 = vmatprep.subr.bf16.mxu0 0
      %2360 = vmatpush1.bf16.msra.mxu0 0
      %2361 = vmatprep.subr.bf16.mxu0 0
      %2362 = vmatpush1.bf16.msra.mxu0 0
      %2363 = vmatprep.subr.bf16.mxu0 0
      %2364 = vmatpush1.bf16.msra.mxu0 0
      %2365 = vmatprep.subr.bf16.mxu0 0
      %2366 = vmatpush1.bf16.msra.mxu0 0
      %2367 = vmatprep.subr.bf16.mxu0 0
      %2368 = vmatpush1.bf16.msra.mxu0 0
      %2369 = vmatprep.subr.bf16.mxu0 0
      %2370 = vmatpush1.bf16.msra.mxu0 0
      %2371 = vmatprep.subr.bf16.mxu0 0
      %2372 = vmatpush1.bf16.msra.mxu0 0
      %2373 = vmatprep.mubr.bf16.mxu0 0
      %2374 = vmatmul.mubr.bf16.gmra.mrb[0].mxu0 %v2315
      %v2375 = vpop.f32.mrb[0].mxu0
      %v2376 = vadd.f32 0.0, %v2375
      %v2377 = vpop.f32.mrb[0].mxu0
      %v2378 = vpop.f32.mrb[0].mxu0
      %v2379 = vadd.f32 0.0, %v2378
      %v2380 = vpop.f32.mrb[0].mxu0
      %2381 = vmatprep.mubr.bf16.mxu0 0
      %2382 = vmatmul.mubr.bf16.gmra.mrb[0].mxu0 %v2318
      %v2383 = vpop.f32.mrb[0].mxu0
      %v2384 = vadd.f32 0.0, %v2383
      %v2385 = vpop.f32.mrb[0].mxu0
      %v2386 = vpop.f32.mrb[0].mxu0
      %v2387 = vadd.f32 0.0, %v2386
      %v2388 = vpop.f32.mrb[0].mxu0
      %2389 = vmatprep.mubr.bf16.mxu0 0
      %2390 = vmatmul.mubr.bf16.gmra.mrb[0].mxu0 %v2321
      %v2391 = vpop.f32.mrb[0].mxu0
      %v2392 = vadd.f32 0.0, %v2391
      %v2393 = vpop.f32.mrb[0].mxu0
      %v2394 = vpop.f32.mrb[0].mxu0
      %v2395 = vadd.f32 0.0, %v2394
      %v2396 = vpop.f32.mrb[0].mxu0
      %2397 = vmatprep.mubr.bf16.mxu0 0
      %2398 = vmatmul.mubr.bf16.gmra.mrb[0].mxu0 %v2324
      %v2399 = vpop.f32.mrb[0].mxu0
      %v2400 = vadd.f32 0.0, %v2399
      %v2401 = vpop.f32.mrb[0].mxu0
      %v2402 = vpop.f32.mrb[0].mxu0
      %v2403 = vadd.f32 0.0, %v2402
      %v2404 = vpop.f32.mrb[0].mxu0
      %2405 = vmatprep.mubr.bf16.mxu0 0
      %2406 = vmatmul.mubr.bf16.gmra.mrb[0].mxu0 %v2327
      %v2407 = vpop.f32.mrb[0].mxu0
      %v2408 = vadd.f32 0.0, %v2407
      %v2409 = vpop.f32.mrb[0].mxu0
      %v2410 = vpop.f32.mrb[0].mxu0
      %v2411 = vadd.f32 0.0, %v2410
      %v2412 = vpop.f32.mrb[0].mxu0
      %2413 = vmatprep.mubr.bf16.mxu0 0
      %2414 = vmatmul.mubr.bf16.gmra.mrb[0].mxu0 %v2330
      %v2415 = vpop.f32.mrb[0].mxu0
      %v2416 = vadd.f32 0.0, %v2415
      %v2417 = vpop.f32.mrb[0].mxu0
      %v2418 = vpop.f32.mrb[0].mxu0
      %v2419 = vadd.f32 0.0, %v2418
      %v2420 = vpop.f32.mrb[0].mxu0
      %2421 = vmatprep.mubr.bf16.mxu0 0
      %2422 = vmatmul.mubr.bf16.gmra.mrb[0].mxu0 %v2333
      %v2423 = vpop.f32.mrb[0].mxu0
      %v2424 = vadd.f32 0.0, %v2423
      %v2425 = vpop.f32.mrb[0].mxu0
      %v2426 = vpop.f32.mrb[0].mxu0
      %v2427 = vadd.f32 0.0, %v2426
      %v2428 = vpop.f32.mrb[0].mxu0
      %2429 = vmatprep.mubr.bf16.mxu0 0
      %2430 = vmatmul.mubr.bf16.gmra.mrb[0].mxu0 %v2336
      %v2431 = vpop.f32.mrb[0].mxu0
      %v2432 = vadd.f32 0.0, %v2431
      %v2433 = vpop.f32.mrb[0].mxu0
      %v2434 = vpop.f32.mrb[0].mxu0
      %v2435 = vadd.f32 0.0, %v2434
      %v2436 = vpop.f32.mrb[0].mxu0
      %2437 = vdwg.mxu0
      %v2438 = vadd.f32 %v2056, %v2376
      %v2439 = vadd.f32 %v2057, %v2379
      %v2440 = vadd.f32 %v2058, %v2384
      %v2441 = vadd.f32 %v2059, %v2387
      %v2442 = vadd.f32 %v2060, %v2392
      %v2443 = vadd.f32 %v2061, %v2395
      %v2444 = vadd.f32 %v2062, %v2400
      %v2445 = vadd.f32 %v2063, %v2403
      %v2446 = vadd.f32 %v2064, %v2408
      %v2447 = vadd.f32 %v2065, %v2411
      %v2448 = vadd.f32 %v2066, %v2416
      %v2449 = vadd.f32 %v2067, %v2419
      %v2450 = vadd.f32 %v2068, %v2424
      %v2451 = vadd.f32 %v2069, %v2427
      %v2452 = vadd.f32 %v2070, %v2432
      %v2453 = vadd.f32 %v2071, %v2435
      %v2454 = vld [vmem:[%s1873] sm:$0xe]
      %v2455 = vld [vmem:[%s1873 + $0xc] sm:$0xe]
      %v2456 = vld [vmem:[%s1873 + $0x18] sm:$0xe]
      %v2457 = vld [vmem:[%s1873 + $0x24] sm:$0xe]
      %v2458 = vld [vmem:[%s1873 + $0x30] sm:$0xe]
      %v2459 = vld [vmem:[%s1873 + $0x3c] sm:$0xe]
      %v2460 = vld [vmem:[%s1873 + $0x48] sm:$0xe]
      %v2461 = vld [vmem:[%s1873 + $0x54] sm:$0xe]
      %v2486 = vrot.slane %v2454, 5
      %v2487 = vrot.slane %v2486, 4
      %v2488 = vrot.slane %v2073, 5
      %v2489 = vsel %vm815, %v2487, %v2488
      %v2490 = vrot.slane %v2488, 4
      %v2491 = vrot.slane %v2074, 5
      %v2492 = vsel %vm815, %v2490, %v2491
      %v2493 = vrot.slane %v2455, 5
      %v2494 = vrot.slane %v2493, 4
      %v2495 = vrot.slane %v2076, 5
      %v2496 = vsel %vm815, %v2494, %v2495
      %v2497 = vrot.slane %v2495, 4
      %v2498 = vrot.slane %v2077, 5
      %v2499 = vsel %vm815, %v2497, %v2498
      %v2500 = vrot.slane %v2456, 5
      %v2501 = vrot.slane %v2500, 4
      %v2502 = vrot.slane %v2079, 5
      %v2503 = vsel %vm815, %v2501, %v2502
      %v2504 = vrot.slane %v2502, 4
      %v2505 = vrot.slane %v2080, 5
      %v2506 = vsel %vm815, %v2504, %v2505
      %v2507 = vrot.slane %v2457, 5
      %v2508 = vrot.slane %v2507, 4
      %v2509 = vrot.slane %v2082, 5
      %v2510 = vsel %vm815, %v2508, %v2509
      %v2511 = vrot.slane %v2509, 4
      %v2512 = vrot.slane %v2083, 5
      %v2513 = vsel %vm815, %v2511, %v2512
      %v2514 = vrot.slane %v2458, 5
      %v2515 = vrot.slane %v2514, 4
      %v2516 = vrot.slane %v2085, 5
      %v2517 = vsel %vm815, %v2515, %v2516
      %v2518 = vrot.slane %v2516, 4
      %v2519 = vrot.slane %v2086, 5
      %v2520 = vsel %vm815, %v2518, %v2519
      %v2521 = vrot.slane %v2459, 5
      %v2522 = vrot.slane %v2521, 4
      %v2523 = vrot.slane %v2088, 5
      %v2524 = vsel %vm815, %v2522, %v2523
      %v2525 = vrot.slane %v2523, 4
      %v2526 = vrot.slane %v2089, 5
      %v2527 = vsel %vm815, %v2525, %v2526
      %v2528 = vrot.slane %v2460, 5
      %v2529 = vrot.slane %v2528, 4
      %v2530 = vrot.slane %v2091, 5
      %v2531 = vsel %vm815, %v2529, %v2530
      %v2532 = vrot.slane %v2530, 4
      %v2533 = vrot.slane %v2092, 5
      %v2534 = vsel %vm815, %v2532, %v2533
      %v2535 = vrot.slane %v2461, 5
      %v2536 = vrot.slane %v2535, 4
      %v2537 = vrot.slane %v2094, 5
      %v2538 = vsel %vm815, %v2536, %v2537
      %v2539 = vrot.slane %v2537, 4
      %v2540 = vrot.slane %v2095, 5
      %v2541 = vsel %vm815, %v2539, %v2540
      %s2542 = scalar_lea.vmem %s1, 16
      %v2543 = vld [vmem:[%s2542] sm:$0x3]
      %v2544 = vunpack.c.l.b16 %v2489
      %v2545 = vunpack.c.l.b16 %v2492
      %v2546 = vunpack.c.l.b16 %v2496
      %v2547 = vunpack.c.l.b16 %v2499
      %v2548 = vunpack.c.l.b16 %v2503
      %v2549 = vunpack.c.l.b16 %v2506
      %v2550 = vunpack.c.l.b16 %v2510
      %v2551 = vunpack.c.l.b16 %v2513
      %v2552 = vunpack.c.l.b16 %v2517
      %v2553 = vunpack.c.l.b16 %v2520
      %v2554 = vunpack.c.l.b16 %v2524
      %v2555 = vunpack.c.l.b16 %v2527
      %v2556 = vunpack.c.l.b16 %v2531
      %v2557 = vunpack.c.l.b16 %v2534
      %v2558 = vunpack.c.l.b16 %v2538
      %v2559 = vunpack.c.l.b16 %v2541
      %v2560 = vpack.c.b16 %v2545, %v2544
      %v2561 = vpack.c.b16 %v2547, %v2546
      %v2562 = vpack.c.b16 %v2549, %v2548
      %v2563 = vpack.c.b16 %v2551, %v2550
      %v2564 = vpack.c.b16 %v2553, %v2552
      %v2565 = vpack.c.b16 %v2555, %v2554
      %v2566 = vpack.c.b16 %v2557, %v2556
      %v2567 = vpack.c.b16 %v2559, %v2558
      %v2569 = vsel %vm499, %v2560, 0
      %v2572 = vsel %vm499, %v2561, 0
      %v2575 = vsel %vm499, %v2562, 0
      %v2578 = vsel %vm499, %v2563, 0
      %v2581 = vsel %vm499, %v2564, 0
      %v2584 = vsel %vm499, %v2565, 0
      %v2587 = vsel %vm499, %v2566, 0
      %v2590 = vsel %vm499, %v2567, 0
      %v2593 = vsel %vm524, %v2543, 0
      %2595 = vmatprep.subr.bf16.mxu0 0
      %2596 = vmatpush1.bf16.msra.mxu0 %v2593
      %2597 = vmatprep.subr.bf16.mxu0 0
      %2598 = vmatpush1.bf16.msra.mxu0 0
      %2599 = vmatprep.subr.bf16.mxu0 0
      %2600 = vmatpush1.bf16.msra.mxu0 0
      %2601 = vmatprep.subr.bf16.mxu0 0
      %2602 = vmatpush1.bf16.msra.mxu0 0
      %2603 = vmatprep.subr.bf16.mxu0 0
      %2604 = vmatpush1.bf16.msra.mxu0 0
      %2605 = vmatprep.subr.bf16.mxu0 0
      %2606 = vmatpush1.bf16.msra.mxu0 0
      %2607 = vmatprep.subr.bf16.mxu0 0
      %2608 = vmatpush1.bf16.msra.mxu0 0
      %2609 = vmatprep.subr.bf16.mxu0 0
      %2610 = vmatpush1.bf16.msra.mxu0 0
      %2611 = vmatprep.subr.bf16.mxu0 0
      %2612 = vmatpush1.bf16.msra.mxu0 0
      %2613 = vmatprep.subr.bf16.mxu0 0
      %2614 = vmatpush1.bf16.msra.mxu0 0
      %2615 = vmatprep.subr.bf16.mxu0 0
      %2616 = vmatpush1.bf16.msra.mxu0 0
      %2617 = vmatprep.subr.bf16.mxu0 0
      %2618 = vmatpush1.bf16.msra.mxu0 0
      %2619 = vmatprep.subr.bf16.mxu0 0
      %2620 = vmatpush1.bf16.msra.mxu0 0
      %2621 = vmatprep.subr.bf16.mxu0 0
      %2622 = vmatpush1.bf16.msra.mxu0 0
      %2623 = vmatprep.subr.bf16.mxu0 0
      %2624 = vmatpush1.bf16.msra.mxu0 0
      %2625 = vmatprep.subr.bf16.mxu0 0
      %2626 = vmatpush1.bf16.msra.mxu0 0
      %2627 = vmatprep.mubr.bf16.mxu0 0
      %2628 = vmatmul.mubr.bf16.gmra.mrb[0].mxu0 %v2569
      %v2629 = vpop.f32.mrb[0].mxu0
      %v2630 = vadd.f32 0.0, %v2629
      %v2631 = vpop.f32.mrb[0].mxu0
      %v2632 = vpop.f32.mrb[0].mxu0
      %v2633 = vadd.f32 0.0, %v2632
      %v2634 = vpop.f32.mrb[0].mxu0
      %2635 = vmatprep.mubr.bf16.mxu0 0
      %2636 = vmatmul.mubr.bf16.gmra.mrb[0].mxu0 %v2572
      %v2637 = vpop.f32.mrb[0].mxu0
      %v2638 = vadd.f32 0.0, %v2637
      %v2639 = vpop.f32.mrb[0].mxu0
      %v2640 = vpop.f32.mrb[0].mxu0
      %v2641 = vadd.f32 0.0, %v2640
      %v2642 = vpop.f32.mrb[0].mxu0
      %2643 = vmatprep.mubr.bf16.mxu0 0
      %2644 = vmatmul.mubr.bf16.gmra.mrb[0].mxu0 %v2575
      %v2645 = vpop.f32.mrb[0].mxu0
      %v2646 = vadd.f32 0.0, %v2645
      %v2647 = vpop.f32.mrb[0].mxu0
      %v2648 = vpop.f32.mrb[0].mxu0
      %v2649 = vadd.f32 0.0, %v2648
      %v2650 = vpop.f32.mrb[0].mxu0
      %2651 = vmatprep.mubr.bf16.mxu0 0
      %2652 = vmatmul.mubr.bf16.gmra.mrb[0].mxu0 %v2578
      %v2653 = vpop.f32.mrb[0].mxu0
      %v2654 = vadd.f32 0.0, %v2653
      %v2655 = vpop.f32.mrb[0].mxu0
      %v2656 = vpop.f32.mrb[0].mxu0
      %v2657 = vadd.f32 0.0, %v2656
      %v2658 = vpop.f32.mrb[0].mxu0
      %2659 = vmatprep.mubr.bf16.mxu0 0
      %2660 = vmatmul.mubr.bf16.gmra.mrb[0].mxu0 %v2581
      %v2661 = vpop.f32.mrb[0].mxu0
      %v2662 = vadd.f32 0.0, %v2661
      %v2663 = vpop.f32.mrb[0].mxu0
      %v2664 = vpop.f32.mrb[0].mxu0
      %v2665 = vadd.f32 0.0, %v2664
      %v2666 = vpop.f32.mrb[0].mxu0
      %2667 = vmatprep.mubr.bf16.mxu0 0
      %2668 = vmatmul.mubr.bf16.gmra.mrb[0].mxu0 %v2584
      %v2669 = vpop.f32.mrb[0].mxu0
      %v2670 = vadd.f32 0.0, %v2669
      %v2671 = vpop.f32.mrb[0].mxu0
      %v2672 = vpop.f32.mrb[0].mxu0
      %v2673 = vadd.f32 0.0, %v2672
      %v2674 = vpop.f32.mrb[0].mxu0
      %2675 = vmatprep.mubr.bf16.mxu0 0
      %2676 = vmatmul.mubr.bf16.gmra.mrb[0].mxu0 %v2587
      %v2677 = vpop.f32.mrb[0].mxu0
      %v2678 = vadd.f32 0.0, %v2677
      %v2679 = vpop.f32.mrb[0].mxu0
      %v2680 = vpop.f32.mrb[0].mxu0
      %v2681 = vadd.f32 0.0, %v2680
      %v2682 = vpop.f32.mrb[0].mxu0
      %2683 = vmatprep.mubr.bf16.mxu0 0
      %2684 = vmatmul.mubr.bf16.gmra.mrb[0].mxu0 %v2590
      %v2685 = vpop.f32.mrb[0].mxu0
      %v2686 = vadd.f32 0.0, %v2685
      %v2687 = vpop.f32.mrb[0].mxu0
      %v2688 = vpop.f32.mrb[0].mxu0
      %v2689 = vadd.f32 0.0, %v2688
      %v2690 = vpop.f32.mrb[0].mxu0
      %2691 = vdwg.mxu0
      %v2692 = vadd.f32 %v2438, %v2630
      %v2693 = vadd.f32 %v2439, %v2633
      %v2694 = vadd.f32 %v2440, %v2638
      %v2695 = vadd.f32 %v2441, %v2641
      %v2696 = vadd.f32 %v2442, %v2646
      %v2697 = vadd.f32 %v2443, %v2649
      %v2698 = vadd.f32 %v2444, %v2654
      %v2699 = vadd.f32 %v2445, %v2657
      %v2700 = vadd.f32 %v2446, %v2662
      %v2701 = vadd.f32 %v2447, %v2665
      %v2702 = vadd.f32 %v2448, %v2670
      %v2703 = vadd.f32 %v2449, %v2673
      %v2704 = vadd.f32 %v2450, %v2678
      %v2705 = vadd.f32 %v2451, %v2681
      %v2706 = vadd.f32 %v2452, %v2686
      %v2707 = vadd.f32 %v2453, %v2689
      %2708 = vst [vmem:[#allocation2] sm:$0xff] %v2692
      %2709 = vst [vmem:[#allocation2 + $0x8] sm:$0xff] %v2693
      %2710 = vst [vmem:[#allocation2 + $0x10] sm:$0xff] %v2694
      %2711 = vst [vmem:[#allocation2 + $0x18] sm:$0xff] %v2695
      %2712 = vst [vmem:[#allocation2 + $0x20] sm:$0xff] %v2696
      %2713 = vst [vmem:[#allocation2 + $0x28] sm:$0xff] %v2697
      %2714 = vst [vmem:[#allocation2 + $0x30] sm:$0xff] %v2698
      %2715 = vst [vmem:[#allocation2 + $0x38] sm:$0xff] %v2699
      %2716 = vst [vmem:[#allocation2 + $0x40] sm:$0xff] %v2700
      %2717 = vst [vmem:[#allocation2 + $0x48] sm:$0xff] %v2701
      %2718 = vst [vmem:[#allocation2 + $0x50] sm:$0xff] %v2702
      %2719 = vst [vmem:[#allocation2 + $0x58] sm:$0xff] %v2703
      %2720 = vst [vmem:[#allocation2 + $0x60] sm:$0xff] %v2704
      %2721 = vst [vmem:[#allocation2 + $0x68] sm:$0xff] %v2705
      %2722 = vst [vmem:[#allocation2 + $0x70] sm:$0xff] %v2706
      %2723 = vst [vmem:[#allocation2 + $0x78] sm:$0xff] %v2707
      %v2724 = vadd.f32 %v2692, %v2693
      %v2725 = vadd.f32 %v2724, %v2694
      %v2726 = vadd.f32 %v2725, %v2695
      %v2727 = vadd.f32 %v2726, %v2696
      %v2728 = vadd.f32 %v2727, %v2697
      %v2729 = vadd.f32 %v2728, %v2698
      %v2730 = vadd.f32 %v2729, %v2699
      %v2731 = vadd.f32 %v2730, %v2700
      %v2732 = vadd.f32 %v2731, %v2701
      %v2733 = vadd.f32 %v2732, %v2702
      %v2734 = vadd.f32 %v2733, %v2703
      %v2735 = vadd.f32 %v2734, %v2704
      %v2736 = vadd.f32 %v2735, %v2705
      %v2737 = vadd.f32 %v2736, %v2706
      %v2738 = vadd.f32 %v2737, %v2707
      %v2739 = vrot.slane %v2738, 4
      %v2740 = vadd.f32 %v2738, %v2739
      %v2741 = vrot.slane %v2740, 2
      %v2742 = vadd.f32 %v2740, %v2741
      %v2743 = vrot.slane %v2742, 1
      %v2744 = vadd.f32 %v2742, %v2743
      %v2745 = vadd.f32 %v2744, 0.0
      %v2746 = vmul.f32 %v2692, %v2692
      %v2747 = vmul.f32 %v2693, %v2693
      %v2748 = vmul.f32 %v2694, %v2694
      %v2749 = vmul.f32 %v2695, %v2695
      %v2750 = vmul.f32 %v2696, %v2696
      %v2751 = vmul.f32 %v2697, %v2697
      %v2752 = vmul.f32 %v2698, %v2698
      %v2753 = vmul.f32 %v2699, %v2699
      %v2754 = vmul.f32 %v2700, %v2700
      %v2755 = vmul.f32 %v2701, %v2701
      %v2756 = vmul.f32 %v2702, %v2702
      %v2757 = vmul.f32 %v2703, %v2703
      %v2758 = vmul.f32 %v2704, %v2704
      %v2759 = vmul.f32 %v2705, %v2705
      %v2760 = vmul.f32 %v2706, %v2706
      %v2761 = vmul.f32 %v2707, %v2707
      %v2762 = vadd.f32 %v2746, %v2747
      %v2763 = vadd.f32 %v2762, %v2748
      %v2764 = vadd.f32 %v2763, %v2749
      %v2765 = vadd.f32 %v2764, %v2750
      %v2766 = vadd.f32 %v2765, %v2751
      %v2767 = vadd.f32 %v2766, %v2752
      %v2768 = vadd.f32 %v2767, %v2753
      %v2769 = vadd.f32 %v2768, %v2754
      %v2770 = vadd.f32 %v2769, %v2755
      %v2771 = vadd.f32 %v2770, %v2756
      %v2772 = vadd.f32 %v2771, %v2757
      %v2773 = vadd.f32 %v2772, %v2758
      %v2774 = vadd.f32 %v2773, %v2759
      %v2775 = vadd.f32 %v2774, %v2760
      %v2776 = vadd.f32 %v2775, %v2761
      %v2777 = vrot.slane %v2776, 4
      %v2778 = vadd.f32 %v2776, %v2777
      %v2779 = vrot.slane %v2778, 2
      %v2780 = vadd.f32 %v2778, %v2779
      %v2781 = vrot.slane %v2780, 1
      %v2782 = vadd.f32 %v2780, %v2781
      %v2783 = vadd.f32 %v2782, 0.0
      %s2784 = scalar_lea.vmem %s246, 96
      %v2785 = vld [vmem:[%s2784] sm:$0xf]
      %v2786 = vld [vmem:[%s2784 + $0x4] sm:$0xf]
      %v2787 = vld [vmem:[%s2784 + $0xc] sm:$0xf]
      %v2788 = vld [vmem:[%s2784 + $0x10] sm:$0xf]
      %v2789 = vld [vmem:[%s2784 + $0x18] sm:$0xf]
      %v2790 = vld [vmem:[%s2784 + $0x1c] sm:$0xf]
      %v2791 = vld [vmem:[%s2784 + $0x24] sm:$0xf]
      %v2792 = vld [vmem:[%s2784 + $0x28] sm:$0xf]
      %v2793 = vld [vmem:[%s2784 + $0x30] sm:$0xf]
      %v2794 = vld [vmem:[%s2784 + $0x34] sm:$0xf]
      %v2795 = vld [vmem:[%s2784 + $0x3c] sm:$0xf]
      %v2796 = vld [vmem:[%s2784 + $0x40] sm:$0xf]
      %v2797 = vld [vmem:[%s2784 + $0x48] sm:$0xf]
      %v2798 = vld [vmem:[%s2784 + $0x4c] sm:$0xf]
      %v2799 = vld [vmem:[%s2784 + $0x54] sm:$0xf]
      %v2800 = vld [vmem:[%s2784 + $0x58] sm:$0xf]
      %v2801 = vld [vmem:[%s1] sm:$0x3]
      %v2802 = vld [vmem:[%s2784 + $0x8] sm:$0x1]
      %v2803 = vld [vmem:[%s2784 + $0x14] sm:$0x1]
      %v2804 = vld [vmem:[%s2784 + $0x20] sm:$0x1]
      %v2805 = vld [vmem:[%s2784 + $0x2c] sm:$0x1]
      %v2806 = vld [vmem:[%s2784 + $0x38] sm:$0x1]
      %v2807 = vld [vmem:[%s2784 + $0x44] sm:$0x1]
      %v2808 = vld [vmem:[%s2784 + $0x50] sm:$0x1]
      %v2809 = vld [vmem:[%s2784 + $0x5c] sm:$0x1]
      %v2811 = vshrl.u32 %v2785, 16
      %v2813 = vrot.slane %v2811, 4
      %v2814 = vshll.u32 %v2785, 16
      %v2816 = vrot.slane %v2814, 5
      %v2817 = vor.u32 %v2813, %v2816
      %v2818 = vrot.slane %v2817, 4
      %v2820 = vshll.u32 %v2786, 16
      %v2822 = vrot.slane %v2820, 5
      %v2823 = vsel %vm280, %v2818, %v2822
      %v2824 = vshrl.u32 %v2786, 16
      %v2826 = vrot.slane %v2824, 4
      %v2827 = vor.u32 %v2826, %v2822
      %v2828 = vrot.slane %v2827, 4
      %v2830 = vshll.u32 %v2802, 16
      %v2832 = vrot.slane %v2830, 5
      %v2833 = vsel %vm280, %v2828, %v2832
      %v2835 = vshrl.u32 %v2787, 16
      %v2837 = vrot.slane %v2835, 4
      %v2838 = vshll.u32 %v2787, 16
      %v2840 = vrot.slane %v2838, 5
      %v2841 = vor.u32 %v2837, %v2840
      %v2842 = vrot.slane %v2841, 4
      %v2844 = vshll.u32 %v2788, 16
      %v2846 = vrot.slane %v2844, 5
      %v2847 = vsel %vm280, %v2842, %v2846
      %v2848 = vshrl.u32 %v2788, 16
      %v2850 = vrot.slane %v2848, 4
      %v2851 = vor.u32 %v2850, %v2846
      %v2852 = vrot.slane %v2851, 4
      %v2854 = vshll.u32 %v2803, 16
      %v2856 = vrot.slane %v2854, 5
      %v2857 = vsel %vm280, %v2852, %v2856
      %v2859 = vshrl.u32 %v2789, 16
      %v2861 = vrot.slane %v2859, 4
      %v2862 = vshll.u32 %v2789, 16
      %v2864 = vrot.slane %v2862, 5
      %v2865 = vor.u32 %v2861, %v2864
      %v2866 = vrot.slane %v2865, 4
      %v2868 = vshll.u32 %v2790, 16
      %v2870 = vrot.slane %v2868, 5
      %v2871 = vsel %vm280, %v2866, %v2870
      %v2872 = vshrl.u32 %v2790, 16
      %v2874 = vrot.slane %v2872, 4
      %v2875 = vor.u32 %v2874, %v2870
      %v2876 = vrot.slane %v2875, 4
      %v2878 = vshll.u32 %v2804, 16
      %v2880 = vrot.slane %v2878, 5
      %v2881 = vsel %vm280, %v2876, %v2880
      %v2883 = vshrl.u32 %v2791, 16
      %v2885 = vrot.slane %v2883, 4
      %v2886 = vshll.u32 %v2791, 16
      %v2888 = vrot.slane %v2886, 5
      %v2889 = vor.u32 %v2885, %v2888
      %v2890 = vrot.slane %v2889, 4
      %v2892 = vshll.u32 %v2792, 16
      %v2894 = vrot.slane %v2892, 5
      %v2895 = vsel %vm280, %v2890, %v2894
      %v2896 = vshrl.u32 %v2792, 16
      %v2898 = vrot.slane %v2896, 4
      %v2899 = vor.u32 %v2898, %v2894
      %v2900 = vrot.slane %v2899, 4
      %v2902 = vshll.u32 %v2805, 16
      %v2904 = vrot.slane %v2902, 5
      %v2905 = vsel %vm280, %v2900, %v2904
      %v2907 = vshrl.u32 %v2793, 16
      %v2909 = vrot.slane %v2907, 4
      %v2910 = vshll.u32 %v2793, 16
      %v2912 = vrot.slane %v2910, 5
      %v2913 = vor.u32 %v2909, %v2912
      %v2914 = vrot.slane %v2913, 4
      %v2916 = vshll.u32 %v2794, 16
      %v2918 = vrot.slane %v2916, 5
      %v2919 = vsel %vm280, %v2914, %v2918
      %v2920 = vshrl.u32 %v2794, 16
      %v2922 = vrot.slane %v2920, 4
      %v2923 = vor.u32 %v2922, %v2918
      %v2924 = vrot.slane %v2923, 4
      %v2926 = vshll.u32 %v2806, 16
      %v2928 = vrot.slane %v2926, 5
      %v2929 = vsel %vm280, %v2924, %v2928
      %v2931 = vshrl.u32 %v2795, 16
      %v2933 = vrot.slane %v2931, 4
      %v2934 = vshll.u32 %v2795, 16
      %v2936 = vrot.slane %v2934, 5
      %v2937 = vor.u32 %v2933, %v2936
      %v2938 = vrot.slane %v2937, 4
      %v2940 = vshll.u32 %v2796, 16
      %v2942 = vrot.slane %v2940, 5
      %v2943 = vsel %vm280, %v2938, %v2942
      %v2944 = vshrl.u32 %v2796, 16
      %v2946 = vrot.slane %v2944, 4
      %v2947 = vor.u32 %v2946, %v2942
      %v2948 = vrot.slane %v2947, 4
      %v2950 = vshll.u32 %v2807, 16
      %v2952 = vrot.slane %v2950, 5
      %v2953 = vsel %vm280, %v2948, %v2952
      %v2955 = vshrl.u32 %v2797, 16
      %v2957 = vrot.slane %v2955, 4
      %v2958 = vshll.u32 %v2797, 16
      %v2960 = vrot.slane %v2958, 5
      %v2961 = vor.u32 %v2957, %v2960
      %v2962 = vrot.slane %v2961, 4
      %v2964 = vshll.u32 %v2798, 16
      %v2966 = vrot.slane %v2964, 5
      %v2967 = vsel %vm280, %v2962, %v2966
      %v2968 = vshrl.u32 %v2798, 16
      %v2970 = vrot.slane %v2968, 4
      %v2971 = vor.u32 %v2970, %v2966
      %v2972 = vrot.slane %v2971, 4
      %v2974 = vshll.u32 %v2808, 16
      %v2976 = vrot.slane %v2974, 5
      %v2977 = vsel %vm280, %v2972, %v2976
      %v2979 = vshrl.u32 %v2799, 16
      %v2981 = vrot.slane %v2979, 4
      %v2982 = vshll.u32 %v2799, 16
      %v2984 = vrot.slane %v2982, 5
      %v2985 = vor.u32 %v2981, %v2984
      %v2986 = vrot.slane %v2985, 4
      %v2988 = vshll.u32 %v2800, 16
      %v2990 = vrot.slane %v2988, 5
      %v2991 = vsel %vm280, %v2986, %v2990
      %v2992 = vshrl.u32 %v2800, 16
      %v2994 = vrot.slane %v2992, 4
      %v2995 = vor.u32 %v2994, %v2990
      %v2996 = vrot.slane %v2995, 4
      %v2998 = vshll.u32 %v2809, 16
      %v3000 = vrot.slane %v2998, 5
      %v3001 = vsel %vm280, %v2996, %v3000
      %v3002 = vld [vmem:[%s473] sm:$0x3]
      %v3003 = vunpack.c.l.b16 %v2823
      %v3004 = vunpack.c.l.b16 %v2833
      %v3005 = vunpack.c.l.b16 %v2847
      %v3006 = vunpack.c.l.b16 %v2857
      %v3007 = vunpack.c.l.b16 %v2871
      %v3008 = vunpack.c.l.b16 %v2881
      %v3009 = vunpack.c.l.b16 %v2895
      %v3010 = vunpack.c.l.b16 %v2905
      %v3011 = vunpack.c.l.b16 %v2919
      %v3012 = vunpack.c.l.b16 %v2929
      %v3013 = vunpack.c.l.b16 %v2943
      %v3014 = vunpack.c.l.b16 %v2953
      %v3015 = vunpack.c.l.b16 %v2967
      %v3016 = vunpack.c.l.b16 %v2977
      %v3017 = vunpack.c.l.b16 %v2991
      %v3018 = vunpack.c.l.b16 %v3001
      %v3019 = vpack.c.b16 %v3004, %v3003
      %v3020 = vpack.c.b16 %v3006, %v3005
      %v3021 = vpack.c.b16 %v3008, %v3007
      %v3022 = vpack.c.b16 %v3010, %v3009
      %v3023 = vpack.c.b16 %v3012, %v3011
      %v3024 = vpack.c.b16 %v3014, %v3013
      %v3025 = vpack.c.b16 %v3016, %v3015
      %v3026 = vpack.c.b16 %v3018, %v3017
      %v3028 = vsel %vm499, %v3019, 0
      %v3031 = vsel %vm499, %v3020, 0
      %v3034 = vsel %vm499, %v3021, 0
      %v3037 = vsel %vm499, %v3022, 0
      %v3040 = vsel %vm499, %v3023, 0
      %v3043 = vsel %vm499, %v3024, 0
      %v3046 = vsel %vm499, %v3025, 0
      %v3049 = vsel %vm499, %v3026, 0
      %v3052 = vsel %vm524, %v3002, 0
      %3054 = vmatprep.subr.bf16.mxu0 0
      %3055 = vmatpush1.bf16.msra.mxu0 %v3052
      %3056 = vmatprep.subr.bf16.mxu0 0
      %3057 = vmatpush1.bf16.msra.mxu0 0
      %3058 = vmatprep.subr.bf16.mxu0 0
      %3059 = vmatpush1.bf16.msra.mxu0 0
      %3060 = vmatprep.subr.bf16.mxu0 0
      %3061 = vmatpush1.bf16.msra.mxu0 0
      %3062 = vmatprep.subr.bf16.mxu0 0
      %3063 = vmatpush1.bf16.msra.mxu0 0
      %3064 = vmatprep.subr.bf16.mxu0 0
      %3065 = vmatpush1.bf16.msra.mxu0 0
      %3066 = vmatprep.subr.bf16.mxu0 0
      %3067 = vmatpush1.bf16.msra.mxu0 0
      %3068 = vmatprep.subr.bf16.mxu0 0
      %3069 = vmatpush1.bf16.msra.mxu0 0
      %3070 = vmatprep.subr.bf16.mxu0 0
      %3071 = vmatpush1.bf16.msra.mxu0 0
      %3072 = vmatprep.subr.bf16.mxu0 0
      %3073 = vmatpush1.bf16.msra.mxu0 0
      %3074 = vmatprep.subr.bf16.mxu0 0
      %3075 = vmatpush1.bf16.msra.mxu0 0
      %3076 = vmatprep.subr.bf16.mxu0 0
      %3077 = vmatpush1.bf16.msra.mxu0 0
      %3078 = vmatprep.subr.bf16.mxu0 0
      %3079 = vmatpush1.bf16.msra.mxu0 0
      %3080 = vmatprep.subr.bf16.mxu0 0
      %3081 = vmatpush1.bf16.msra.mxu0 0
      %3082 = vmatprep.subr.bf16.mxu0 0
      %3083 = vmatpush1.bf16.msra.mxu0 0
      %3084 = vmatprep.subr.bf16.mxu0 0
      %3085 = vmatpush1.bf16.msra.mxu0 0
      %3086 = vmatprep.mubr.bf16.mxu0 0
      %3087 = vmatmul.mubr.bf16.gmra.mrb[0].mxu0 %v3028
      %v3088 = vpop.f32.mrb[0].mxu0
      %v3089 = vadd.f32 0.0, %v3088
      %v3090 = vpop.f32.mrb[0].mxu0
      %v3091 = vpop.f32.mrb[0].mxu0
      %v3092 = vadd.f32 0.0, %v3091
      %v3093 = vpop.f32.mrb[0].mxu0
      %3094 = vmatprep.mubr.bf16.mxu0 0
      %3095 = vmatmul.mubr.bf16.gmra.mrb[0].mxu0 %v3031
      %v3096 = vpop.f32.mrb[0].mxu0
      %v3097 = vadd.f32 0.0, %v3096
      %v3098 = vpop.f32.mrb[0].mxu0
      %v3099 = vpop.f32.mrb[0].mxu0
      %v3100 = vadd.f32 0.0, %v3099
      %v3101 = vpop.f32.mrb[0].mxu0
      %3102 = vmatprep.mubr.bf16.mxu0 0
      %3103 = vmatmul.mubr.bf16.gmra.mrb[0].mxu0 %v3034
      %v3104 = vpop.f32.mrb[0].mxu0
      %v3105 = vadd.f32 0.0, %v3104
      %v3106 = vpop.f32.mrb[0].mxu0
      %v3107 = vpop.f32.mrb[0].mxu0
      %v3108 = vadd.f32 0.0, %v3107
      %v3109 = vpop.f32.mrb[0].mxu0
      %3110 = vmatprep.mubr.bf16.mxu0 0
      %3111 = vmatmul.mubr.bf16.gmra.mrb[0].mxu0 %v3037
      %v3112 = vpop.f32.mrb[0].mxu0
      %v3113 = vadd.f32 0.0, %v3112
      %v3114 = vpop.f32.mrb[0].mxu0
      %v3115 = vpop.f32.mrb[0].mxu0
      %v3116 = vadd.f32 0.0, %v3115
      %v3117 = vpop.f32.mrb[0].mxu0
      %3118 = vmatprep.mubr.bf16.mxu0 0
      %3119 = vmatmul.mubr.bf16.gmra.mrb[0].mxu0 %v3040
      %v3120 = vpop.f32.mrb[0].mxu0
      %v3121 = vadd.f32 0.0, %v3120
      %v3122 = vpop.f32.mrb[0].mxu0
      %v3123 = vpop.f32.mrb[0].mxu0
      %v3124 = vadd.f32 0.0, %v3123
      %v3125 = vpop.f32.mrb[0].mxu0
      %3126 = vmatprep.mubr.bf16.mxu0 0
      %3127 = vmatmul.mubr.bf16.gmra.mrb[0].mxu0 %v3043
      %v3128 = vpop.f32.mrb[0].mxu0
      %v3129 = vadd.f32 0.0, %v3128
      %v3130 = vpop.f32.mrb[0].mxu0
      %v3131 = vpop.f32.mrb[0].mxu0
      %v3132 = vadd.f32 0.0, %v3131
      %v3133 = vpop.f32.mrb[0].mxu0
      %3134 = vmatprep.mubr.bf16.mxu0 0
      %3135 = vmatmul.mubr.bf16.gmra.mrb[0].mxu0 %v3046
      %v3136 = vpop.f32.mrb[0].mxu0
      %v3137 = vadd.f32 0.0, %v3136
      %v3138 = vpop.f32.mrb[0].mxu0
      %v3139 = vpop.f32.mrb[0].mxu0
      %v3140 = vadd.f32 0.0, %v3139
      %v3141 = vpop.f32.mrb[0].mxu0
      %3142 = vmatprep.mubr.bf16.mxu0 0
      %3143 = vmatmul.mubr.bf16.gmra.mrb[0].mxu0 %v3049
      %v3144 = vpop.f32.mrb[0].mxu0
      %v3145 = vadd.f32 0.0, %v3144
      %v3146 = vpop.f32.mrb[0].mxu0
      %v3147 = vpop.f32.mrb[0].mxu0
      %v3148 = vadd.f32 0.0, %v3147
      %v3149 = vpop.f32.mrb[0].mxu0
      %3150 = vdwg.mxu0
      %v3167 = vunpack.c.l.b16 %v2785
      %v3168 = vunpack.c.l.b16 %v2786
      %v3169 = vunpack.c.l.b16 %v2787
      %v3170 = vunpack.c.l.b16 %v2788
      %v3171 = vunpack.c.l.b16 %v2789
      %v3172 = vunpack.c.l.b16 %v2790
      %v3173 = vunpack.c.l.b16 %v2791
      %v3174 = vunpack.c.l.b16 %v2792
      %v3175 = vunpack.c.l.b16 %v2793
      %v3176 = vunpack.c.l.b16 %v2794
      %v3177 = vunpack.c.l.b16 %v2795
      %v3178 = vunpack.c.l.b16 %v2796
      %v3179 = vunpack.c.l.b16 %v2797
      %v3180 = vunpack.c.l.b16 %v2798
      %v3181 = vunpack.c.l.b16 %v2799
      %v3182 = vunpack.c.l.b16 %v2800
      %v3183 = vpack.c.b16 %v3168, %v3167
      %v3184 = vpack.c.b16 %v3170, %v3169
      %v3185 = vpack.c.b16 %v3172, %v3171
      %v3186 = vpack.c.b16 %v3174, %v3173
      %v3187 = vpack.c.b16 %v3176, %v3175
      %v3188 = vpack.c.b16 %v3178, %v3177
      %v3189 = vpack.c.b16 %v3180, %v3179
      %v3190 = vpack.c.b16 %v3182, %v3181
      %v3192 = vsel %vm499, %v3183, 0
      %v3195 = vsel %vm499, %v3184, 0
      %v3198 = vsel %vm499, %v3185, 0
      %v3201 = vsel %vm499, %v3186, 0
      %v3204 = vsel %vm499, %v3187, 0
      %v3207 = vsel %vm499, %v3188, 0
      %v3210 = vsel %vm499, %v3189, 0
      %v3213 = vsel %vm499, %v3190, 0
      %v3216 = vsel %vm524, %v2801, 0
      %3218 = vmatprep.subr.bf16.mxu0 0
      %3219 = vmatpush1.bf16.msra.mxu0 %v3216
      %3220 = vmatprep.subr.bf16.mxu0 0
      %3221 = vmatpush1.bf16.msra.mxu0 0
      %3222 = vmatprep.subr.bf16.mxu0 0
      %3223 = vmatpush1.bf16.msra.mxu0 0
      %3224 = vmatprep.subr.bf16.mxu0 0
      %3225 = vmatpush1.bf16.msra.mxu0 0
      %3226 = vmatprep.subr.bf16.mxu0 0
      %3227 = vmatpush1.bf16.msra.mxu0 0
      %3228 = vmatprep.subr.bf16.mxu0 0
      %3229 = vmatpush1.bf16.msra.mxu0 0
      %3230 = vmatprep.subr.bf16.mxu0 0
      %3231 = vmatpush1.bf16.msra.mxu0 0
      %3232 = vmatprep.subr.bf16.mxu0 0
      %3233 = vmatpush1.bf16.msra.mxu0 0
      %3234 = vmatprep.subr.bf16.mxu0 0
      %3235 = vmatpush1.bf16.msra.mxu0 0
      %3236 = vmatprep.subr.bf16.mxu0 0
      %3237 = vmatpush1.bf16.msra.mxu0 0
      %3238 = vmatprep.subr.bf16.mxu0 0
      %3239 = vmatpush1.bf16.msra.mxu0 0
      %3240 = vmatprep.subr.bf16.mxu0 0
      %3241 = vmatpush1.bf16.msra.mxu0 0
      %3242 = vmatprep.subr.bf16.mxu0 0
      %3243 = vmatpush1.bf16.msra.mxu0 0
      %3244 = vmatprep.subr.bf16.mxu0 0
      %3245 = vmatpush1.bf16.msra.mxu0 0
      %3246 = vmatprep.subr.bf16.mxu0 0
      %3247 = vmatpush1.bf16.msra.mxu0 0
      %3248 = vmatprep.subr.bf16.mxu0 0
      %3249 = vmatpush1.bf16.msra.mxu0 0
      %3250 = vmatprep.mubr.bf16.mxu0 0
      %3251 = vmatmul.mubr.bf16.gmra.mrb[0].mxu0 %v3192
      %v3252 = vpop.f32.mrb[0].mxu0
      %v3253 = vadd.f32 %v3089, %v3252
      %v3254 = vpop.f32.mrb[0].mxu0
      %v3255 = vpop.f32.mrb[0].mxu0
      %v3256 = vadd.f32 %v3092, %v3255
      %v3257 = vpop.f32.mrb[0].mxu0
      %3258 = vmatprep.mubr.bf16.mxu0 0
      %3259 = vmatmul.mubr.bf16.gmra.mrb[0].mxu0 %v3195
      %v3260 = vpop.f32.mrb[0].mxu0
      %v3261 = vadd.f32 %v3097, %v3260
      %v3262 = vpop.f32.mrb[0].mxu0
      %v3263 = vpop.f32.mrb[0].mxu0
      %v3264 = vadd.f32 %v3100, %v3263
      %v3265 = vpop.f32.mrb[0].mxu0
      %3266 = vmatprep.mubr.bf16.mxu0 0
      %3267 = vmatmul.mubr.bf16.gmra.mrb[0].mxu0 %v3198
      %v3268 = vpop.f32.mrb[0].mxu0
      %v3269 = vadd.f32 %v3105, %v3268
      %v3270 = vpop.f32.mrb[0].mxu0
      %v3271 = vpop.f32.mrb[0].mxu0
      %v3272 = vadd.f32 %v3108, %v3271
      %v3273 = vpop.f32.mrb[0].mxu0
      %3274 = vmatprep.mubr.bf16.mxu0 0
      %3275 = vmatmul.mubr.bf16.gmra.mrb[0].mxu0 %v3201
      %v3276 = vpop.f32.mrb[0].mxu0
      %v3277 = vadd.f32 %v3113, %v3276
      %v3278 = vpop.f32.mrb[0].mxu0
      %v3279 = vpop.f32.mrb[0].mxu0
      %v3280 = vadd.f32 %v3116, %v3279
      %v3281 = vpop.f32.mrb[0].mxu0
      %3282 = vmatprep.mubr.bf16.mxu0 0
      %3283 = vmatmul.mubr.bf16.gmra.mrb[0].mxu0 %v3204
      %v3284 = vpop.f32.mrb[0].mxu0
      %v3285 = vadd.f32 %v3121, %v3284
      %v3286 = vpop.f32.mrb[0].mxu0
      %v3287 = vpop.f32.mrb[0].mxu0
      %v3288 = vadd.f32 %v3124, %v3287
      %v3289 = vpop.f32.mrb[0].mxu0
      %3290 = vmatprep.mubr.bf16.mxu0 0
      %3291 = vmatmul.mubr.bf16.gmra.mrb[0].mxu0 %v3207
      %v3292 = vpop.f32.mrb[0].mxu0
      %v3293 = vadd.f32 %v3129, %v3292
      %v3294 = vpop.f32.mrb[0].mxu0
      %v3295 = vpop.f32.mrb[0].mxu0
      %v3296 = vadd.f32 %v3132, %v3295
      %v3297 = vpop.f32.mrb[0].mxu0
      %3298 = vmatprep.mubr.bf16.mxu0 0
      %3299 = vmatmul.mubr.bf16.gmra.mrb[0].mxu0 %v3210
      %v3300 = vpop.f32.mrb[0].mxu0
      %v3301 = vadd.f32 %v3137, %v3300
      %v3302 = vpop.f32.mrb[0].mxu0
      %v3303 = vpop.f32.mrb[0].mxu0
      %v3304 = vadd.f32 %v3140, %v3303
      %v3305 = vpop.f32.mrb[0].mxu0
      %3306 = vmatprep.mubr.bf16.mxu0 0
      %3307 = vmatmul.mubr.bf16.gmra.mrb[0].mxu0 %v3213
      %v3308 = vpop.f32.mrb[0].mxu0
      %v3309 = vadd.f32 %v3145, %v3308
      %v3310 = vpop.f32.mrb[0].mxu0
      %v3311 = vpop.f32.mrb[0].mxu0
      %v3312 = vadd.f32 %v3148, %v3311
      %v3313 = vpop.f32.mrb[0].mxu0
      %3314 = vdwg.mxu0
      %v3315 = vld [vmem:[%s2784] sm:$0xe]
      %v3316 = vld [vmem:[%s2784 + $0xc] sm:$0xe]
      %v3317 = vld [vmem:[%s2784 + $0x18] sm:$0xe]
      %v3318 = vld [vmem:[%s2784 + $0x24] sm:$0xe]
      %v3319 = vld [vmem:[%s2784 + $0x30] sm:$0xe]
      %v3320 = vld [vmem:[%s2784 + $0x3c] sm:$0xe]
      %v3321 = vld [vmem:[%s2784 + $0x48] sm:$0xe]
      %v3322 = vld [vmem:[%s2784 + $0x54] sm:$0xe]
      %v3339 = vrot.slane %v3315, 5
      %v3340 = vrot.slane %v3339, 4
      %v3341 = vrot.slane %v2786, 5
      %v3342 = vsel %vm815, %v3340, %v3341
      %v3343 = vrot.slane %v3341, 4
      %v3344 = vrot.slane %v2802, 5
      %v3345 = vsel %vm815, %v3343, %v3344
      %v3346 = vrot.slane %v3316, 5
      %v3347 = vrot.slane %v3346, 4
      %v3348 = vrot.slane %v2788, 5
      %v3349 = vsel %vm815, %v3347, %v3348
      %v3350 = vrot.slane %v3348, 4
      %v3351 = vrot.slane %v2803, 5
      %v3352 = vsel %vm815, %v3350, %v3351
      %v3353 = vrot.slane %v3317, 5
      %v3354 = vrot.slane %v3353, 4
      %v3355 = vrot.slane %v2790, 5
      %v3356 = vsel %vm815, %v3354, %v3355
      %v3357 = vrot.slane %v3355, 4
      %v3358 = vrot.slane %v2804, 5
      %v3359 = vsel %vm815, %v3357, %v3358
      %v3360 = vrot.slane %v3318, 5
      %v3361 = vrot.slane %v3360, 4
      %v3362 = vrot.slane %v2792, 5
      %v3363 = vsel %vm815, %v3361, %v3362
      %v3364 = vrot.slane %v3362, 4
      %v3365 = vrot.slane %v2805, 5
      %v3366 = vsel %vm815, %v3364, %v3365
      %v3367 = vrot.slane %v3319, 5
      %v3368 = vrot.slane %v3367, 4
      %v3369 = vrot.slane %v2794, 5
      %v3370 = vsel %vm815, %v3368, %v3369
      %v3371 = vrot.slane %v3369, 4
      %v3372 = vrot.slane %v2806, 5
      %v3373 = vsel %vm815, %v3371, %v3372
      %v3374 = vrot.slane %v3320, 5
      %v3375 = vrot.slane %v3374, 4
      %v3376 = vrot.slane %v2796, 5
      %v3377 = vsel %vm815, %v3375, %v3376
      %v3378 = vrot.slane %v3376, 4
      %v3379 = vrot.slane %v2807, 5
      %v3380 = vsel %vm815, %v3378, %v3379
      %v3381 = vrot.slane %v3321, 5
      %v3382 = vrot.slane %v3381, 4
      %v3383 = vrot.slane %v2798, 5
      %v3384 = vsel %vm815, %v3382, %v3383
      %v3385 = vrot.slane %v3383, 4
      %v3386 = vrot.slane %v2808, 5
      %v3387 = vsel %vm815, %v3385, %v3386
      %v3388 = vrot.slane %v3322, 5
      %v3389 = vrot.slane %v3388, 4
      %v3390 = vrot.slane %v2800, 5
      %v3391 = vsel %vm815, %v3389, %v3390
      %v3392 = vrot.slane %v3390, 4
      %v3393 = vrot.slane %v2809, 5
      %v3394 = vsel %vm815, %v3392, %v3393
      %v3395 = vld [vmem:[%s872] sm:$0x3]
      %v3396 = vunpack.c.l.b16 %v3342
      %v3397 = vunpack.c.l.b16 %v3345
      %v3398 = vunpack.c.l.b16 %v3349
      %v3399 = vunpack.c.l.b16 %v3352
      %v3400 = vunpack.c.l.b16 %v3356
      %v3401 = vunpack.c.l.b16 %v3359
      %v3402 = vunpack.c.l.b16 %v3363
      %v3403 = vunpack.c.l.b16 %v3366
      %v3404 = vunpack.c.l.b16 %v3370
      %v3405 = vunpack.c.l.b16 %v3373
      %v3406 = vunpack.c.l.b16 %v3377
      %v3407 = vunpack.c.l.b16 %v3380
      %v3408 = vunpack.c.l.b16 %v3384
      %v3409 = vunpack.c.l.b16 %v3387
      %v3410 = vunpack.c.l.b16 %v3391
      %v3411 = vunpack.c.l.b16 %v3394
      %v3412 = vpack.c.b16 %v3397, %v3396
      %v3413 = vpack.c.b16 %v3399, %v3398
      %v3414 = vpack.c.b16 %v3401, %v3400
      %v3415 = vpack.c.b16 %v3403, %v3402
      %v3416 = vpack.c.b16 %v3405, %v3404
      %v3417 = vpack.c.b16 %v3407, %v3406
      %v3418 = vpack.c.b16 %v3409, %v3408
      %v3419 = vpack.c.b16 %v3411, %v3410
      %v3421 = vsel %vm499, %v3412, 0
      %v3424 = vsel %vm499, %v3413, 0
      %v3427 = vsel %vm499, %v3414, 0
      %v3430 = vsel %vm499, %v3415, 0
      %v3433 = vsel %vm499, %v3416, 0
      %v3436 = vsel %vm499, %v3417, 0
      %v3439 = vsel %vm499, %v3418, 0
      %v3442 = vsel %vm499, %v3419, 0
      %v3445 = vsel %vm524, %v3395, 0
      %3447 = vmatprep.subr.bf16.mxu0 0
      %3448 = vmatpush1.bf16.msra.mxu0 %v3445
      %3449 = vmatprep.subr.bf16.mxu0 0
      %3450 = vmatpush1.bf16.msra.mxu0 0
      %3451 = vmatprep.subr.bf16.mxu0 0
      %3452 = vmatpush1.bf16.msra.mxu0 0
      %3453 = vmatprep.subr.bf16.mxu0 0
      %3454 = vmatpush1.bf16.msra.mxu0 0
      %3455 = vmatprep.subr.bf16.mxu0 0
      %3456 = vmatpush1.bf16.msra.mxu0 0
      %3457 = vmatprep.subr.bf16.mxu0 0
      %3458 = vmatpush1.bf16.msra.mxu0 0
      %3459 = vmatprep.subr.bf16.mxu0 0
      %3460 = vmatpush1.bf16.msra.mxu0 0
      %3461 = vmatprep.subr.bf16.mxu0 0
      %3462 = vmatpush1.bf16.msra.mxu0 0
      %3463 = vmatprep.subr.bf16.mxu0 0
      %3464 = vmatpush1.bf16.msra.mxu0 0
      %3465 = vmatprep.subr.bf16.mxu0 0
      %3466 = vmatpush1.bf16.msra.mxu0 0
      %3467 = vmatprep.subr.bf16.mxu0 0
      %3468 = vmatpush1.bf16.msra.mxu0 0
      %3469 = vmatprep.subr.bf16.mxu0 0
      %3470 = vmatpush1.bf16.msra.mxu0 0
      %3471 = vmatprep.subr.bf16.mxu0 0
      %3472 = vmatpush1.bf16.msra.mxu0 0
      %3473 = vmatprep.subr.bf16.mxu0 0
      %3474 = vmatpush1.bf16.msra.mxu0 0
      %3475 = vmatprep.subr.bf16.mxu0 0
      %3476 = vmatpush1.bf16.msra.mxu0 0
      %3477 = vmatprep.subr.bf16.mxu0 0
      %3478 = vmatpush1.bf16.msra.mxu0 0
      %3479 = vmatprep.mubr.bf16.mxu0 0
      %3480 = vmatmul.mubr.bf16.gmra.mrb[0].mxu0 %v3421
      %v3481 = vpop.f32.mrb[0].mxu0
      %v3482 = vadd.f32 0.0, %v3481
      %v3483 = vpop.f32.mrb[0].mxu0
      %v3484 = vpop.f32.mrb[0].mxu0
      %v3485 = vadd.f32 0.0, %v3484
      %v3486 = vpop.f32.mrb[0].mxu0
      %3487 = vmatprep.mubr.bf16.mxu0 0
      %3488 = vmatmul.mubr.bf16.gmra.mrb[0].mxu0 %v3424
      %v3489 = vpop.f32.mrb[0].mxu0
      %v3490 = vadd.f32 0.0, %v3489
      %v3491 = vpop.f32.mrb[0].mxu0
      %v3492 = vpop.f32.mrb[0].mxu0
      %v3493 = vadd.f32 0.0, %v3492
      %v3494 = vpop.f32.mrb[0].mxu0
      %3495 = vmatprep.mubr.bf16.mxu0 0
      %3496 = vmatmul.mubr.bf16.gmra.mrb[0].mxu0 %v3427
      %v3497 = vpop.f32.mrb[0].mxu0
      %v3498 = vadd.f32 0.0, %v3497
      %v3499 = vpop.f32.mrb[0].mxu0
      %v3500 = vpop.f32.mrb[0].mxu0
      %v3501 = vadd.f32 0.0, %v3500
      %v3502 = vpop.f32.mrb[0].mxu0
      %3503 = vmatprep.mubr.bf16.mxu0 0
      %3504 = vmatmul.mubr.bf16.gmra.mrb[0].mxu0 %v3430
      %v3505 = vpop.f32.mrb[0].mxu0
      %v3506 = vadd.f32 0.0, %v3505
      %v3507 = vpop.f32.mrb[0].mxu0
      %v3508 = vpop.f32.mrb[0].mxu0
      %v3509 = vadd.f32 0.0, %v3508
      %v3510 = vpop.f32.mrb[0].mxu0
      %3511 = vmatprep.mubr.bf16.mxu0 0
      %3512 = vmatmul.mubr.bf16.gmra.mrb[0].mxu0 %v3433
      %v3513 = vpop.f32.mrb[0].mxu0
      %v3514 = vadd.f32 0.0, %v3513
      %v3515 = vpop.f32.mrb[0].mxu0
      %v3516 = vpop.f32.mrb[0].mxu0
      %v3517 = vadd.f32 0.0, %v3516
      %v3518 = vpop.f32.mrb[0].mxu0
      %3519 = vmatprep.mubr.bf16.mxu0 0
      %3520 = vmatmul.mubr.bf16.gmra.mrb[0].mxu0 %v3436
      %v3521 = vpop.f32.mrb[0].mxu0
      %v3522 = vadd.f32 0.0, %v3521
      %v3523 = vpop.f32.mrb[0].mxu0
      %v3524 = vpop.f32.mrb[0].mxu0
      %v3525 = vadd.f32 0.0, %v3524
      %v3526 = vpop.f32.mrb[0].mxu0
      %3527 = vmatprep.mubr.bf16.mxu0 0
      %3528 = vmatmul.mubr.bf16.gmra.mrb[0].mxu0 %v3439
      %v3529 = vpop.f32.mrb[0].mxu0
      %v3530 = vadd.f32 0.0, %v3529
      %v3531 = vpop.f32.mrb[0].mxu0
      %v3532 = vpop.f32.mrb[0].mxu0
      %v3533 = vadd.f32 0.0, %v3532
      %v3534 = vpop.f32.mrb[0].mxu0
      %3535 = vmatprep.mubr.bf16.mxu0 0
      %3536 = vmatmul.mubr.bf16.gmra.mrb[0].mxu0 %v3442
      %v3537 = vpop.f32.mrb[0].mxu0
      %v3538 = vadd.f32 0.0, %v3537
      %v3539 = vpop.f32.mrb[0].mxu0
      %v3540 = vpop.f32.mrb[0].mxu0
      %v3541 = vadd.f32 0.0, %v3540
      %v3542 = vpop.f32.mrb[0].mxu0
      %3543 = vdwg.mxu0
      %v3544 = vadd.f32 %v3253, %v3482
      %v3545 = vadd.f32 %v3256, %v3485
      %v3546 = vadd.f32 %v3261, %v3490
      %v3547 = vadd.f32 %v3264, %v3493
      %v3548 = vadd.f32 %v3269, %v3498
      %v3549 = vadd.f32 %v3272, %v3501
      %v3550 = vadd.f32 %v3277, %v3506
      %v3551 = vadd.f32 %v3280, %v3509
      %v3552 = vadd.f32 %v3285, %v3514
      %v3553 = vadd.f32 %v3288, %v3517
      %v3554 = vadd.f32 %v3293, %v3522
      %v3555 = vadd.f32 %v3296, %v3525
      %v3556 = vadd.f32 %v3301, %v3530
      %v3557 = vadd.f32 %v3304, %v3533
      %v3558 = vadd.f32 %v3309, %v3538
      %v3559 = vadd.f32 %v3312, %v3541
      %s3560 = scalar_lea.vmem %s246, 108
      %v3561 = vld [vmem:[%s3560] sm:$0xf]
      %v3562 = vld [vmem:[%s3560 + $0x4] sm:$0xf]
      %v3563 = vld [vmem:[%s3560 + $0xc] sm:$0xf]
      %v3564 = vld [vmem:[%s3560 + $0x10] sm:$0xf]
      %v3565 = vld [vmem:[%s3560 + $0x18] sm:$0xf]
      %v3566 = vld [vmem:[%s3560 + $0x1c] sm:$0xf]
      %v3567 = vld [vmem:[%s3560 + $0x24] sm:$0xf]
      %v3568 = vld [vmem:[%s3560 + $0x28] sm:$0xf]
      %v3569 = vld [vmem:[%s3560 + $0x30] sm:$0xf]
      %v3570 = vld [vmem:[%s3560 + $0x34] sm:$0xf]
      %v3571 = vld [vmem:[%s3560 + $0x3c] sm:$0xf]
      %v3572 = vld [vmem:[%s3560 + $0x40] sm:$0xf]
      %v3573 = vld [vmem:[%s3560 + $0x48] sm:$0xf]
      %v3574 = vld [vmem:[%s3560 + $0x4c] sm:$0xf]
      %v3575 = vld [vmem:[%s3560 + $0x54] sm:$0xf]
      %v3576 = vld [vmem:[%s3560 + $0x58] sm:$0xf]
      %v3577 = vld [vmem:[%s1055] sm:$0x3]
      %v3594 = vunpack.c.l.b16 %v3561
      %v3595 = vunpack.c.l.b16 %v3562
      %v3596 = vunpack.c.l.b16 %v3563
      %v3597 = vunpack.c.l.b16 %v3564
      %v3598 = vunpack.c.l.b16 %v3565
      %v3599 = vunpack.c.l.b16 %v3566
      %v3600 = vunpack.c.l.b16 %v3567
      %v3601 = vunpack.c.l.b16 %v3568
      %v3602 = vunpack.c.l.b16 %v3569
      %v3603 = vunpack.c.l.b16 %v3570
      %v3604 = vunpack.c.l.b16 %v3571
      %v3605 = vunpack.c.l.b16 %v3572
      %v3606 = vunpack.c.l.b16 %v3573
      %v3607 = vunpack.c.l.b16 %v3574
      %v3608 = vunpack.c.l.b16 %v3575
      %v3609 = vunpack.c.l.b16 %v3576
      %v3610 = vpack.c.b16 %v3595, %v3594
      %v3611 = vpack.c.b16 %v3597, %v3596
      %v3612 = vpack.c.b16 %v3599, %v3598
      %v3613 = vpack.c.b16 %v3601, %v3600
      %v3614 = vpack.c.b16 %v3603, %v3602
      %v3615 = vpack.c.b16 %v3605, %v3604
      %v3616 = vpack.c.b16 %v3607, %v3606
      %v3617 = vpack.c.b16 %v3609, %v3608
      %v3619 = vsel %vm499, %v3610, 0
      %v3622 = vsel %vm499, %v3611, 0
      %v3625 = vsel %vm499, %v3612, 0
      %v3628 = vsel %vm499, %v3613, 0
      %v3631 = vsel %vm499, %v3614, 0
      %v3634 = vsel %vm499, %v3615, 0
      %v3637 = vsel %vm499, %v3616, 0
      %v3640 = vsel %vm499, %v3617, 0
      %v3643 = vsel %vm524, %v3577, 0
      %3645 = vmatprep.subr.bf16.mxu0 0
      %3646 = vmatpush1.bf16.msra.mxu0 %v3643
      %3647 = vmatprep.subr.bf16.mxu0 0
      %3648 = vmatpush1.bf16.msra.mxu0 0
      %3649 = vmatprep.subr.bf16.mxu0 0
      %3650 = vmatpush1.bf16.msra.mxu0 0
      %3651 = vmatprep.subr.bf16.mxu0 0
      %3652 = vmatpush1.bf16.msra.mxu0 0
      %3653 = vmatprep.subr.bf16.mxu0 0
      %3654 = vmatpush1.bf16.msra.mxu0 0
      %3655 = vmatprep.subr.bf16.mxu0 0
      %3656 = vmatpush1.bf16.msra.mxu0 0
      %3657 = vmatprep.subr.bf16.mxu0 0
      %3658 = vmatpush1.bf16.msra.mxu0 0
      %3659 = vmatprep.subr.bf16.mxu0 0
      %3660 = vmatpush1.bf16.msra.mxu0 0
      %3661 = vmatprep.subr.bf16.mxu0 0
      %3662 = vmatpush1.bf16.msra.mxu0 0
      %3663 = vmatprep.subr.bf16.mxu0 0
      %3664 = vmatpush1.bf16.msra.mxu0 0
      %3665 = vmatprep.subr.bf16.mxu0 0
      %3666 = vmatpush1.bf16.msra.mxu0 0
      %3667 = vmatprep.subr.bf16.mxu0 0
      %3668 = vmatpush1.bf16.msra.mxu0 0
      %3669 = vmatprep.subr.bf16.mxu0 0
      %3670 = vmatpush1.bf16.msra.mxu0 0
      %3671 = vmatprep.subr.bf16.mxu0 0
      %3672 = vmatpush1.bf16.msra.mxu0 0
      %3673 = vmatprep.subr.bf16.mxu0 0
      %3674 = vmatpush1.bf16.msra.mxu0 0
      %3675 = vmatprep.subr.bf16.mxu0 0
      %3676 = vmatpush1.bf16.msra.mxu0 0
      %3677 = vmatprep.mubr.bf16.mxu0 0
      %3678 = vmatmul.mubr.bf16.gmra.mrb[0].mxu0 %v3619
      %v3679 = vpop.f32.mrb[0].mxu0
      %v3680 = vadd.f32 0.0, %v3679
      %v3681 = vpop.f32.mrb[0].mxu0
      %v3682 = vpop.f32.mrb[0].mxu0
      %v3683 = vadd.f32 0.0, %v3682
      %v3684 = vpop.f32.mrb[0].mxu0
      %3685 = vmatprep.mubr.bf16.mxu0 0
      %3686 = vmatmul.mubr.bf16.gmra.mrb[0].mxu0 %v3622
      %v3687 = vpop.f32.mrb[0].mxu0
      %v3688 = vadd.f32 0.0, %v3687
      %v3689 = vpop.f32.mrb[0].mxu0
      %v3690 = vpop.f32.mrb[0].mxu0
      %v3691 = vadd.f32 0.0, %v3690
      %v3692 = vpop.f32.mrb[0].mxu0
      %3693 = vmatprep.mubr.bf16.mxu0 0
      %3694 = vmatmul.mubr.bf16.gmra.mrb[0].mxu0 %v3625
      %v3695 = vpop.f32.mrb[0].mxu0
      %v3696 = vadd.f32 0.0, %v3695
      %v3697 = vpop.f32.mrb[0].mxu0
      %v3698 = vpop.f32.mrb[0].mxu0
      %v3699 = vadd.f32 0.0, %v3698
      %v3700 = vpop.f32.mrb[0].mxu0
      %3701 = vmatprep.mubr.bf16.mxu0 0
      %3702 = vmatmul.mubr.bf16.gmra.mrb[0].mxu0 %v3628
      %v3703 = vpop.f32.mrb[0].mxu0
      %v3704 = vadd.f32 0.0, %v3703
      %v3705 = vpop.f32.mrb[0].mxu0
      %v3706 = vpop.f32.mrb[0].mxu0
      %v3707 = vadd.f32 0.0, %v3706
      %v3708 = vpop.f32.mrb[0].mxu0
      %3709 = vmatprep.mubr.bf16.mxu0 0
      %3710 = vmatmul.mubr.bf16.gmra.mrb[0].mxu0 %v3631
      %v3711 = vpop.f32.mrb[0].mxu0
      %v3712 = vadd.f32 0.0, %v3711
      %v3713 = vpop.f32.mrb[0].mxu0
      %v3714 = vpop.f32.mrb[0].mxu0
      %v3715 = vadd.f32 0.0, %v3714
      %v3716 = vpop.f32.mrb[0].mxu0
      %3717 = vmatprep.mubr.bf16.mxu0 0
      %3718 = vmatmul.mubr.bf16.gmra.mrb[0].mxu0 %v3634
      %v3719 = vpop.f32.mrb[0].mxu0
      %v3720 = vadd.f32 0.0, %v3719
      %v3721 = vpop.f32.mrb[0].mxu0
      %v3722 = vpop.f32.mrb[0].mxu0
      %v3723 = vadd.f32 0.0, %v3722
      %v3724 = vpop.f32.mrb[0].mxu0
      %3725 = vmatprep.mubr.bf16.mxu0 0
      %3726 = vmatmul.mubr.bf16.gmra.mrb[0].mxu0 %v3637
      %v3727 = vpop.f32.mrb[0].mxu0
      %v3728 = vadd.f32 0.0, %v3727
      %v3729 = vpop.f32.mrb[0].mxu0
      %v3730 = vpop.f32.mrb[0].mxu0
      %v3731 = vadd.f32 0.0, %v3730
      %v3732 = vpop.f32.mrb[0].mxu0
      %3733 = vmatprep.mubr.bf16.mxu0 0
      %3734 = vmatmul.mubr.bf16.gmra.mrb[0].mxu0 %v3640
      %v3735 = vpop.f32.mrb[0].mxu0
      %v3736 = vadd.f32 0.0, %v3735
      %v3737 = vpop.f32.mrb[0].mxu0
      %v3738 = vpop.f32.mrb[0].mxu0
      %v3739 = vadd.f32 0.0, %v3738
      %v3740 = vpop.f32.mrb[0].mxu0
      %3741 = vdwg.mxu0
      %v3742 = vadd.f32 %v3544, %v3680
      %v3743 = vadd.f32 %v3545, %v3683
      %v3744 = vadd.f32 %v3546, %v3688
      %v3745 = vadd.f32 %v3547, %v3691
      %v3746 = vadd.f32 %v3548, %v3696
      %v3747 = vadd.f32 %v3549, %v3699
      %v3748 = vadd.f32 %v3550, %v3704
      %v3749 = vadd.f32 %v3551, %v3707
      %v3750 = vadd.f32 %v3552, %v3712
      %v3751 = vadd.f32 %v3553, %v3715
      %v3752 = vadd.f32 %v3554, %v3720
      %v3753 = vadd.f32 %v3555, %v3723
      %v3754 = vadd.f32 %v3556, %v3728
      %v3755 = vadd.f32 %v3557, %v3731
      %v3756 = vadd.f32 %v3558, %v3736
      %v3757 = vadd.f32 %v3559, %v3739
      %v3758 = vld [vmem:[%s3560] sm:$0xf]
      %v3759 = vld [vmem:[%s3560 + $0x4] sm:$0xf]
      %v3760 = vld [vmem:[%s3560 + $0x8] sm:$0x1]
      %v3761 = vld [vmem:[%s3560 + $0xc] sm:$0xf]
      %v3762 = vld [vmem:[%s3560 + $0x10] sm:$0xf]
      %v3763 = vld [vmem:[%s3560 + $0x14] sm:$0x1]
      %v3764 = vld [vmem:[%s3560 + $0x18] sm:$0xf]
      %v3765 = vld [vmem:[%s3560 + $0x1c] sm:$0xf]
      %v3766 = vld [vmem:[%s3560 + $0x20] sm:$0x1]
      %v3767 = vld [vmem:[%s3560 + $0x24] sm:$0xf]
      %v3768 = vld [vmem:[%s3560 + $0x28] sm:$0xf]
      %v3769 = vld [vmem:[%s3560 + $0x2c] sm:$0x1]
      %v3770 = vld [vmem:[%s3560 + $0x30] sm:$0xf]
      %v3771 = vld [vmem:[%s3560 + $0x34] sm:$0xf]
      %v3772 = vld [vmem:[%s3560 + $0x38] sm:$0x1]
      %v3773 = vld [vmem:[%s3560 + $0x3c] sm:$0xf]
      %v3774 = vld [vmem:[%s3560 + $0x40] sm:$0xf]
      %v3775 = vld [vmem:[%s3560 + $0x44] sm:$0x1]
      %v3776 = vld [vmem:[%s3560 + $0x48] sm:$0xf]
      %v3777 = vld [vmem:[%s3560 + $0x4c] sm:$0xf]
      %v3778 = vld [vmem:[%s3560 + $0x50] sm:$0x1]
      %v3779 = vld [vmem:[%s3560 + $0x54] sm:$0xf]
      %v3780 = vld [vmem:[%s3560 + $0x58] sm:$0xf]
      %v3781 = vld [vmem:[%s3560 + $0x5c] sm:$0x1]
      %v3783 = vshrl.u32 %v3758, 16
      %v3785 = vrot.slane %v3783, 4
      %v3786 = vshll.u32 %v3758, 16
      %v3788 = vrot.slane %v3786, 5
      %v3789 = vor.u32 %v3785, %v3788
      %v3790 = vrot.slane %v3789, 4
      %v3792 = vshll.u32 %v3759, 16
      %v3794 = vrot.slane %v3792, 5
      %v3795 = vsel %vm280, %v3790, %v3794
      %v3796 = vshrl.u32 %v3759, 16
      %v3798 = vrot.slane %v3796, 4
      %v3799 = vor.u32 %v3798, %v3794
      %v3800 = vrot.slane %v3799, 4
      %v3802 = vshll.u32 %v3760, 16
      %v3804 = vrot.slane %v3802, 5
      %v3805 = vsel %vm280, %v3800, %v3804
      %v3807 = vshrl.u32 %v3761, 16
      %v3809 = vrot.slane %v3807, 4
      %v3810 = vshll.u32 %v3761, 16
      %v3812 = vrot.slane %v3810, 5
      %v3813 = vor.u32 %v3809, %v3812
      %v3814 = vrot.slane %v3813, 4
      %v3816 = vshll.u32 %v3762, 16
      %v3818 = vrot.slane %v3816, 5
      %v3819 = vsel %vm280, %v3814, %v3818
      %v3820 = vshrl.u32 %v3762, 16
      %v3822 = vrot.slane %v3820, 4
      %v3823 = vor.u32 %v3822, %v3818
      %v3824 = vrot.slane %v3823, 4
      %v3826 = vshll.u32 %v3763, 16
      %v3828 = vrot.slane %v3826, 5
      %v3829 = vsel %vm280, %v3824, %v3828
      %v3831 = vshrl.u32 %v3764, 16
      %v3833 = vrot.slane %v3831, 4
      %v3834 = vshll.u32 %v3764, 16
      %v3836 = vrot.slane %v3834, 5
      %v3837 = vor.u32 %v3833, %v3836
      %v3838 = vrot.slane %v3837, 4
      %v3840 = vshll.u32 %v3765, 16
      %v3842 = vrot.slane %v3840, 5
      %v3843 = vsel %vm280, %v3838, %v3842
      %v3844 = vshrl.u32 %v3765, 16
      %v3846 = vrot.slane %v3844, 4
      %v3847 = vor.u32 %v3846, %v3842
      %v3848 = vrot.slane %v3847, 4
      %v3850 = vshll.u32 %v3766, 16
      %v3852 = vrot.slane %v3850, 5
      %v3853 = vsel %vm280, %v3848, %v3852
      %v3855 = vshrl.u32 %v3767, 16
      %v3857 = vrot.slane %v3855, 4
      %v3858 = vshll.u32 %v3767, 16
      %v3860 = vrot.slane %v3858, 5
      %v3861 = vor.u32 %v3857, %v3860
      %v3862 = vrot.slane %v3861, 4
      %v3864 = vshll.u32 %v3768, 16
      %v3866 = vrot.slane %v3864, 5
      %v3867 = vsel %vm280, %v3862, %v3866
      %v3868 = vshrl.u32 %v3768, 16
      %v3870 = vrot.slane %v3868, 4
      %v3871 = vor.u32 %v3870, %v3866
      %v3872 = vrot.slane %v3871, 4
      %v3874 = vshll.u32 %v3769, 16
      %v3876 = vrot.slane %v3874, 5
      %v3877 = vsel %vm280, %v3872, %v3876
      %v3879 = vshrl.u32 %v3770, 16
      %v3881 = vrot.slane %v3879, 4
      %v3882 = vshll.u32 %v3770, 16
      %v3884 = vrot.slane %v3882, 5
      %v3885 = vor.u32 %v3881, %v3884
      %v3886 = vrot.slane %v3885, 4
      %v3888 = vshll.u32 %v3771, 16
      %v3890 = vrot.slane %v3888, 5
      %v3891 = vsel %vm280, %v3886, %v3890
      %v3892 = vshrl.u32 %v3771, 16
      %v3894 = vrot.slane %v3892, 4
      %v3895 = vor.u32 %v3894, %v3890
      %v3896 = vrot.slane %v3895, 4
      %v3898 = vshll.u32 %v3772, 16
      %v3900 = vrot.slane %v3898, 5
      %v3901 = vsel %vm280, %v3896, %v3900
      %v3903 = vshrl.u32 %v3773, 16
      %v3905 = vrot.slane %v3903, 4
      %v3906 = vshll.u32 %v3773, 16
      %v3908 = vrot.slane %v3906, 5
      %v3909 = vor.u32 %v3905, %v3908
      %v3910 = vrot.slane %v3909, 4
      %v3912 = vshll.u32 %v3774, 16
      %v3914 = vrot.slane %v3912, 5
      %v3915 = vsel %vm280, %v3910, %v3914
      %v3916 = vshrl.u32 %v3774, 16
      %v3918 = vrot.slane %v3916, 4
      %v3919 = vor.u32 %v3918, %v3914
      %v3920 = vrot.slane %v3919, 4
      %v3922 = vshll.u32 %v3775, 16
      %v3924 = vrot.slane %v3922, 5
      %v3925 = vsel %vm280, %v3920, %v3924
      %v3927 = vshrl.u32 %v3776, 16
      %v3929 = vrot.slane %v3927, 4
      %v3930 = vshll.u32 %v3776, 16
      %v3932 = vrot.slane %v3930, 5
      %v3933 = vor.u32 %v3929, %v3932
      %v3934 = vrot.slane %v3933, 4
      %v3936 = vshll.u32 %v3777, 16
      %v3938 = vrot.slane %v3936, 5
      %v3939 = vsel %vm280, %v3934, %v3938
      %v3940 = vshrl.u32 %v3777, 16
      %v3942 = vrot.slane %v3940, 4
      %v3943 = vor.u32 %v3942, %v3938
      %v3944 = vrot.slane %v3943, 4
      %v3946 = vshll.u32 %v3778, 16
      %v3948 = vrot.slane %v3946, 5
      %v3949 = vsel %vm280, %v3944, %v3948
      %v3951 = vshrl.u32 %v3779, 16
      %v3953 = vrot.slane %v3951, 4
      %v3954 = vshll.u32 %v3779, 16
      %v3956 = vrot.slane %v3954, 5
      %v3957 = vor.u32 %v3953, %v3956
      %v3958 = vrot.slane %v3957, 4
      %v3960 = vshll.u32 %v3780, 16
      %v3962 = vrot.slane %v3960, 5
      %v3963 = vsel %vm280, %v3958, %v3962
      %v3964 = vshrl.u32 %v3780, 16
      %v3966 = vrot.slane %v3964, 4
      %v3967 = vor.u32 %v3966, %v3962
      %v3968 = vrot.slane %v3967, 4
      %v3970 = vshll.u32 %v3781, 16
      %v3972 = vrot.slane %v3970, 5
      %v3973 = vsel %vm280, %v3968, %v3972
      %v3974 = vld [vmem:[%s1453] sm:$0x3]
      %v3975 = vunpack.c.l.b16 %v3795
      %v3976 = vunpack.c.l.b16 %v3805
      %v3977 = vunpack.c.l.b16 %v3819
      %v3978 = vunpack.c.l.b16 %v3829
      %v3979 = vunpack.c.l.b16 %v3843
      %v3980 = vunpack.c.l.b16 %v3853
      %v3981 = vunpack.c.l.b16 %v3867
      %v3982 = vunpack.c.l.b16 %v3877
      %v3983 = vunpack.c.l.b16 %v3891
      %v3984 = vunpack.c.l.b16 %v3901
      %v3985 = vunpack.c.l.b16 %v3915
      %v3986 = vunpack.c.l.b16 %v3925
      %v3987 = vunpack.c.l.b16 %v3939
      %v3988 = vunpack.c.l.b16 %v3949
      %v3989 = vunpack.c.l.b16 %v3963
      %v3990 = vunpack.c.l.b16 %v3973
      %v3991 = vpack.c.b16 %v3976, %v3975
      %v3992 = vpack.c.b16 %v3978, %v3977
      %v3993 = vpack.c.b16 %v3980, %v3979
      %v3994 = vpack.c.b16 %v3982, %v3981
      %v3995 = vpack.c.b16 %v3984, %v3983
      %v3996 = vpack.c.b16 %v3986, %v3985
      %v3997 = vpack.c.b16 %v3988, %v3987
      %v3998 = vpack.c.b16 %v3990, %v3989
      %v4000 = vsel %vm499, %v3991, 0
      %v4003 = vsel %vm499, %v3992, 0
      %v4006 = vsel %vm499, %v3993, 0
      %v4009 = vsel %vm499, %v3994, 0
      %v4012 = vsel %vm499, %v3995, 0
      %v4015 = vsel %vm499, %v3996, 0
      %v4018 = vsel %vm499, %v3997, 0
      %v4021 = vsel %vm499, %v3998, 0
      %v4024 = vsel %vm524, %v3974, 0
      %4026 = vmatprep.subr.bf16.mxu0 0
      %4027 = vmatpush1.bf16.msra.mxu0 %v4024
      %4028 = vmatprep.subr.bf16.mxu0 0
      %4029 = vmatpush1.bf16.msra.mxu0 0
      %4030 = vmatprep.subr.bf16.mxu0 0
      %4031 = vmatpush1.bf16.msra.mxu0 0
      %4032 = vmatprep.subr.bf16.mxu0 0
      %4033 = vmatpush1.bf16.msra.mxu0 0
      %4034 = vmatprep.subr.bf16.mxu0 0
      %4035 = vmatpush1.bf16.msra.mxu0 0
      %4036 = vmatprep.subr.bf16.mxu0 0
      %4037 = vmatpush1.bf16.msra.mxu0 0
      %4038 = vmatprep.subr.bf16.mxu0 0
      %4039 = vmatpush1.bf16.msra.mxu0 0
      %4040 = vmatprep.subr.bf16.mxu0 0
      %4041 = vmatpush1.bf16.msra.mxu0 0
      %4042 = vmatprep.subr.bf16.mxu0 0
      %4043 = vmatpush1.bf16.msra.mxu0 0
      %4044 = vmatprep.subr.bf16.mxu0 0
      %4045 = vmatpush1.bf16.msra.mxu0 0
      %4046 = vmatprep.subr.bf16.mxu0 0
      %4047 = vmatpush1.bf16.msra.mxu0 0
      %4048 = vmatprep.subr.bf16.mxu0 0
      %4049 = vmatpush1.bf16.msra.mxu0 0
      %4050 = vmatprep.subr.bf16.mxu0 0
      %4051 = vmatpush1.bf16.msra.mxu0 0
      %4052 = vmatprep.subr.bf16.mxu0 0
      %4053 = vmatpush1.bf16.msra.mxu0 0
      %4054 = vmatprep.subr.bf16.mxu0 0
      %4055 = vmatpush1.bf16.msra.mxu0 0
      %4056 = vmatprep.subr.bf16.mxu0 0
      %4057 = vmatpush1.bf16.msra.mxu0 0
      %4058 = vmatprep.mubr.bf16.mxu0 0
      %4059 = vmatmul.mubr.bf16.gmra.mrb[0].mxu0 %v4000
      %v4060 = vpop.f32.mrb[0].mxu0
      %v4061 = vadd.f32 0.0, %v4060
      %v4062 = vpop.f32.mrb[0].mxu0
      %v4063 = vpop.f32.mrb[0].mxu0
      %v4064 = vadd.f32 0.0, %v4063
      %v4065 = vpop.f32.mrb[0].mxu0
      %4066 = vmatprep.mubr.bf16.mxu0 0
      %4067 = vmatmul.mubr.bf16.gmra.mrb[0].mxu0 %v4003
      %v4068 = vpop.f32.mrb[0].mxu0
      %v4069 = vadd.f32 0.0, %v4068
      %v4070 = vpop.f32.mrb[0].mxu0
      %v4071 = vpop.f32.mrb[0].mxu0
      %v4072 = vadd.f32 0.0, %v4071
      %v4073 = vpop.f32.mrb[0].mxu0
      %4074 = vmatprep.mubr.bf16.mxu0 0
      %4075 = vmatmul.mubr.bf16.gmra.mrb[0].mxu0 %v4006
      %v4076 = vpop.f32.mrb[0].mxu0
      %v4077 = vadd.f32 0.0, %v4076
      %v4078 = vpop.f32.mrb[0].mxu0
      %v4079 = vpop.f32.mrb[0].mxu0
      %v4080 = vadd.f32 0.0, %v4079
      %v4081 = vpop.f32.mrb[0].mxu0
      %4082 = vmatprep.mubr.bf16.mxu0 0
      %4083 = vmatmul.mubr.bf16.gmra.mrb[0].mxu0 %v4009
      %v4084 = vpop.f32.mrb[0].mxu0
      %v4085 = vadd.f32 0.0, %v4084
      %v4086 = vpop.f32.mrb[0].mxu0
      %v4087 = vpop.f32.mrb[0].mxu0
      %v4088 = vadd.f32 0.0, %v4087
      %v4089 = vpop.f32.mrb[0].mxu0
      %4090 = vmatprep.mubr.bf16.mxu0 0
      %4091 = vmatmul.mubr.bf16.gmra.mrb[0].mxu0 %v4012
      %v4092 = vpop.f32.mrb[0].mxu0
      %v4093 = vadd.f32 0.0, %v4092
      %v4094 = vpop.f32.mrb[0].mxu0
      %v4095 = vpop.f32.mrb[0].mxu0
      %v4096 = vadd.f32 0.0, %v4095
      %v4097 = vpop.f32.mrb[0].mxu0
      %4098 = vmatprep.mubr.bf16.mxu0 0
      %4099 = vmatmul.mubr.bf16.gmra.mrb[0].mxu0 %v4015
      %v4100 = vpop.f32.mrb[0].mxu0
      %v4101 = vadd.f32 0.0, %v4100
      %v4102 = vpop.f32.mrb[0].mxu0
      %v4103 = vpop.f32.mrb[0].mxu0
      %v4104 = vadd.f32 0.0, %v4103
      %v4105 = vpop.f32.mrb[0].mxu0
      %4106 = vmatprep.mubr.bf16.mxu0 0
      %4107 = vmatmul.mubr.bf16.gmra.mrb[0].mxu0 %v4018
      %v4108 = vpop.f32.mrb[0].mxu0
      %v4109 = vadd.f32 0.0, %v4108
      %v4110 = vpop.f32.mrb[0].mxu0
      %v4111 = vpop.f32.mrb[0].mxu0
      %v4112 = vadd.f32 0.0, %v4111
      %v4113 = vpop.f32.mrb[0].mxu0
      %4114 = vmatprep.mubr.bf16.mxu0 0
      %4115 = vmatmul.mubr.bf16.gmra.mrb[0].mxu0 %v4021
      %v4116 = vpop.f32.mrb[0].mxu0
      %v4117 = vadd.f32 0.0, %v4116
      %v4118 = vpop.f32.mrb[0].mxu0
      %v4119 = vpop.f32.mrb[0].mxu0
      %v4120 = vadd.f32 0.0, %v4119
      %v4121 = vpop.f32.mrb[0].mxu0
      %4122 = vdwg.mxu0
      %v4123 = vadd.f32 %v3742, %v4061
      %v4124 = vadd.f32 %v3743, %v4064
      %v4125 = vadd.f32 %v3744, %v4069
      %v4126 = vadd.f32 %v3745, %v4072
      %v4127 = vadd.f32 %v3746, %v4077
      %v4128 = vadd.f32 %v3747, %v4080
      %v4129 = vadd.f32 %v3748, %v4085
      %v4130 = vadd.f32 %v3749, %v4088
      %v4131 = vadd.f32 %v3750, %v4093
      %v4132 = vadd.f32 %v3751, %v4096
      %v4133 = vadd.f32 %v3752, %v4101
      %v4134 = vadd.f32 %v3753, %v4104
      %v4135 = vadd.f32 %v3754, %v4109
      %v4136 = vadd.f32 %v3755, %v4112
      %v4137 = vadd.f32 %v3756, %v4117
      %v4138 = vadd.f32 %v3757, %v4120
      %v4139 = vld [vmem:[%s3560] sm:$0xe]
      %v4140 = vld [vmem:[%s3560 + $0xc] sm:$0xe]
      %v4141 = vld [vmem:[%s3560 + $0x18] sm:$0xe]
      %v4142 = vld [vmem:[%s3560 + $0x24] sm:$0xe]
      %v4143 = vld [vmem:[%s3560 + $0x30] sm:$0xe]
      %v4144 = vld [vmem:[%s3560 + $0x3c] sm:$0xe]
      %v4145 = vld [vmem:[%s3560 + $0x48] sm:$0xe]
      %v4146 = vld [vmem:[%s3560 + $0x54] sm:$0xe]
      %v4171 = vrot.slane %v4139, 5
      %v4172 = vrot.slane %v4171, 4
      %v4173 = vrot.slane %v3759, 5
      %v4174 = vsel %vm815, %v4172, %v4173
      %v4175 = vrot.slane %v4173, 4
      %v4176 = vrot.slane %v3760, 5
      %v4177 = vsel %vm815, %v4175, %v4176
      %v4178 = vrot.slane %v4140, 5
      %v4179 = vrot.slane %v4178, 4
      %v4180 = vrot.slane %v3762, 5
      %v4181 = vsel %vm815, %v4179, %v4180
      %v4182 = vrot.slane %v4180, 4
      %v4183 = vrot.slane %v3763, 5
      %v4184 = vsel %vm815, %v4182, %v4183
      %v4185 = vrot.slane %v4141, 5
      %v4186 = vrot.slane %v4185, 4
      %v4187 = vrot.slane %v3765, 5
      %v4188 = vsel %vm815, %v4186, %v4187
      %v4189 = vrot.slane %v4187, 4
      %v4190 = vrot.slane %v3766, 5
      %v4191 = vsel %vm815, %v4189, %v4190
      %v4192 = vrot.slane %v4142, 5
      %v4193 = vrot.slane %v4192, 4
      %v4194 = vrot.slane %v3768, 5
      %v4195 = vsel %vm815, %v4193, %v4194
      %v4196 = vrot.slane %v4194, 4
      %v4197 = vrot.slane %v3769, 5
      %v4198 = vsel %vm815, %v4196, %v4197
      %v4199 = vrot.slane %v4143, 5
      %v4200 = vrot.slane %v4199, 4
      %v4201 = vrot.slane %v3771, 5
      %v4202 = vsel %vm815, %v4200, %v4201
      %v4203 = vrot.slane %v4201, 4
      %v4204 = vrot.slane %v3772, 5
      %v4205 = vsel %vm815, %v4203, %v4204
      %v4206 = vrot.slane %v4144, 5
      %v4207 = vrot.slane %v4206, 4
      %v4208 = vrot.slane %v3774, 5
      %v4209 = vsel %vm815, %v4207, %v4208
      %v4210 = vrot.slane %v4208, 4
      %v4211 = vrot.slane %v3775, 5
      %v4212 = vsel %vm815, %v4210, %v4211
      %v4213 = vrot.slane %v4145, 5
      %v4214 = vrot.slane %v4213, 4
      %v4215 = vrot.slane %v3777, 5
      %v4216 = vsel %vm815, %v4214, %v4215
      %v4217 = vrot.slane %v4215, 4
      %v4218 = vrot.slane %v3778, 5
      %v4219 = vsel %vm815, %v4217, %v4218
      %v4220 = vrot.slane %v4146, 5
      %v4221 = vrot.slane %v4220, 4
      %v4222 = vrot.slane %v3780, 5
      %v4223 = vsel %vm815, %v4221, %v4222
      %v4224 = vrot.slane %v4222, 4
      %v4225 = vrot.slane %v3781, 5
      %v4226 = vsel %vm815, %v4224, %v4225
      %v4227 = vld [vmem:[%s1707] sm:$0x3]
      %v4228 = vunpack.c.l.b16 %v4174
      %v4229 = vunpack.c.l.b16 %v4177
      %v4230 = vunpack.c.l.b16 %v4181
      %v4231 = vunpack.c.l.b16 %v4184
      %v4232 = vunpack.c.l.b16 %v4188
      %v4233 = vunpack.c.l.b16 %v4191
      %v4234 = vunpack.c.l.b16 %v4195
      %v4235 = vunpack.c.l.b16 %v4198
      %v4236 = vunpack.c.l.b16 %v4202
      %v4237 = vunpack.c.l.b16 %v4205
      %v4238 = vunpack.c.l.b16 %v4209
      %v4239 = vunpack.c.l.b16 %v4212
      %v4240 = vunpack.c.l.b16 %v4216
      %v4241 = vunpack.c.l.b16 %v4219
      %v4242 = vunpack.c.l.b16 %v4223
      %v4243 = vunpack.c.l.b16 %v4226
      %v4244 = vpack.c.b16 %v4229, %v4228
      %v4245 = vpack.c.b16 %v4231, %v4230
      %v4246 = vpack.c.b16 %v4233, %v4232
      %v4247 = vpack.c.b16 %v4235, %v4234
      %v4248 = vpack.c.b16 %v4237, %v4236
      %v4249 = vpack.c.b16 %v4239, %v4238
      %v4250 = vpack.c.b16 %v4241, %v4240
      %v4251 = vpack.c.b16 %v4243, %v4242
      %v4253 = vsel %vm499, %v4244, 0
      %v4256 = vsel %vm499, %v4245, 0
      %v4259 = vsel %vm499, %v4246, 0
      %v4262 = vsel %vm499, %v4247, 0
      %v4265 = vsel %vm499, %v4248, 0
      %v4268 = vsel %vm499, %v4249, 0
      %v4271 = vsel %vm499, %v4250, 0
      %v4274 = vsel %vm499, %v4251, 0
      %v4277 = vsel %vm524, %v4227, 0
      %4279 = vmatprep.subr.bf16.mxu0 0
      %4280 = vmatpush1.bf16.msra.mxu0 %v4277
      %4281 = vmatprep.subr.bf16.mxu0 0
      %4282 = vmatpush1.bf16.msra.mxu0 0
      %4283 = vmatprep.subr.bf16.mxu0 0
      %4284 = vmatpush1.bf16.msra.mxu0 0
      %4285 = vmatprep.subr.bf16.mxu0 0
      %4286 = vmatpush1.bf16.msra.mxu0 0
      %4287 = vmatprep.subr.bf16.mxu0 0
      %4288 = vmatpush1.bf16.msra.mxu0 0
      %4289 = vmatprep.subr.bf16.mxu0 0
      %4290 = vmatpush1.bf16.msra.mxu0 0
      %4291 = vmatprep.subr.bf16.mxu0 0
      %4292 = vmatpush1.bf16.msra.mxu0 0
      %4293 = vmatprep.subr.bf16.mxu0 0
      %4294 = vmatpush1.bf16.msra.mxu0 0
      %4295 = vmatprep.subr.bf16.mxu0 0
      %4296 = vmatpush1.bf16.msra.mxu0 0
      %4297 = vmatprep.subr.bf16.mxu0 0
      %4298 = vmatpush1.bf16.msra.mxu0 0
      %4299 = vmatprep.subr.bf16.mxu0 0
      %4300 = vmatpush1.bf16.msra.mxu0 0
      %4301 = vmatprep.subr.bf16.mxu0 0
      %4302 = vmatpush1.bf16.msra.mxu0 0
      %4303 = vmatprep.subr.bf16.mxu0 0
      %4304 = vmatpush1.bf16.msra.mxu0 0
      %4305 = vmatprep.subr.bf16.mxu0 0
      %4306 = vmatpush1.bf16.msra.mxu0 0
      %4307 = vmatprep.subr.bf16.mxu0 0
      %4308 = vmatpush1.bf16.msra.mxu0 0
      %4309 = vmatprep.subr.bf16.mxu0 0
      %4310 = vmatpush1.bf16.msra.mxu0 0
      %4311 = vmatprep.mubr.bf16.mxu0 0
      %4312 = vmatmul.mubr.bf16.gmra.mrb[0].mxu0 %v4253
      %v4313 = vpop.f32.mrb[0].mxu0
      %v4314 = vadd.f32 0.0, %v4313
      %v4315 = vpop.f32.mrb[0].mxu0
      %v4316 = vpop.f32.mrb[0].mxu0
      %v4317 = vadd.f32 0.0, %v4316
      %v4318 = vpop.f32.mrb[0].mxu0
      %4319 = vmatprep.mubr.bf16.mxu0 0
      %4320 = vmatmul.mubr.bf16.gmra.mrb[0].mxu0 %v4256
      %v4321 = vpop.f32.mrb[0].mxu0
      %v4322 = vadd.f32 0.0, %v4321
      %v4323 = vpop.f32.mrb[0].mxu0
      %v4324 = vpop.f32.mrb[0].mxu0
      %v4325 = vadd.f32 0.0, %v4324
      %v4326 = vpop.f32.mrb[0].mxu0
      %4327 = vmatprep.mubr.bf16.mxu0 0
      %4328 = vmatmul.mubr.bf16.gmra.mrb[0].mxu0 %v4259
      %v4329 = vpop.f32.mrb[0].mxu0
      %v4330 = vadd.f32 0.0, %v4329
      %v4331 = vpop.f32.mrb[0].mxu0
      %v4332 = vpop.f32.mrb[0].mxu0
      %v4333 = vadd.f32 0.0, %v4332
      %v4334 = vpop.f32.mrb[0].mxu0
      %4335 = vmatprep.mubr.bf16.mxu0 0
      %4336 = vmatmul.mubr.bf16.gmra.mrb[0].mxu0 %v4262
      %v4337 = vpop.f32.mrb[0].mxu0
      %v4338 = vadd.f32 0.0, %v4337
      %v4339 = vpop.f32.mrb[0].mxu0
      %v4340 = vpop.f32.mrb[0].mxu0
      %v4341 = vadd.f32 0.0, %v4340
      %v4342 = vpop.f32.mrb[0].mxu0
      %4343 = vmatprep.mubr.bf16.mxu0 0
      %4344 = vmatmul.mubr.bf16.gmra.mrb[0].mxu0 %v4265
      %v4345 = vpop.f32.mrb[0].mxu0
      %v4346 = vadd.f32 0.0, %v4345
      %v4347 = vpop.f32.mrb[0].mxu0
      %v4348 = vpop.f32.mrb[0].mxu0
      %v4349 = vadd.f32 0.0, %v4348
      %v4350 = vpop.f32.mrb[0].mxu0
      %4351 = vmatprep.mubr.bf16.mxu0 0
      %4352 = vmatmul.mubr.bf16.gmra.mrb[0].mxu0 %v4268
      %v4353 = vpop.f32.mrb[0].mxu0
      %v4354 = vadd.f32 0.0, %v4353
      %v4355 = vpop.f32.mrb[0].mxu0
      %v4356 = vpop.f32.mrb[0].mxu0
      %v4357 = vadd.f32 0.0, %v4356
      %v4358 = vpop.f32.mrb[0].mxu0
      %4359 = vmatprep.mubr.bf16.mxu0 0
      %4360 = vmatmul.mubr.bf16.gmra.mrb[0].mxu0 %v4271
      %v4361 = vpop.f32.mrb[0].mxu0
      %v4362 = vadd.f32 0.0, %v4361
      %v4363 = vpop.f32.mrb[0].mxu0
      %v4364 = vpop.f32.mrb[0].mxu0
      %v4365 = vadd.f32 0.0, %v4364
      %v4366 = vpop.f32.mrb[0].mxu0
      %4367 = vmatprep.mubr.bf16.mxu0 0
      %4368 = vmatmul.mubr.bf16.gmra.mrb[0].mxu0 %v4274
      %v4369 = vpop.f32.mrb[0].mxu0
      %v4370 = vadd.f32 0.0, %v4369
      %v4371 = vpop.f32.mrb[0].mxu0
      %v4372 = vpop.f32.mrb[0].mxu0
      %v4373 = vadd.f32 0.0, %v4372
      %v4374 = vpop.f32.mrb[0].mxu0
      %4375 = vdwg.mxu0
      %v4376 = vadd.f32 %v4123, %v4314
      %v4377 = vadd.f32 %v4124, %v4317
      %v4378 = vadd.f32 %v4125, %v4322
      %v4379 = vadd.f32 %v4126, %v4325
      %v4380 = vadd.f32 %v4127, %v4330
      %v4381 = vadd.f32 %v4128, %v4333
      %v4382 = vadd.f32 %v4129, %v4338
      %v4383 = vadd.f32 %v4130, %v4341
      %v4384 = vadd.f32 %v4131, %v4346
      %v4385 = vadd.f32 %v4132, %v4349
      %v4386 = vadd.f32 %v4133, %v4354
      %v4387 = vadd.f32 %v4134, %v4357
      %v4388 = vadd.f32 %v4135, %v4362
      %v4389 = vadd.f32 %v4136, %v4365
      %v4390 = vadd.f32 %v4137, %v4370
      %v4391 = vadd.f32 %v4138, %v4373
      %s4392 = scalar_lea.vmem %s246, 120
      %v4393 = vld [vmem:[%s4392] sm:$0xf]
      %v4394 = vld [vmem:[%s4392 + $0x4] sm:$0xf]
      %v4395 = vld [vmem:[%s4392 + $0xc] sm:$0xf]
      %v4396 = vld [vmem:[%s4392 + $0x10] sm:$0xf]
      %v4397 = vld [vmem:[%s4392 + $0x18] sm:$0xf]
      %v4398 = vld [vmem:[%s4392 + $0x1c] sm:$0xf]
      %v4399 = vld [vmem:[%s4392 + $0x24] sm:$0xf]
      %v4400 = vld [vmem:[%s4392 + $0x28] sm:$0xf]
      %v4401 = vld [vmem:[%s4392 + $0x30] sm:$0xf]
      %v4402 = vld [vmem:[%s4392 + $0x34] sm:$0xf]
      %v4403 = vld [vmem:[%s4392 + $0x3c] sm:$0xf]
      %v4404 = vld [vmem:[%s4392 + $0x40] sm:$0xf]
      %v4405 = vld [vmem:[%s4392 + $0x48] sm:$0xf]
      %v4406 = vld [vmem:[%s4392 + $0x4c] sm:$0xf]
      %v4407 = vld [vmem:[%s4392 + $0x54] sm:$0xf]
      %v4408 = vld [vmem:[%s4392 + $0x58] sm:$0xf]
      %v4409 = vld [vmem:[%s1890] sm:$0x3]
      %v4426 = vunpack.c.l.b16 %v4393
      %v4427 = vunpack.c.l.b16 %v4394
      %v4428 = vunpack.c.l.b16 %v4395
      %v4429 = vunpack.c.l.b16 %v4396
      %v4430 = vunpack.c.l.b16 %v4397
      %v4431 = vunpack.c.l.b16 %v4398
      %v4432 = vunpack.c.l.b16 %v4399
      %v4433 = vunpack.c.l.b16 %v4400
      %v4434 = vunpack.c.l.b16 %v4401
      %v4435 = vunpack.c.l.b16 %v4402
      %v4436 = vunpack.c.l.b16 %v4403
      %v4437 = vunpack.c.l.b16 %v4404
      %v4438 = vunpack.c.l.b16 %v4405
      %v4439 = vunpack.c.l.b16 %v4406
      %v4440 = vunpack.c.l.b16 %v4407
      %v4441 = vunpack.c.l.b16 %v4408
      %v4442 = vpack.c.b16 %v4427, %v4426
      %v4443 = vpack.c.b16 %v4429, %v4428
      %v4444 = vpack.c.b16 %v4431, %v4430
      %v4445 = vpack.c.b16 %v4433, %v4432
      %v4446 = vpack.c.b16 %v4435, %v4434
      %v4447 = vpack.c.b16 %v4437, %v4436
      %v4448 = vpack.c.b16 %v4439, %v4438
      %v4449 = vpack.c.b16 %v4441, %v4440
      %v4451 = vsel %vm499, %v4442, 0
      %v4454 = vsel %vm499, %v4443, 0
      %v4457 = vsel %vm499, %v4444, 0
      %v4460 = vsel %vm499, %v4445, 0
      %v4463 = vsel %vm499, %v4446, 0
      %v4466 = vsel %vm499, %v4447, 0
      %v4469 = vsel %vm499, %v4448, 0
      %v4472 = vsel %vm499, %v4449, 0
      %v4475 = vsel %vm524, %v4409, 0
      %4477 = vmatprep.subr.bf16.mxu0 0
      %4478 = vmatpush1.bf16.msra.mxu0 %v4475
      %4479 = vmatprep.subr.bf16.mxu0 0
      %4480 = vmatpush1.bf16.msra.mxu0 0
      %4481 = vmatprep.subr.bf16.mxu0 0
      %4482 = vmatpush1.bf16.msra.mxu0 0
      %4483 = vmatprep.subr.bf16.mxu0 0
      %4484 = vmatpush1.bf16.msra.mxu0 0
      %4485 = vmatprep.subr.bf16.mxu0 0
      %4486 = vmatpush1.bf16.msra.mxu0 0
      %4487 = vmatprep.subr.bf16.mxu0 0
      %4488 = vmatpush1.bf16.msra.mxu0 0
      %4489 = vmatprep.subr.bf16.mxu0 0
      %4490 = vmatpush1.bf16.msra.mxu0 0
      %4491 = vmatprep.subr.bf16.mxu0 0
      %4492 = vmatpush1.bf16.msra.mxu0 0
      %4493 = vmatprep.subr.bf16.mxu0 0
      %4494 = vmatpush1.bf16.msra.mxu0 0
      %4495 = vmatprep.subr.bf16.mxu0 0
      %4496 = vmatpush1.bf16.msra.mxu0 0
      %4497 = vmatprep.subr.bf16.mxu0 0
      %4498 = vmatpush1.bf16.msra.mxu0 0
      %4499 = vmatprep.subr.bf16.mxu0 0
      %4500 = vmatpush1.bf16.msra.mxu0 0
      %4501 = vmatprep.subr.bf16.mxu0 0
      %4502 = vmatpush1.bf16.msra.mxu0 0
      %4503 = vmatprep.subr.bf16.mxu0 0
      %4504 = vmatpush1.bf16.msra.mxu0 0
      %4505 = vmatprep.subr.bf16.mxu0 0
      %4506 = vmatpush1.bf16.msra.mxu0 0
      %4507 = vmatprep.subr.bf16.mxu0 0
      %4508 = vmatpush1.bf16.msra.mxu0 0
      %4509 = vmatprep.mubr.bf16.mxu0 0
      %4510 = vmatmul.mubr.bf16.gmra.mrb[0].mxu0 %v4451
      %v4511 = vpop.f32.mrb[0].mxu0
      %v4512 = vadd.f32 0.0, %v4511
      %v4513 = vpop.f32.mrb[0].mxu0
      %v4514 = vpop.f32.mrb[0].mxu0
      %v4515 = vadd.f32 0.0, %v4514
      %v4516 = vpop.f32.mrb[0].mxu0
      %4517 = vmatprep.mubr.bf16.mxu0 0
      %4518 = vmatmul.mubr.bf16.gmra.mrb[0].mxu0 %v4454
      %v4519 = vpop.f32.mrb[0].mxu0
      %v4520 = vadd.f32 0.0, %v4519
      %v4521 = vpop.f32.mrb[0].mxu0
      %v4522 = vpop.f32.mrb[0].mxu0
      %v4523 = vadd.f32 0.0, %v4522
      %v4524 = vpop.f32.mrb[0].mxu0
      %4525 = vmatprep.mubr.bf16.mxu0 0
      %4526 = vmatmul.mubr.bf16.gmra.mrb[0].mxu0 %v4457
      %v4527 = vpop.f32.mrb[0].mxu0
      %v4528 = vadd.f32 0.0, %v4527
      %v4529 = vpop.f32.mrb[0].mxu0
      %v4530 = vpop.f32.mrb[0].mxu0
      %v4531 = vadd.f32 0.0, %v4530
      %v4532 = vpop.f32.mrb[0].mxu0
      %4533 = vmatprep.mubr.bf16.mxu0 0
      %4534 = vmatmul.mubr.bf16.gmra.mrb[0].mxu0 %v4460
      %v4535 = vpop.f32.mrb[0].mxu0
      %v4536 = vadd.f32 0.0, %v4535
      %v4537 = vpop.f32.mrb[0].mxu0
      %v4538 = vpop.f32.mrb[0].mxu0
      %v4539 = vadd.f32 0.0, %v4538
      %v4540 = vpop.f32.mrb[0].mxu0
      %4541 = vmatprep.mubr.bf16.mxu0 0
      %4542 = vmatmul.mubr.bf16.gmra.mrb[0].mxu0 %v4463
      %v4543 = vpop.f32.mrb[0].mxu0
      %v4544 = vadd.f32 0.0, %v4543
      %v4545 = vpop.f32.mrb[0].mxu0
      %v4546 = vpop.f32.mrb[0].mxu0
      %v4547 = vadd.f32 0.0, %v4546
      %v4548 = vpop.f32.mrb[0].mxu0
      %4549 = vmatprep.mubr.bf16.mxu0 0
      %4550 = vmatmul.mubr.bf16.gmra.mrb[0].mxu0 %v4466
      %v4551 = vpop.f32.mrb[0].mxu0
      %v4552 = vadd.f32 0.0, %v4551
      %v4553 = vpop.f32.mrb[0].mxu0
      %v4554 = vpop.f32.mrb[0].mxu0
      %v4555 = vadd.f32 0.0, %v4554
      %v4556 = vpop.f32.mrb[0].mxu0
      %4557 = vmatprep.mubr.bf16.mxu0 0
      %4558 = vmatmul.mubr.bf16.gmra.mrb[0].mxu0 %v4469
      %v4559 = vpop.f32.mrb[0].mxu0
      %v4560 = vadd.f32 0.0, %v4559
      %v4561 = vpop.f32.mrb[0].mxu0
      %v4562 = vpop.f32.mrb[0].mxu0
      %v4563 = vadd.f32 0.0, %v4562
      %v4564 = vpop.f32.mrb[0].mxu0
      %4565 = vmatprep.mubr.bf16.mxu0 0
      %4566 = vmatmul.mubr.bf16.gmra.mrb[0].mxu0 %v4472
      %v4567 = vpop.f32.mrb[0].mxu0
      %v4568 = vadd.f32 0.0, %v4567
      %v4569 = vpop.f32.mrb[0].mxu0
      %v4570 = vpop.f32.mrb[0].mxu0
      %v4571 = vadd.f32 0.0, %v4570
      %v4572 = vpop.f32.mrb[0].mxu0
      %4573 = vdwg.mxu0
      %v4574 = vadd.f32 %v4376, %v4512
      %v4575 = vadd.f32 %v4377, %v4515
      %v4576 = vadd.f32 %v4378, %v4520
      %v4577 = vadd.f32 %v4379, %v4523
      %v4578 = vadd.f32 %v4380, %v4528
      %v4579 = vadd.f32 %v4381, %v4531
      %v4580 = vadd.f32 %v4382, %v4536
      %v4581 = vadd.f32 %v4383, %v4539
      %v4582 = vadd.f32 %v4384, %v4544
      %v4583 = vadd.f32 %v4385, %v4547
      %v4584 = vadd.f32 %v4386, %v4552
      %v4585 = vadd.f32 %v4387, %v4555
      %v4586 = vadd.f32 %v4388, %v4560
      %v4587 = vadd.f32 %v4389, %v4563
      %v4588 = vadd.f32 %v4390, %v4568
      %v4589 = vadd.f32 %v4391, %v4571
      %v4590 = vld [vmem:[%s4392] sm:$0xf]
      %v4591 = vld [vmem:[%s4392 + $0x4] sm:$0xf]
      %v4592 = vld [vmem:[%s4392 + $0x8] sm:$0x1]
      %v4593 = vld [vmem:[%s4392 + $0xc] sm:$0xf]
      %v4594 = vld [vmem:[%s4392 + $0x10] sm:$0xf]
      %v4595 = vld [vmem:[%s4392 + $0x14] sm:$0x1]
      %v4596 = vld [vmem:[%s4392 + $0x18] sm:$0xf]
      %v4597 = vld [vmem:[%s4392 + $0x1c] sm:$0xf]
      %v4598 = vld [vmem:[%s4392 + $0x20] sm:$0x1]
      %v4599 = vld [vmem:[%s4392 + $0x24] sm:$0xf]
      %v4600 = vld [vmem:[%s4392 + $0x28] sm:$0xf]
      %v4601 = vld [vmem:[%s4392 + $0x2c] sm:$0x1]
      %v4602 = vld [vmem:[%s4392 + $0x30] sm:$0xf]
      %v4603 = vld [vmem:[%s4392 + $0x34] sm:$0xf]
      %v4604 = vld [vmem:[%s4392 + $0x38] sm:$0x1]
      %v4605 = vld [vmem:[%s4392 + $0x3c] sm:$0xf]
      %v4606 = vld [vmem:[%s4392 + $0x40] sm:$0xf]
      %v4607 = vld [vmem:[%s4392 + $0x44] sm:$0x1]
      %v4608 = vld [vmem:[%s4392 + $0x48] sm:$0xf]
      %v4609 = vld [vmem:[%s4392 + $0x4c] sm:$0xf]
      %v4610 = vld [vmem:[%s4392 + $0x50] sm:$0x1]
      %v4611 = vld [vmem:[%s4392 + $0x54] sm:$0xf]
      %v4612 = vld [vmem:[%s4392 + $0x58] sm:$0xf]
      %v4613 = vld [vmem:[%s4392 + $0x5c] sm:$0x1]
      %v4615 = vshrl.u32 %v4590, 16
      %v4617 = vrot.slane %v4615, 4
      %v4618 = vshll.u32 %v4590, 16
      %v4620 = vrot.slane %v4618, 5
      %v4621 = vor.u32 %v4617, %v4620
      %v4622 = vrot.slane %v4621, 4
      %v4624 = vshll.u32 %v4591, 16
      %v4626 = vrot.slane %v4624, 5
      %v4627 = vsel %vm280, %v4622, %v4626
      %v4628 = vshrl.u32 %v4591, 16
      %v4630 = vrot.slane %v4628, 4
      %v4631 = vor.u32 %v4630, %v4626
      %v4632 = vrot.slane %v4631, 4
      %v4634 = vshll.u32 %v4592, 16
      %v4636 = vrot.slane %v4634, 5
      %v4637 = vsel %vm280, %v4632, %v4636
      %v4639 = vshrl.u32 %v4593, 16
      %v4641 = vrot.slane %v4639, 4
      %v4642 = vshll.u32 %v4593, 16
      %v4644 = vrot.slane %v4642, 5
      %v4645 = vor.u32 %v4641, %v4644
      %v4646 = vrot.slane %v4645, 4
      %v4648 = vshll.u32 %v4594, 16
      %v4650 = vrot.slane %v4648, 5
      %v4651 = vsel %vm280, %v4646, %v4650
      %v4652 = vshrl.u32 %v4594, 16
      %v4654 = vrot.slane %v4652, 4
      %v4655 = vor.u32 %v4654, %v4650
      %v4656 = vrot.slane %v4655, 4
      %v4658 = vshll.u32 %v4595, 16
      %v4660 = vrot.slane %v4658, 5
      %v4661 = vsel %vm280, %v4656, %v4660
      %v4663 = vshrl.u32 %v4596, 16
      %v4665 = vrot.slane %v4663, 4
      %v4666 = vshll.u32 %v4596, 16
      %v4668 = vrot.slane %v4666, 5
      %v4669 = vor.u32 %v4665, %v4668
      %v4670 = vrot.slane %v4669, 4
      %v4672 = vshll.u32 %v4597, 16
      %v4674 = vrot.slane %v4672, 5
      %v4675 = vsel %vm280, %v4670, %v4674
      %v4676 = vshrl.u32 %v4597, 16
      %v4678 = vrot.slane %v4676, 4
      %v4679 = vor.u32 %v4678, %v4674
      %v4680 = vrot.slane %v4679, 4
      %v4682 = vshll.u32 %v4598, 16
      %v4684 = vrot.slane %v4682, 5
      %v4685 = vsel %vm280, %v4680, %v4684
      %v4687 = vshrl.u32 %v4599, 16
      %v4689 = vrot.slane %v4687, 4
      %v4690 = vshll.u32 %v4599, 16
      %v4692 = vrot.slane %v4690, 5
      %v4693 = vor.u32 %v4689, %v4692
      %v4694 = vrot.slane %v4693, 4
      %v4696 = vshll.u32 %v4600, 16
      %v4698 = vrot.slane %v4696, 5
      %v4699 = vsel %vm280, %v4694, %v4698
      %v4700 = vshrl.u32 %v4600, 16
      %v4702 = vrot.slane %v4700, 4
      %v4703 = vor.u32 %v4702, %v4698
      %v4704 = vrot.slane %v4703, 4
      %v4706 = vshll.u32 %v4601, 16
      %v4708 = vrot.slane %v4706, 5
      %v4709 = vsel %vm280, %v4704, %v4708
      %v4711 = vshrl.u32 %v4602, 16
      %v4713 = vrot.slane %v4711, 4
      %v4714 = vshll.u32 %v4602, 16
      %v4716 = vrot.slane %v4714, 5
      %v4717 = vor.u32 %v4713, %v4716
      %v4718 = vrot.slane %v4717, 4
      %v4720 = vshll.u32 %v4603, 16
      %v4722 = vrot.slane %v4720, 5
      %v4723 = vsel %vm280, %v4718, %v4722
      %v4724 = vshrl.u32 %v4603, 16
      %v4726 = vrot.slane %v4724, 4
      %v4727 = vor.u32 %v4726, %v4722
      %v4728 = vrot.slane %v4727, 4
      %v4730 = vshll.u32 %v4604, 16
      %v4732 = vrot.slane %v4730, 5
      %v4733 = vsel %vm280, %v4728, %v4732
      %v4735 = vshrl.u32 %v4605, 16
      %v4737 = vrot.slane %v4735, 4
      %v4738 = vshll.u32 %v4605, 16
      %v4740 = vrot.slane %v4738, 5
      %v4741 = vor.u32 %v4737, %v4740
      %v4742 = vrot.slane %v4741, 4
      %v4744 = vshll.u32 %v4606, 16
      %v4746 = vrot.slane %v4744, 5
      %v4747 = vsel %vm280, %v4742, %v4746
      %v4748 = vshrl.u32 %v4606, 16
      %v4750 = vrot.slane %v4748, 4
      %v4751 = vor.u32 %v4750, %v4746
      %v4752 = vrot.slane %v4751, 4
      %v4754 = vshll.u32 %v4607, 16
      %v4756 = vrot.slane %v4754, 5
      %v4757 = vsel %vm280, %v4752, %v4756
      %v4759 = vshrl.u32 %v4608, 16
      %v4761 = vrot.slane %v4759, 4
      %v4762 = vshll.u32 %v4608, 16
      %v4764 = vrot.slane %v4762, 5
      %v4765 = vor.u32 %v4761, %v4764
      %v4766 = vrot.slane %v4765, 4
      %v4768 = vshll.u32 %v4609, 16
      %v4770 = vrot.slane %v4768, 5
      %v4771 = vsel %vm280, %v4766, %v4770
      %v4772 = vshrl.u32 %v4609, 16
      %v4774 = vrot.slane %v4772, 4
      %v4775 = vor.u32 %v4774, %v4770
      %v4776 = vrot.slane %v4775, 4
      %v4778 = vshll.u32 %v4610, 16
      %v4780 = vrot.slane %v4778, 5
      %v4781 = vsel %vm280, %v4776, %v4780
      %v4783 = vshrl.u32 %v4611, 16
      %v4785 = vrot.slane %v4783, 4
      %v4786 = vshll.u32 %v4611, 16
      %v4788 = vrot.slane %v4786, 5
      %v4789 = vor.u32 %v4785, %v4788
      %v4790 = vrot.slane %v4789, 4
      %v4792 = vshll.u32 %v4612, 16
      %v4794 = vrot.slane %v4792, 5
      %v4795 = vsel %vm280, %v4790, %v4794
      %v4796 = vshrl.u32 %v4612, 16
      %v4798 = vrot.slane %v4796, 4
      %v4799 = vor.u32 %v4798, %v4794
      %v4800 = vrot.slane %v4799, 4
      %v4802 = vshll.u32 %v4613, 16
      %v4804 = vrot.slane %v4802, 5
      %v4805 = vsel %vm280, %v4800, %v4804
      %v4806 = vld [vmem:[%s2288] sm:$0x3]
      %v4807 = vunpack.c.l.b16 %v4627
      %v4808 = vunpack.c.l.b16 %v4637
      %v4809 = vunpack.c.l.b16 %v4651
      %v4810 = vunpack.c.l.b16 %v4661
      %v4811 = vunpack.c.l.b16 %v4675
      %v4812 = vunpack.c.l.b16 %v4685
      %v4813 = vunpack.c.l.b16 %v4699
      %v4814 = vunpack.c.l.b16 %v4709
      %v4815 = vunpack.c.l.b16 %v4723
      %v4816 = vunpack.c.l.b16 %v4733
      %v4817 = vunpack.c.l.b16 %v4747
      %v4818 = vunpack.c.l.b16 %v4757
      %v4819 = vunpack.c.l.b16 %v4771
      %v4820 = vunpack.c.l.b16 %v4781
      %v4821 = vunpack.c.l.b16 %v4795
      %v4822 = vunpack.c.l.b16 %v4805
      %v4823 = vpack.c.b16 %v4808, %v4807
      %v4824 = vpack.c.b16 %v4810, %v4809
      %v4825 = vpack.c.b16 %v4812, %v4811
      %v4826 = vpack.c.b16 %v4814, %v4813
      %v4827 = vpack.c.b16 %v4816, %v4815
      %v4828 = vpack.c.b16 %v4818, %v4817
      %v4829 = vpack.c.b16 %v4820, %v4819
      %v4830 = vpack.c.b16 %v4822, %v4821
      %v4832 = vsel %vm499, %v4823, 0
      %v4835 = vsel %vm499, %v4824, 0
      %v4838 = vsel %vm499, %v4825, 0
      %v4841 = vsel %vm499, %v4826, 0
      %v4844 = vsel %vm499, %v4827, 0
      %v4847 = vsel %vm499, %v4828, 0
      %v4850 = vsel %vm499, %v4829, 0
      %v4853 = vsel %vm499, %v4830, 0
      %v4856 = vsel %vm524, %v4806, 0
      %4858 = vmatprep.subr.bf16.mxu0 0
      %4859 = vmatpush1.bf16.msra.mxu0 %v4856
      %4860 = vmatprep.subr.bf16.mxu0 0
      %4861 = vmatpush1.bf16.msra.mxu0 0
      %4862 = vmatprep.subr.bf16.mxu0 0
      %4863 = vmatpush1.bf16.msra.mxu0 0
      %4864 = vmatprep.subr.bf16.mxu0 0
      %4865 = vmatpush1.bf16.msra.mxu0 0
      %4866 = vmatprep.subr.bf16.mxu0 0
      %4867 = vmatpush1.bf16.msra.mxu0 0
      %4868 = vmatprep.subr.bf16.mxu0 0
      %4869 = vmatpush1.bf16.msra.mxu0 0
      %4870 = vmatprep.subr.bf16.mxu0 0
      %4871 = vmatpush1.bf16.msra.mxu0 0
      %4872 = vmatprep.subr.bf16.mxu0 0
      %4873 = vmatpush1.bf16.msra.mxu0 0
      %4874 = vmatprep.subr.bf16.mxu0 0
      %4875 = vmatpush1.bf16.msra.mxu0 0
      %4876 = vmatprep.subr.bf16.mxu0 0
      %4877 = vmatpush1.bf16.msra.mxu0 0
      %4878 = vmatprep.subr.bf16.mxu0 0
      %4879 = vmatpush1.bf16.msra.mxu0 0
      %4880 = vmatprep.subr.bf16.mxu0 0
      %4881 = vmatpush1.bf16.msra.mxu0 0
      %4882 = vmatprep.subr.bf16.mxu0 0
      %4883 = vmatpush1.bf16.msra.mxu0 0
      %4884 = vmatprep.subr.bf16.mxu0 0
      %4885 = vmatpush1.bf16.msra.mxu0 0
      %4886 = vmatprep.subr.bf16.mxu0 0
      %4887 = vmatpush1.bf16.msra.mxu0 0
      %4888 = vmatprep.subr.bf16.mxu0 0
      %4889 = vmatpush1.bf16.msra.mxu0 0
      %4890 = vmatprep.mubr.bf16.mxu0 0
      %4891 = vmatmul.mubr.bf16.gmra.mrb[0].mxu0 %v4832
      %v4892 = vpop.f32.mrb[0].mxu0
      %v4893 = vadd.f32 0.0, %v4892
      %v4894 = vpop.f32.mrb[0].mxu0
      %v4895 = vpop.f32.mrb[0].mxu0
      %v4896 = vadd.f32 0.0, %v4895
      %v4897 = vpop.f32.mrb[0].mxu0
      %4898 = vmatprep.mubr.bf16.mxu0 0
      %4899 = vmatmul.mubr.bf16.gmra.mrb[0].mxu0 %v4835
      %v4900 = vpop.f32.mrb[0].mxu0
      %v4901 = vadd.f32 0.0, %v4900
      %v4902 = vpop.f32.mrb[0].mxu0
      %v4903 = vpop.f32.mrb[0].mxu0
      %v4904 = vadd.f32 0.0, %v4903
      %v4905 = vpop.f32.mrb[0].mxu0
      %4906 = vmatprep.mubr.bf16.mxu0 0
      %4907 = vmatmul.mubr.bf16.gmra.mrb[0].mxu0 %v4838
      %v4908 = vpop.f32.mrb[0].mxu0
      %v4909 = vadd.f32 0.0, %v4908
      %v4910 = vpop.f32.mrb[0].mxu0
      %v4911 = vpop.f32.mrb[0].mxu0
      %v4912 = vadd.f32 0.0, %v4911
      %v4913 = vpop.f32.mrb[0].mxu0
      %4914 = vmatprep.mubr.bf16.mxu0 0
      %4915 = vmatmul.mubr.bf16.gmra.mrb[0].mxu0 %v4841
      %v4916 = vpop.f32.mrb[0].mxu0
      %v4917 = vadd.f32 0.0, %v4916
      %v4918 = vpop.f32.mrb[0].mxu0
      %v4919 = vpop.f32.mrb[0].mxu0
      %v4920 = vadd.f32 0.0, %v4919
      %v4921 = vpop.f32.mrb[0].mxu0
      %4922 = vmatprep.mubr.bf16.mxu0 0
      %4923 = vmatmul.mubr.bf16.gmra.mrb[0].mxu0 %v4844
      %v4924 = vpop.f32.mrb[0].mxu0
      %v4925 = vadd.f32 0.0, %v4924
      %v4926 = vpop.f32.mrb[0].mxu0
      %v4927 = vpop.f32.mrb[0].mxu0
      %v4928 = vadd.f32 0.0, %v4927
      %v4929 = vpop.f32.mrb[0].mxu0
      %4930 = vmatprep.mubr.bf16.mxu0 0
      %4931 = vmatmul.mubr.bf16.gmra.mrb[0].mxu0 %v4847
      %v4932 = vpop.f32.mrb[0].mxu0
      %v4933 = vadd.f32 0.0, %v4932
      %v4934 = vpop.f32.mrb[0].mxu0
      %v4935 = vpop.f32.mrb[0].mxu0
      %v4936 = vadd.f32 0.0, %v4935
      %v4937 = vpop.f32.mrb[0].mxu0
      %4938 = vmatprep.mubr.bf16.mxu0 0
      %4939 = vmatmul.mubr.bf16.gmra.mrb[0].mxu0 %v4850
      %v4940 = vpop.f32.mrb[0].mxu0
      %v4941 = vadd.f32 0.0, %v4940
      %v4942 = vpop.f32.mrb[0].mxu0
      %v4943 = vpop.f32.mrb[0].mxu0
      %v4944 = vadd.f32 0.0, %v4943
      %v4945 = vpop.f32.mrb[0].mxu0
      %4946 = vmatprep.mubr.bf16.mxu0 0
      %4947 = vmatmul.mubr.bf16.gmra.mrb[0].mxu0 %v4853
      %v4948 = vpop.f32.mrb[0].mxu0
      %v4949 = vadd.f32 0.0, %v4948
      %v4950 = vpop.f32.mrb[0].mxu0
      %v4951 = vpop.f32.mrb[0].mxu0
      %v4952 = vadd.f32 0.0, %v4951
      %v4953 = vpop.f32.mrb[0].mxu0
      %4954 = vdwg.mxu0
      %v4955 = vadd.f32 %v4574, %v4893
      %v4956 = vadd.f32 %v4575, %v4896
      %v4957 = vadd.f32 %v4576, %v4901
      %v4958 = vadd.f32 %v4577, %v4904
      %v4959 = vadd.f32 %v4578, %v4909
      %v4960 = vadd.f32 %v4579, %v4912
      %v4961 = vadd.f32 %v4580, %v4917
      %v4962 = vadd.f32 %v4581, %v4920
      %v4963 = vadd.f32 %v4582, %v4925
      %v4964 = vadd.f32 %v4583, %v4928
      %v4965 = vadd.f32 %v4584, %v4933
      %v4966 = vadd.f32 %v4585, %v4936
      %v4967 = vadd.f32 %v4586, %v4941
      %v4968 = vadd.f32 %v4587, %v4944
      %v4969 = vadd.f32 %v4588, %v4949
      %v4970 = vadd.f32 %v4589, %v4952
      %v4971 = vld [vmem:[%s4392] sm:$0xe]
      %v4972 = vld [vmem:[%s4392 + $0xc] sm:$0xe]
      %v4973 = vld [vmem:[%s4392 + $0x18] sm:$0xe]
      %v4974 = vld [vmem:[%s4392 + $0x24] sm:$0xe]
      %v4975 = vld [vmem:[%s4392 + $0x30] sm:$0xe]
      %v4976 = vld [vmem:[%s4392 + $0x3c] sm:$0xe]
      %v4977 = vld [vmem:[%s4392 + $0x48] sm:$0xe]
      %v4978 = vld [vmem:[%s4392 + $0x54] sm:$0xe]
      %v5003 = vrot.slane %v4971, 5
      %v5004 = vrot.slane %v5003, 4
      %v5005 = vrot.slane %v4591, 5
      %v5006 = vsel %vm815, %v5004, %v5005
      %v5007 = vrot.slane %v5005, 4
      %v5008 = vrot.slane %v4592, 5
      %v5009 = vsel %vm815, %v5007, %v5008
      %v5010 = vrot.slane %v4972, 5
      %v5011 = vrot.slane %v5010, 4
      %v5012 = vrot.slane %v4594, 5
      %v5013 = vsel %vm815, %v5011, %v5012
      %v5014 = vrot.slane %v5012, 4
      %v5015 = vrot.slane %v4595, 5
      %v5016 = vsel %vm815, %v5014, %v5015
      %v5017 = vrot.slane %v4973, 5
      %v5018 = vrot.slane %v5017, 4
      %v5019 = vrot.slane %v4597, 5
      %v5020 = vsel %vm815, %v5018, %v5019
      %v5021 = vrot.slane %v5019, 4
      %v5022 = vrot.slane %v4598, 5
      %v5023 = vsel %vm815, %v5021, %v5022
      %v5024 = vrot.slane %v4974, 5
      %v5025 = vrot.slane %v5024, 4
      %v5026 = vrot.slane %v4600, 5
      %v5027 = vsel %vm815, %v5025, %v5026
      %v5028 = vrot.slane %v5026, 4
      %v5029 = vrot.slane %v4601, 5
      %v5030 = vsel %vm815, %v5028, %v5029
      %v5031 = vrot.slane %v4975, 5
      %v5032 = vrot.slane %v5031, 4
      %v5033 = vrot.slane %v4603, 5
      %v5034 = vsel %vm815, %v5032, %v5033
      %v5035 = vrot.slane %v5033, 4
      %v5036 = vrot.slane %v4604, 5
      %v5037 = vsel %vm815, %v5035, %v5036
      %v5038 = vrot.slane %v4976, 5
      %v5039 = vrot.slane %v5038, 4
      %v5040 = vrot.slane %v4606, 5
      %v5041 = vsel %vm815, %v5039, %v5040
      %v5042 = vrot.slane %v5040, 4
      %v5043 = vrot.slane %v4607, 5
      %v5044 = vsel %vm815, %v5042, %v5043
      %v5045 = vrot.slane %v4977, 5
      %v5046 = vrot.slane %v5045, 4
      %v5047 = vrot.slane %v4609, 5
      %v5048 = vsel %vm815, %v5046, %v5047
      %v5049 = vrot.slane %v5047, 4
      %v5050 = vrot.slane %v4610, 5
      %v5051 = vsel %vm815, %v5049, %v5050
      %v5052 = vrot.slane %v4978, 5
      %v5053 = vrot.slane %v5052, 4
      %v5054 = vrot.slane %v4612, 5
      %v5055 = vsel %vm815, %v5053, %v5054
      %v5056 = vrot.slane %v5054, 4
      %v5057 = vrot.slane %v4613, 5
      %v5058 = vsel %vm815, %v5056, %v5057
      %v5059 = vld [vmem:[%s2542] sm:$0x3]
      %v5060 = vunpack.c.l.b16 %v5006
      %v5061 = vunpack.c.l.b16 %v5009
      %v5062 = vunpack.c.l.b16 %v5013
      %v5063 = vunpack.c.l.b16 %v5016
      %v5064 = vunpack.c.l.b16 %v5020
      %v5065 = vunpack.c.l.b16 %v5023
      %v5066 = vunpack.c.l.b16 %v5027
      %v5067 = vunpack.c.l.b16 %v5030
      %v5068 = vunpack.c.l.b16 %v5034
      %v5069 = vunpack.c.l.b16 %v5037
      %v5070 = vunpack.c.l.b16 %v5041
      %v5071 = vunpack.c.l.b16 %v5044
      %v5072 = vunpack.c.l.b16 %v5048
      %v5073 = vunpack.c.l.b16 %v5051
      %v5074 = vunpack.c.l.b16 %v5055
      %v5075 = vunpack.c.l.b16 %v5058
      %v5076 = vpack.c.b16 %v5061, %v5060
      %v5077 = vpack.c.b16 %v5063, %v5062
      %v5078 = vpack.c.b16 %v5065, %v5064
      %v5079 = vpack.c.b16 %v5067, %v5066
      %v5080 = vpack.c.b16 %v5069, %v5068
      %v5081 = vpack.c.b16 %v5071, %v5070
      %v5082 = vpack.c.b16 %v5073, %v5072
      %v5083 = vpack.c.b16 %v5075, %v5074
      %v5085 = vsel %vm499, %v5076, 0
      %v5088 = vsel %vm499, %v5077, 0
      %v5091 = vsel %vm499, %v5078, 0
      %v5094 = vsel %vm499, %v5079, 0
      %v5097 = vsel %vm499, %v5080, 0
      %v5100 = vsel %vm499, %v5081, 0
      %v5103 = vsel %vm499, %v5082, 0
      %v5106 = vsel %vm499, %v5083, 0
      %v5109 = vsel %vm524, %v5059, 0
      %5111 = vmatprep.subr.bf16.mxu0 0
      %5112 = vmatpush1.bf16.msra.mxu0 %v5109
      %5113 = vmatprep.subr.bf16.mxu0 0
      %5114 = vmatpush1.bf16.msra.mxu0 0
      %5115 = vmatprep.subr.bf16.mxu0 0
      %5116 = vmatpush1.bf16.msra.mxu0 0
      %5117 = vmatprep.subr.bf16.mxu0 0
      %5118 = vmatpush1.bf16.msra.mxu0 0
      %5119 = vmatprep.subr.bf16.mxu0 0
      %5120 = vmatpush1.bf16.msra.mxu0 0
      %5121 = vmatprep.subr.bf16.mxu0 0
      %5122 = vmatpush1.bf16.msra.mxu0 0
      %5123 = vmatprep.subr.bf16.mxu0 0
      %5124 = vmatpush1.bf16.msra.mxu0 0
      %5125 = vmatprep.subr.bf16.mxu0 0
      %5126 = vmatpush1.bf16.msra.mxu0 0
      %5127 = vmatprep.subr.bf16.mxu0 0
      %5128 = vmatpush1.bf16.msra.mxu0 0
      %5129 = vmatprep.subr.bf16.mxu0 0
      %5130 = vmatpush1.bf16.msra.mxu0 0
      %5131 = vmatprep.subr.bf16.mxu0 0
      %5132 = vmatpush1.bf16.msra.mxu0 0
      %5133 = vmatprep.subr.bf16.mxu0 0
      %5134 = vmatpush1.bf16.msra.mxu0 0
      %5135 = vmatprep.subr.bf16.mxu0 0
      %5136 = vmatpush1.bf16.msra.mxu0 0
      %5137 = vmatprep.subr.bf16.mxu0 0
      %5138 = vmatpush1.bf16.msra.mxu0 0
      %5139 = vmatprep.subr.bf16.mxu0 0
      %5140 = vmatpush1.bf16.msra.mxu0 0
      %5141 = vmatprep.subr.bf16.mxu0 0
      %5142 = vmatpush1.bf16.msra.mxu0 0
      %5143 = vmatprep.mubr.bf16.mxu0 0
      %5144 = vmatmul.mubr.bf16.gmra.mrb[0].mxu0 %v5085
      %v5145 = vpop.f32.mrb[0].mxu0
      %v5146 = vadd.f32 0.0, %v5145
      %v5147 = vpop.f32.mrb[0].mxu0
      %v5148 = vpop.f32.mrb[0].mxu0
      %v5149 = vadd.f32 0.0, %v5148
      %v5150 = vpop.f32.mrb[0].mxu0
      %5151 = vmatprep.mubr.bf16.mxu0 0
      %5152 = vmatmul.mubr.bf16.gmra.mrb[0].mxu0 %v5088
      %v5153 = vpop.f32.mrb[0].mxu0
      %v5154 = vadd.f32 0.0, %v5153
      %v5155 = vpop.f32.mrb[0].mxu0
      %v5156 = vpop.f32.mrb[0].mxu0
      %v5157 = vadd.f32 0.0, %v5156
      %v5158 = vpop.f32.mrb[0].mxu0
      %5159 = vmatprep.mubr.bf16.mxu0 0
      %5160 = vmatmul.mubr.bf16.gmra.mrb[0].mxu0 %v5091
      %v5161 = vpop.f32.mrb[0].mxu0
      %v5162 = vadd.f32 0.0, %v5161
      %v5163 = vpop.f32.mrb[0].mxu0
      %v5164 = vpop.f32.mrb[0].mxu0
      %v5165 = vadd.f32 0.0, %v5164
      %v5166 = vpop.f32.mrb[0].mxu0
      %5167 = vmatprep.mubr.bf16.mxu0 0
      %5168 = vmatmul.mubr.bf16.gmra.mrb[0].mxu0 %v5094
      %v5169 = vpop.f32.mrb[0].mxu0
      %v5170 = vadd.f32 0.0, %v5169
      %v5171 = vpop.f32.mrb[0].mxu0
      %v5172 = vpop.f32.mrb[0].mxu0
      %v5173 = vadd.f32 0.0, %v5172
      %v5174 = vpop.f32.mrb[0].mxu0
      %5175 = vmatprep.mubr.bf16.mxu0 0
      %5176 = vmatmul.mubr.bf16.gmra.mrb[0].mxu0 %v5097
      %v5177 = vpop.f32.mrb[0].mxu0
      %v5178 = vadd.f32 0.0, %v5177
      %v5179 = vpop.f32.mrb[0].mxu0
      %v5180 = vpop.f32.mrb[0].mxu0
      %v5181 = vadd.f32 0.0, %v5180
      %v5182 = vpop.f32.mrb[0].mxu0
      %5183 = vmatprep.mubr.bf16.mxu0 0
      %5184 = vmatmul.mubr.bf16.gmra.mrb[0].mxu0 %v5100
      %v5185 = vpop.f32.mrb[0].mxu0
      %v5186 = vadd.f32 0.0, %v5185
      %v5187 = vpop.f32.mrb[0].mxu0
      %v5188 = vpop.f32.mrb[0].mxu0
      %v5189 = vadd.f32 0.0, %v5188
      %v5190 = vpop.f32.mrb[0].mxu0
      %5191 = vmatprep.mubr.bf16.mxu0 0
      %5192 = vmatmul.mubr.bf16.gmra.mrb[0].mxu0 %v5103
      %v5193 = vpop.f32.mrb[0].mxu0
      %v5194 = vadd.f32 0.0, %v5193
      %v5195 = vpop.f32.mrb[0].mxu0
      %v5196 = vpop.f32.mrb[0].mxu0
      %v5197 = vadd.f32 0.0, %v5196
      %v5198 = vpop.f32.mrb[0].mxu0
      %5199 = vmatprep.mubr.bf16.mxu0 0
      %5200 = vmatmul.mubr.bf16.gmra.mrb[0].mxu0 %v5106
      %v5201 = vpop.f32.mrb[0].mxu0
      %v5202 = vadd.f32 0.0, %v5201
      %v5203 = vpop.f32.mrb[0].mxu0
      %v5204 = vpop.f32.mrb[0].mxu0
      %v5205 = vadd.f32 0.0, %v5204
      %v5206 = vpop.f32.mrb[0].mxu0
      %5207 = vdwg.mxu0
      %v5208 = vadd.f32 %v4955, %v5146
      %v5209 = vadd.f32 %v4956, %v5149
      %v5210 = vadd.f32 %v4957, %v5154
      %v5211 = vadd.f32 %v4958, %v5157
      %v5212 = vadd.f32 %v4959, %v5162
      %v5213 = vadd.f32 %v4960, %v5165
      %v5214 = vadd.f32 %v4961, %v5170
      %v5215 = vadd.f32 %v4962, %v5173
      %v5216 = vadd.f32 %v4963, %v5178
      %v5217 = vadd.f32 %v4964, %v5181
      %v5218 = vadd.f32 %v4965, %v5186
      %v5219 = vadd.f32 %v4966, %v5189
      %v5220 = vadd.f32 %v4967, %v5194
      %v5221 = vadd.f32 %v4968, %v5197
      %v5222 = vadd.f32 %v4969, %v5202
      %v5223 = vadd.f32 %v4970, %v5205
      %5224 = vst [vmem:[#allocation2 + $0x80] sm:$0xff] %v5208
      %5225 = vst [vmem:[#allocation2 + $0x88] sm:$0xff] %v5209
      %5226 = vst [vmem:[#allocation2 + $0x90] sm:$0xff] %v5210
      %5227 = vst [vmem:[#allocation2 + $0x98] sm:$0xff] %v5211
      %5228 = vst [vmem:[#allocation2 + $0xa0] sm:$0xff] %v5212
      %5229 = vst [vmem:[#allocation2 + $0xa8] sm:$0xff] %v5213
      %5230 = vst [vmem:[#allocation2 + $0xb0] sm:$0xff] %v5214
      %5231 = vst [vmem:[#allocation2 + $0xb8] sm:$0xff] %v5215
      %5232 = vst [vmem:[#allocation2 + $0xc0] sm:$0xff] %v5216
      %5233 = vst [vmem:[#allocation2 + $0xc8] sm:$0xff] %v5217
      %5234 = vst [vmem:[#allocation2 + $0xd0] sm:$0xff] %v5218
      %5235 = vst [vmem:[#allocation2 + $0xd8] sm:$0xff] %v5219
      %5236 = vst [vmem:[#allocation2 + $0xe0] sm:$0xff] %v5220
      %5237 = vst [vmem:[#allocation2 + $0xe8] sm:$0xff] %v5221
      %5238 = vst [vmem:[#allocation2 + $0xf0] sm:$0xff] %v5222
      %5239 = vst [vmem:[#allocation2 + $0xf8] sm:$0xff] %v5223
      %v5240 = vadd.f32 %v5208, %v5209
      %v5241 = vadd.f32 %v5240, %v5210
      %v5242 = vadd.f32 %v5241, %v5211
      %v5243 = vadd.f32 %v5242, %v5212
      %v5244 = vadd.f32 %v5243, %v5213
      %v5245 = vadd.f32 %v5244, %v5214
      %v5246 = vadd.f32 %v5245, %v5215
      %v5247 = vadd.f32 %v5246, %v5216
      %v5248 = vadd.f32 %v5247, %v5217
      %v5249 = vadd.f32 %v5248, %v5218
      %v5250 = vadd.f32 %v5249, %v5219
      %v5251 = vadd.f32 %v5250, %v5220
      %v5252 = vadd.f32 %v5251, %v5221
      %v5253 = vadd.f32 %v5252, %v5222
      %v5254 = vadd.f32 %v5253, %v5223
      %v5255 = vrot.slane %v5254, 4
      %v5256 = vadd.f32 %v5254, %v5255
      %v5257 = vrot.slane %v5256, 2
      %v5258 = vadd.f32 %v5256, %v5257
      %v5259 = vrot.slane %v5258, 1
      %v5260 = vadd.f32 %v5258, %v5259
      %v5261 = vadd.f32 %v2745, %v5260
      %v5262 = vmul.f32 %v5208, %v5208
      %v5263 = vmul.f32 %v5209, %v5209
      %v5264 = vmul.f32 %v5210, %v5210
      %v5265 = vmul.f32 %v5211, %v5211
      %v5266 = vmul.f32 %v5212, %v5212
      %v5267 = vmul.f32 %v5213, %v5213
      %v5268 = vmul.f32 %v5214, %v5214
      %v5269 = vmul.f32 %v5215, %v5215
      %v5270 = vmul.f32 %v5216, %v5216
      %v5271 = vmul.f32 %v5217, %v5217
      %v5272 = vmul.f32 %v5218, %v5218
      %v5273 = vmul.f32 %v5219, %v5219
      %v5274 = vmul.f32 %v5220, %v5220
      %v5275 = vmul.f32 %v5221, %v5221
      %v5276 = vmul.f32 %v5222, %v5222
      %v5277 = vmul.f32 %v5223, %v5223
      %v5278 = vadd.f32 %v5262, %v5263
      %v5279 = vadd.f32 %v5278, %v5264
      %v5280 = vadd.f32 %v5279, %v5265
      %v5281 = vadd.f32 %v5280, %v5266
      %v5282 = vadd.f32 %v5281, %v5267
      %v5283 = vadd.f32 %v5282, %v5268
      %v5284 = vadd.f32 %v5283, %v5269
      %v5285 = vadd.f32 %v5284, %v5270
      %v5286 = vadd.f32 %v5285, %v5271
      %v5287 = vadd.f32 %v5286, %v5272
      %v5288 = vadd.f32 %v5287, %v5273
      %v5289 = vadd.f32 %v5288, %v5274
      %v5290 = vadd.f32 %v5289, %v5275
      %v5291 = vadd.f32 %v5290, %v5276
      %v5292 = vadd.f32 %v5291, %v5277
      %v5293 = vrot.slane %v5292, 4
      %v5294 = vadd.f32 %v5292, %v5293
      %v5295 = vrot.slane %v5294, 2
      %v5296 = vadd.f32 %v5294, %v5295
      %v5297 = vrot.slane %v5296, 1
      %v5298 = vadd.f32 %v5296, %v5297
      %v5299 = vadd.f32 %v2783, %v5298
      %v5300 = vld [vmem:[%s2] sm:$0x1]
      %v5301 = vmul.f32 %v5300, 256.0
      %v5302 = vadd.f32 %v5261, %v5301
      %v5303 = vmul.f32 %v5300, 2.0
      %v5304 = vmul.f32 %v5303, %v5261
      %v5305 = vadd.f32 %v5299, %v5304
      %v5306 = vmul.f32 %v5300, %v5300
      %v5307 = vmul.f32 %v5306, 256.0
      %v5308 = vadd.f32 %v5305, %v5307
      %v5310 = vrot.slane %v5308, 7
      %vm5312 = vcmask 1040384
      %v5313 = vsel %vm5312, %v5302, %v5310
      %v5314 = vld [vmem:[%s5] sm:$0xff]
      %v5315 = vld [vmem:[%s5 + $0x8] sm:$0xff]
      %v5316 = vld [vmem:[%s5 + $0x10] sm:$0xff]
      %v5317 = vld [vmem:[%s5 + $0x18] sm:$0xff]
      %v5318 = vld [vmem:[%s5 + $0x20] sm:$0xff]
      %v5319 = vld [vmem:[%s5 + $0x28] sm:$0xff]
      %v5320 = vld [vmem:[%s5 + $0x30] sm:$0xff]
      %v5321 = vld [vmem:[%s5 + $0x38] sm:$0xff]
      %v5322 = vld [vmem:[%s5 + $0x40] sm:$0xff]
      %v5323 = vld [vmem:[%s5 + $0x48] sm:$0xff]
      %v5324 = vld [vmem:[%s5 + $0x50] sm:$0xff]
      %v5325 = vld [vmem:[%s5 + $0x58] sm:$0xff]
      %v5326 = vld [vmem:[%s5 + $0x60] sm:$0xff]
      %v5327 = vld [vmem:[%s5 + $0x68] sm:$0xff]
      %v5328 = vld [vmem:[%s5 + $0x70] sm:$0xff]
      %v5329 = vld [vmem:[%s5 + $0x78] sm:$0xff]
      %5330 = vmatprep.subr.mxu0 0.0
      %5331 = vmatpush1.msra.mxu0 %v5314
      %5332 = vmatprep.subr.mxu0 0.0
      %5333 = vmatpush1.msra.mxu0 %v5315
      %5334 = vmatprep.subr.mxu0 0.0
      %5335 = vmatpush1.msra.mxu0 %v5316
      %5336 = vmatprep.subr.mxu0 0.0
      %5337 = vmatpush1.msra.mxu0 %v5317
      %5338 = vmatprep.subr.mxu0 0.0
      %5339 = vmatpush1.msra.mxu0 %v5318
      %5340 = vmatprep.subr.mxu0 0.0
      %5341 = vmatpush1.msra.mxu0 %v5319
      %5342 = vmatprep.subr.mxu0 0.0
      %5343 = vmatpush1.msra.mxu0 %v5320
      %5344 = vmatprep.subr.mxu0 0.0
      %5345 = vmatpush1.msra.mxu0 %v5321
      %5346 = vmatprep.subr.mxu0 0.0
      %5347 = vmatpush1.msra.mxu0 %v5322
      %5348 = vmatprep.subr.mxu0 0.0
      %5349 = vmatpush1.msra.mxu0 %v5323
      %5350 = vmatprep.subr.mxu0 0.0
      %5351 = vmatpush1.msra.mxu0 %v5324
      %5352 = vmatprep.subr.mxu0 0.0
      %5353 = vmatpush1.msra.mxu0 %v5325
      %5354 = vmatprep.subr.mxu0 0.0
      %5355 = vmatpush1.msra.mxu0 %v5326
      %5356 = vmatprep.subr.mxu0 0.0
      %5357 = vmatpush1.msra.mxu0 %v5327
      %5358 = vmatprep.subr.mxu0 0.0
      %5359 = vmatpush1.msra.mxu0 %v5328
      %5360 = vmatprep.subr.mxu0 0.0
      %5361 = vmatpush1.msra.mxu0 %v5329
      %5362 = vmatprep.subr.mxu0 0.0
      %5363 = vmatpush1.msra.mxu0 0.0
      %5364 = vmatprep.subr.mxu0 0.0
      %5365 = vmatpush1.msra.mxu0 0.0
      %5366 = vmatprep.subr.mxu0 0.0
      %5367 = vmatpush1.msra.mxu0 0.0
      %5368 = vmatprep.subr.mxu0 0.0
      %5369 = vmatpush1.msra.mxu0 0.0
      %5370 = vmatprep.subr.mxu0 0.0
      %5371 = vmatpush1.msra.mxu0 0.0
      %5372 = vmatprep.subr.mxu0 0.0
      %5373 = vmatpush1.msra.mxu0 0.0
      %5374 = vmatprep.subr.mxu0 0.0
      %5375 = vmatpush1.msra.mxu0 0.0
      %5376 = vmatprep.subr.mxu0 0.0
      %5377 = vmatpush1.msra.mxu0 0.0
      %5378 = vmatprep.subr.mxu0 0.0
      %5379 = vmatpush1.msra.mxu0 0.0
      %5380 = vmatprep.subr.mxu0 0.0
      %5381 = vmatpush1.msra.mxu0 0.0
      %5382 = vmatprep.subr.mxu0 0.0
      %5383 = vmatpush1.msra.mxu0 0.0
      %5384 = vmatprep.subr.mxu0 0.0
      %5385 = vmatpush1.msra.mxu0 0.0
      %5386 = vmatprep.subr.mxu0 0.0
      %5387 = vmatpush1.msra.mxu0 0.0
      %5388 = vmatprep.subr.mxu0 0.0
      %5389 = vmatpush1.msra.mxu0 0.0
      %5390 = vmatprep.subr.mxu0 0.0
      %5391 = vmatpush1.msra.mxu0 0.0
      %5392 = vmatprep.subr.mxu0 0.0
      %5393 = vmatpush1.msra.mxu0 0.0
      %5394 = vmatprep.mubr.f32.mxu0 0.0
      %5395 = vmatmul.mubr.f32.gmra.mrb[0].mxu0 %v5313
      %v5396 = vpop.f32.mrb[0].mxu0
      %v5397 = vadd.f32 0.0, %v5396
      %v5398 = vpop.f32.mrb[0].mxu0
      %5399 = vdwg.mxu0
      %v5400 = vmul.f32 %v5397, %v5397
      %v5402 = vrot.slane %v5400, 7
      %v5404 = vsub.f32 %v5397, %v5402
      %v5405 = vmax.f32 %v5404, 0.0
      %v5406 = vadd.f32 %v5405, 1e-05
      %v5407 = vrsqrt.pop %v5406
      %v5408 = vld [vmem:[%s3] sm:$0x1]
      %v5410 = vlaneseq
      %v5411 = vshrl.u32 %v5410, 7
      %v5412 = vsub.s32 0, %v5411
      %v5413 = vrot.slane %v5408, %v5412
      %v5415 = vmul.f32 %v5407, %v5413
      %v5416 = vsub.f32 %v5300, %v5397
      %v5419 = vunpack.c.l.s4 1966171168
      %v5420 = vunpack.c.0.s8 %v5419
      %v5421 = vlaneseq
      %v5422 = vshrl.u32 %v5421, 7
      %v5423 = vsub.s32 %v5420, %v5422
      %v5424 = vrot.slane %v5415, %v5423
      %v5425 = vcombine.high %v5424, %v5424
      %v5427 = vunpack.c.l.s4 1966171168
      %v5428 = vunpack.c.0.s8 %v5427
      %v5429 = vlaneseq
      %v5430 = vshrl.u32 %v5429, 7
      %v5431 = vsub.s32 %v5428, %v5430
      %v5432 = vrot.slane %v5425, %v5431
      %v5434 = vmul.f32 %v5416, %v5432
      %v5435 = vld [vmem:[%s4] sm:$0x1]
      %v5436 = vadd.f32 %v5434, %v5435
      %v5437 = vld [vmem:[#allocation2] sm:$0xff]
      %v5438 = vld [vmem:[#allocation2 + $0x8] sm:$0xff]
      %v5439 = vld [vmem:[#allocation2 + $0x10] sm:$0xff]
      %v5440 = vld [vmem:[#allocation2 + $0x18] sm:$0xff]
      %v5441 = vld [vmem:[#allocation2 + $0x20] sm:$0xff]
      %v5442 = vld [vmem:[#allocation2 + $0x28] sm:$0xff]
      %v5443 = vld [vmem:[#allocation2 + $0x30] sm:$0xff]
      %v5444 = vld [vmem:[#allocation2 + $0x38] sm:$0xff]
      %v5445 = vld [vmem:[#allocation2 + $0x40] sm:$0xff]
      %v5446 = vld [vmem:[#allocation2 + $0x48] sm:$0xff]
      %v5447 = vld [vmem:[#allocation2 + $0x50] sm:$0xff]
      %v5448 = vld [vmem:[#allocation2 + $0x58] sm:$0xff]
      %v5449 = vld [vmem:[#allocation2 + $0x60] sm:$0xff]
      %v5450 = vld [vmem:[#allocation2 + $0x68] sm:$0xff]
      %v5451 = vld [vmem:[#allocation2 + $0x70] sm:$0xff]
      %v5452 = vld [vmem:[#allocation2 + $0x78] sm:$0xff]
      %v5453 = vlaneseq
      %v5454 = vshrl.u32 %v5453, 7
      %v5455 = vsub.s32 1, %v5454
      %v5456 = vrot.slane %v5415, %v5455
      %v5457 = vmul.f32 %v5437, %v5456
      %v5458 = vmul.f32 %v5438, %v5456
      %v5459 = vmul.f32 %v5439, %v5456
      %v5460 = vmul.f32 %v5440, %v5456
      %v5461 = vmul.f32 %v5441, %v5456
      %v5462 = vmul.f32 %v5442, %v5456
      %v5463 = vmul.f32 %v5443, %v5456
      %v5464 = vmul.f32 %v5444, %v5456
      %v5465 = vmul.f32 %v5445, %v5456
      %v5466 = vmul.f32 %v5446, %v5456
      %v5467 = vmul.f32 %v5447, %v5456
      %v5468 = vmul.f32 %v5448, %v5456
      %v5469 = vmul.f32 %v5449, %v5456
      %v5470 = vmul.f32 %v5450, %v5456
      %v5471 = vmul.f32 %v5451, %v5456
      %v5472 = vmul.f32 %v5452, %v5456
      %v5474 = vlaneseq
      %v5475 = vshrl.u32 %v5474, 7
      %v5476 = vsub.s32 0, %v5475
      %v5477 = vrot.slane %v5436, %v5476
      %v5479 = vadd.f32 %v5457, %v5477
      %v5480 = vadd.f32 %v5458, %v5477
      %v5481 = vadd.f32 %v5459, %v5477
      %v5482 = vadd.f32 %v5460, %v5477
      %v5483 = vadd.f32 %v5461, %v5477
      %v5484 = vadd.f32 %v5462, %v5477
      %v5485 = vadd.f32 %v5463, %v5477
      %v5486 = vadd.f32 %v5464, %v5477
      %v5487 = vadd.f32 %v5465, %v5477
      %v5488 = vadd.f32 %v5466, %v5477
      %v5489 = vadd.f32 %v5467, %v5477
      %v5490 = vadd.f32 %v5468, %v5477
      %v5491 = vadd.f32 %v5469, %v5477
      %v5492 = vadd.f32 %v5470, %v5477
      %v5493 = vadd.f32 %v5471, %v5477
      %v5494 = vadd.f32 %v5472, %v5477
      %v5495 = vmax.f32 %v5479, 0.0
      %v5496 = vmax.f32 %v5480, 0.0
      %v5497 = vmax.f32 %v5481, 0.0
      %v5498 = vmax.f32 %v5482, 0.0
      %v5499 = vmax.f32 %v5483, 0.0
      %v5500 = vmax.f32 %v5484, 0.0
      %v5501 = vmax.f32 %v5485, 0.0
      %v5502 = vmax.f32 %v5486, 0.0
      %v5503 = vmax.f32 %v5487, 0.0
      %v5504 = vmax.f32 %v5488, 0.0
      %v5505 = vmax.f32 %v5489, 0.0
      %v5506 = vmax.f32 %v5490, 0.0
      %v5507 = vmax.f32 %v5491, 0.0
      %v5508 = vmax.f32 %v5492, 0.0
      %v5509 = vmax.f32 %v5493, 0.0
      %v5510 = vmax.f32 %v5494, 0.0
      %vm5511 = vcmask 64512
      %5512 = vst.msk [vmem:[%s251] sm:$0xff] %vm5511, %v5495
      %5513 = vst.msk [vmem:[%s251 + $0x8] sm:$0xff] %vm5511, %v5496
      %5514 = vst.msk [vmem:[%s251 + $0x10] sm:$0xff] %vm5511, %v5497
      %5515 = vst.msk [vmem:[%s251 + $0x18] sm:$0xff] %vm5511, %v5498
      %5516 = vst.msk [vmem:[%s251 + $0x20] sm:$0xff] %vm5511, %v5499
      %5517 = vst.msk [vmem:[%s251 + $0x28] sm:$0xff] %vm5511, %v5500
      %5518 = vst.msk [vmem:[%s251 + $0x30] sm:$0xff] %vm5511, %v5501
      %5519 = vst.msk [vmem:[%s251 + $0x38] sm:$0xff] %vm5511, %v5502
      %5520 = vst.msk [vmem:[%s251 + $0x40] sm:$0xff] %vm5511, %v5503
      %5521 = vst.msk [vmem:[%s251 + $0x48] sm:$0xff] %vm5511, %v5504
      %5522 = vst.msk [vmem:[%s251 + $0x50] sm:$0xff] %vm5511, %v5505
      %5523 = vst.msk [vmem:[%s251 + $0x58] sm:$0xff] %vm5511, %v5506
      %5524 = vst.msk [vmem:[%s251 + $0x60] sm:$0xff] %vm5511, %v5507
      %5525 = vst.msk [vmem:[%s251 + $0x68] sm:$0xff] %vm5511, %v5508
      %5526 = vst.msk [vmem:[%s251 + $0x70] sm:$0xff] %vm5511, %v5509
      %5527 = vst.msk [vmem:[%s251 + $0x78] sm:$0xff] %vm5511, %v5510
      %v5528 = vld [vmem:[#allocation2 + $0x80] sm:$0xff]
      %v5529 = vld [vmem:[#allocation2 + $0x88] sm:$0xff]
      %v5530 = vld [vmem:[#allocation2 + $0x90] sm:$0xff]
      %v5531 = vld [vmem:[#allocation2 + $0x98] sm:$0xff]
      %v5532 = vld [vmem:[#allocation2 + $0xa0] sm:$0xff]
      %v5533 = vld [vmem:[#allocation2 + $0xa8] sm:$0xff]
      %v5534 = vld [vmem:[#allocation2 + $0xb0] sm:$0xff]
      %v5535 = vld [vmem:[#allocation2 + $0xb8] sm:$0xff]
      %v5536 = vld [vmem:[#allocation2 + $0xc0] sm:$0xff]
      %v5537 = vld [vmem:[#allocation2 + $0xc8] sm:$0xff]
      %v5538 = vld [vmem:[#allocation2 + $0xd0] sm:$0xff]
      %v5539 = vld [vmem:[#allocation2 + $0xd8] sm:$0xff]
      %v5540 = vld [vmem:[#allocation2 + $0xe0] sm:$0xff]
      %v5541 = vld [vmem:[#allocation2 + $0xe8] sm:$0xff]
      %v5542 = vld [vmem:[#allocation2 + $0xf0] sm:$0xff]
      %v5543 = vld [vmem:[#allocation2 + $0xf8] sm:$0xff]
      %v5544 = vmul.f32 %v5528, %v5456
      %v5545 = vmul.f32 %v5529, %v5456
      %v5546 = vmul.f32 %v5530, %v5456
      %v5547 = vmul.f32 %v5531, %v5456
      %v5548 = vmul.f32 %v5532, %v5456
      %v5549 = vmul.f32 %v5533, %v5456
      %v5550 = vmul.f32 %v5534, %v5456
      %v5551 = vmul.f32 %v5535, %v5456
      %v5552 = vmul.f32 %v5536, %v5456
      %v5553 = vmul.f32 %v5537, %v5456
      %v5554 = vmul.f32 %v5538, %v5456
      %v5555 = vmul.f32 %v5539, %v5456
      %v5556 = vmul.f32 %v5540, %v5456
      %v5557 = vmul.f32 %v5541, %v5456
      %v5558 = vmul.f32 %v5542, %v5456
      %v5559 = vmul.f32 %v5543, %v5456
      %v5560 = vadd.f32 %v5544, %v5477
      %v5561 = vadd.f32 %v5545, %v5477
      %v5562 = vadd.f32 %v5546, %v5477
      %v5563 = vadd.f32 %v5547, %v5477
      %v5564 = vadd.f32 %v5548, %v5477
      %v5565 = vadd.f32 %v5549, %v5477
      %v5566 = vadd.f32 %v5550, %v5477
      %v5567 = vadd.f32 %v5551, %v5477
      %v5568 = vadd.f32 %v5552, %v5477
      %v5569 = vadd.f32 %v5553, %v5477
      %v5570 = vadd.f32 %v5554, %v5477
      %v5571 = vadd.f32 %v5555, %v5477
      %v5572 = vadd.f32 %v5556, %v5477
      %v5573 = vadd.f32 %v5557, %v5477
      %v5574 = vadd.f32 %v5558, %v5477
      %v5575 = vadd.f32 %v5559, %v5477
      %v5576 = vmax.f32 %v5560, 0.0
      %v5577 = vmax.f32 %v5561, 0.0
      %v5578 = vmax.f32 %v5562, 0.0
      %v5579 = vmax.f32 %v5563, 0.0
      %v5580 = vmax.f32 %v5564, 0.0
      %v5581 = vmax.f32 %v5565, 0.0
      %v5582 = vmax.f32 %v5566, 0.0
      %v5583 = vmax.f32 %v5567, 0.0
      %v5584 = vmax.f32 %v5568, 0.0
      %v5585 = vmax.f32 %v5569, 0.0
      %v5586 = vmax.f32 %v5570, 0.0
      %v5587 = vmax.f32 %v5571, 0.0
      %v5588 = vmax.f32 %v5572, 0.0
      %v5589 = vmax.f32 %v5573, 0.0
      %v5590 = vmax.f32 %v5574, 0.0
      %v5591 = vmax.f32 %v5575, 0.0
      %5592 = vst.msk [vmem:[%s251 + $0x80] sm:$0xff] %vm5511, %v5576
      %5593 = vst.msk [vmem:[%s251 + $0x88] sm:$0xff] %vm5511, %v5577
      %5594 = vst.msk [vmem:[%s251 + $0x90] sm:$0xff] %vm5511, %v5578
      %5595 = vst.msk [vmem:[%s251 + $0x98] sm:$0xff] %vm5511, %v5579
      %5596 = vst.msk [vmem:[%s251 + $0xa0] sm:$0xff] %vm5511, %v5580
      %5597 = vst.msk [vmem:[%s251 + $0xa8] sm:$0xff] %vm5511, %v5581
      %5598 = vst.msk [vmem:[%s251 + $0xb0] sm:$0xff] %vm5511, %v5582
      %5599 = vst.msk [vmem:[%s251 + $0xb8] sm:$0xff] %vm5511, %v5583
      %5600 = vst.msk [vmem:[%s251 + $0xc0] sm:$0xff] %vm5511, %v5584
      %5601 = vst.msk [vmem:[%s251 + $0xc8] sm:$0xff] %vm5511, %v5585
      %5602 = vst.msk [vmem:[%s251 + $0xd0] sm:$0xff] %vm5511, %v5586
      %5603 = vst.msk [vmem:[%s251 + $0xd8] sm:$0xff] %vm5511, %v5587
      %5604 = vst.msk [vmem:[%s251 + $0xe0] sm:$0xff] %vm5511, %v5588
      %5605 = vst.msk [vmem:[%s251 + $0xe8] sm:$0xff] %vm5511, %v5589
      %5606 = vst.msk [vmem:[%s251 + $0xf0] sm:$0xff] %vm5511, %v5590
      %5607 = vst.msk [vmem:[%s251 + $0xf8] sm:$0xff] %vm5511, %v5591
      %p5608 = scmp.lt.s32.totalorder %s17, 1
      %s5609 = scalar_select %p5608, %s17, 1
      %s5610 = smul.addr %s5609, 32
      %s5611 = smul.addr %s5610, 8
      %s5612 = scalar_lea.vmem %s6, %s5611
      // Predicated region
      $region45: #{tpu_custom_call.1} parent=43 // pred_check
        %p5613 = pneg %p166
      $region46: #{tpu_custom_call.1} parent=43 // pred_check_branch
        %5615 = sbr.rel (%p5613) target = $region48
      $region47: #{tpu_custom_call.1} parent=43 // pred_region
        _
      $region48: #{tpu_custom_call.1} parent=43 // pred_fallthru
        _
    $region44: #{tpu_custom_call.1} parent=5 // pred_fallthru
      _
    %p5616 = scmp.le.s32.totalorder 2, %s12
    // Predicated region
    $region49: #{tpu_custom_call.1} parent=5 // pred_check
      %p5617 = pneg %p5616
    $region50: #{tpu_custom_call.1} parent=5 // pred_check_branch
      %5619 = sbr.rel (%p5617) target = $region52
    $region51: #{tpu_custom_call.1} parent=5 // pred_region
      %s5620 = ssub.s32 %s12, 2
      // Predicated region
      $region53: #{tpu_custom_call.1} parent=51 // pred_check
        %p5621 = pneg %p172
      $region54: #{tpu_custom_call.1} parent=51 // pred_check_branch
        %5623 = sbr.rel (%p5621) target = $region56
      $region55: #{tpu_custom_call.1} parent=51 // pred_region
        %p5624 = scmp.lt.s32.totalorder %s18, 1
        %s5625 = scalar_select %p5624, %s18, 1
        %s5626 = smul.addr %s5625, 32
        %s5627 = smul.addr %s5626, 8
        %s5628 = scalar_lea.vmem %s6, %s5627
      $region56: #{tpu_custom_call.1} parent=51 // pred_fallthru
        _
    $region52: #{tpu_custom_call.1} parent=5 // pred_fallthru
      _
  $region6: #{tpu_custom_call.1} parent=0 // loop_footer
    %s16 = sadd.s32 1, %s12
  $region7: #{tpu_custom_call.1} parent=0 // loop_footer_branch
    %11 = sbr.rel target = $region3
  $region8: #{tpu_custom_call.1} parent=0 // loop_exit
    _

</llo_original>
